<compile_context>
chip_gen: v5e
topology: v5e:2x2
jax: 0.10.0
libtpu: 0.0.40
codegen_flags: <defaults>
</compile_context>

<pallas_src>
import functools

import jax
import jax.numpy as jnp
from jax.experimental import pallas as pl
from jax.experimental.pallas import tpu as pltpu

# ---------------------------------------------------------------------------
# Model hyperparameters (small synthetic CLIP-ViT)
# ---------------------------------------------------------------------------
PATCH = 4          # patch size of the patch-embedding conv (stride == kernel)
WIDTH = 32         # transformer width
HEADS = 4          # attention heads
HEAD_DIM = WIDTH // HEADS
MLP_DIM = 4 * WIDTH
LAYERS = 2         # transformer blocks
EMBED_DIM = 16     # final CLIP image-embedding dim (proj output)
LN_EPS = 1e-5
NEG_INF = -1e9     # key-padding mask bias


# ---------------------------------------------------------------------------
# In-kernel helpers
# ---------------------------------------------------------------------------
def _layernorm(x, gamma, beta):
    """Row-wise LayerNorm over the last (lane) axis.  x:(R,W), gamma/beta:(1,W)."""
    mu = jnp.mean(x, axis=-1, keepdims=True)
    xc = x - mu
    var = jnp.mean(xc * xc, axis=-1, keepdims=True)
    return xc * jax.lax.rsqrt(var + LN_EPS) * gamma + beta


# ---------------------------------------------------------------------------
# Fused encoder kernel: one grid step == one block of BLK_B images
# ---------------------------------------------------------------------------
def _encoder_kernel(patches_ref, conv_w_ref, pos_ref, cls_blk_ref, ln_pre_ref,
                    ln1_ref, wqkv_ref, bqkv_ref, wo_ref, bo_ref,
                    ln2_ref, fc_w_ref, fc_b_ref, pw_ref, pb_ref,
                    ln_post_ref, proj_ref, o_ref,
                    *, blk_b, n_patches, t_pad, t_real):
    # ---- patch embedding for ALL images in this batch block at once ----
    tok = jnp.dot(patches_ref[...], conv_w_ref[...],
                  preferred_element_type=jnp.float32)            # (blk_b*NP, W)

    pos = pos_ref[...]                                           # (NP, W)
    cls_blk = cls_blk_ref[...]                                   # (t_pad-NP, W)

    # Per-image sequence = [patch tokens + pos ; CLS(+pos) ; zero pad rows].
    # CLS is the LAST real row so every concat piece is 8-row aligned.
    rows = []
    for b in range(blk_b):                                       # static unroll
        rows.append(tok[b * n_patches:(b + 1) * n_patches, :] + pos)
        rows.append(cls_blk)
    seq = jnp.concatenate(rows, axis=0)                          # (M, W)

    # ---- ln_pre ----
    seq = _layernorm(seq, ln_pre_ref[0:1, :], ln_pre_ref[1:2, :])

    # Bias masking the padded key rows; built once, reused every layer/head.
    col = jax.lax.broadcasted_iota(jnp.int32, (t_pad, t_pad), 1)
    key_bias = jnp.where(col < t_real, 0.0, NEG_INF).astype(jnp.float32)

    for l in range(LAYERS):                                      # static unroll
        # ----- multi-head self-attention -----
        ln1 = ln1_ref[l]                                         # (2, W)
        h = _layernorm(seq, ln1[0:1, :], ln1[1:2, :])

        # Per-head Q/K/V via per-head weight mats (no lane slicing of a fused
        # (M, 3W) activation); batched over all images in the block along M.
        # 1/sqrt(HEAD_DIM) is pre-folded into the Q weights/biases at init.
        base = l * 3 * HEADS
        qh, kh, vh = [], [], []
        for hh in range(HEADS):                                  # static unroll
            qh.append(jnp.dot(h, wqkv_ref[base + hh],
                              preferred_element_type=jnp.float32)
                      + bqkv_ref[base + hh])                     # (M, dh)
            kh.append(jnp.dot(h, wqkv_ref[base + HEADS + hh],
                              preferred_element_type=jnp.float32)
                      + bqkv_ref[base + HEADS + hh])
            vh.append(jnp.dot(h, wqkv_ref[base + 2 * HEADS + hh],
                              preferred_element_type=jnp.float32)
                      + bqkv_ref[base + 2 * HEADS + hh])

        attn_rows = []
        for b in range(blk_b):                                   # static unroll
            lo = b * t_pad                                       # 8-aligned
            acc_b = None
            for hh in range(HEADS):                              # static unroll
                q = qh[hh][lo:lo + t_pad, :]                     # (t_pad, dh)
                k = kh[hh][lo:lo + t_pad, :]
                v = vh[hh][lo:lo + t_pad, :]
                # scores: contract q/k on head_dim (q @ k^T), stays in vregs
                s = jax.lax.dot_general(
                    q, k, (((1,), (1,)), ((), ())),
                    preferred_element_type=jnp.float32) + key_bias   # (t_pad, t_pad)
                m = jnp.max(s, axis=-1, keepdims=True)
                p = jnp.exp(s - m)
                p = p * pl.reciprocal(jnp.sum(p, axis=-1, keepdims=True),
                                      approx=True)
                ctx = jnp.dot(p, v, preferred_element_type=jnp.float32)  # (t_pad, dh)
                # head "merge" == accumulate through the matching out_w row block
                part = jnp.dot(ctx, wo_ref[l * HEADS + hh],
                               preferred_element_type=jnp.float32)       # (t_pad, W)
                acc_b = part if acc_b is None else acc_b + part
            attn_rows.append(acc_b)
        attn = jnp.concatenate(attn_rows, axis=0)                # (M, W)
        seq = seq + attn + bo_ref[l]                             # residual

        # ----- MLP (QuickGELU), batched over all rows of the block -----
        ln2 = ln2_ref[l]
        h2 = _layernorm(seq, ln2[0:1, :], ln2[1:2, :])
        h2 = jnp.dot(h2, fc_w_ref[l],
                     preferred_element_type=jnp.float32) + fc_b_ref[l]   # (M, MLP)
        h2 = h2 * jax.nn.sigmoid(1.702 * h2)                     # QuickGELU
        h2 = jnp.dot(h2, pw_ref[l],
                     preferred_element_type=jnp.float32) + pb_ref[l]
        seq = seq + h2                                           # residual

    # ---- ln_post on the CLS rows (8-aligned offsets), final projection ----
    cls_rows = jnp.concatenate(
        [seq[b * t_pad + n_patches:b * t_pad + n_patches + 1, :]
         for b in range(blk_b)], axis=0)                         # (blk_b, W)
    cls_rows = _layernorm(cls_rows, ln_post_ref[0:1, :], ln_post_ref[1:2, :])
    o_ref[...] = jnp.dot(cls_rows, proj_ref[...],
                         preferred_element_type=jnp.float32)     # (blk_b, E)


# ---------------------------------------------------------------------------
# Parameter init (deterministic, synthetic weights; all layout prep done here)
# ---------------------------------------------------------------------------
def init_params(key, in_channels=3, image_size=16):
    def nrm(k, shape, s=0.02):
        return (s * jax.random.normal(k, shape)).astype(jnp.float32)

    k_raw = in_channels * PATCH * PATCH
    grid_hw = image_size // PATCH
    n_patches = grid_hw * grid_hw
    t_real = n_patches + 1
    t_pad = ((t_real + 7) // 8) * 8          # per-image rows, sublane aligned
    pad_rows = t_pad - n_patches             # rows carrying [CLS, 0, ..., 0]

    keys = jax.random.split(key, 4 + 4 * LAYERS)
    ki = iter(keys)

    # PyTorch Conv2d weight (out=WIDTH, in, p, p), bias=False (matches CLIP),
    # pre-transposed to (C*P*P, WIDTH).  No 48->128 pad (full-dim blocks are
    # exempt from the (8,128) rule; the pad only inflated HBM traffic).
    conv_w = nrm(next(ki), (WIDTH, in_channels, PATCH, PATCH))
    conv_w_t = conv_w.reshape(WIDTH, k_raw).T

    cls = nrm(next(ki), (WIDTH,))
    pos = (0.01 * jax.random.normal(next(ki), (t_real, WIDTH))).astype(jnp.float32)
    pos_patch = pos[1:, :]                              # added to patch tokens
    cls_blk = jnp.zeros((pad_rows, WIDTH), jnp.float32)
    cls_blk = cls_blk.at[0, :].set(cls + pos[0, :])     # CLS folded with its pos-emb

    proj = nrm(next(ki), (WIDTH, EMBED_DIM))            # CLIP visual.proj (no bias)

    ln_id = jnp.stack([jnp.ones((WIDTH,), jnp.float32),
                       jnp.zeros((WIDTH,), jnp.float32)])          # [gamma; beta]

    scale = 1.0 / (HEAD_DIM ** 0.5)

    def split_heads(w):                                 # (W, W) -> (HEADS, W, dh)
        return w.reshape(WIDTH, HEADS, HEAD_DIM).transpose(1, 0, 2)

    wqkv, wo, fc_w, pw = [], [], [], []
    for _ in range(LAYERS):
        in_proj = nrm(next(ki), (WIDTH, 3 * WIDTH))
        wq = in_proj[:, 0 * WIDTH:1 * WIDTH] * scale    # fold 1/sqrt(dh) into Q
        wk = in_proj[:, 1 * WIDTH:2 * WIDTH]
        wv = in_proj[:, 2 * WIDTH:3 * WIDTH]
        wqkv.append(jnp.concatenate(
            [split_heads(wq), split_heads(wk), split_heads(wv)], axis=0))
        wo.append(nrm(next(ki), (WIDTH, WIDTH)).reshape(HEADS, HEAD_DIM, WIDTH))
        fc_w.append(nrm(next(ki), (WIDTH, MLP_DIM)))
        pw.append(nrm(next(ki), (MLP_DIM, WIDTH)))

    return {
        "conv_w": conv_w_t,                                      # (C*P*P, W)
        "pos_patch": pos_patch,                                  # (NP, W)
        "cls_blk": cls_blk,                                      # (T_PAD-NP, W)
        "ln_pre": ln_id,                                         # (2, W)
        "ln1": jnp.stack([ln_id] * LAYERS),                      # (L, 2, W)
        "wqkv": jnp.concatenate(wqkv, axis=0),                   # (L*3*H, W, dh)
        "bqkv": jnp.zeros((LAYERS * 3 * HEADS, 1, HEAD_DIM), jnp.float32),
        "wo": jnp.concatenate(wo, axis=0),                       # (L*H, dh, W)
        "bo": jnp.zeros((LAYERS, 1, WIDTH), jnp.float32),
        "ln2": jnp.stack([ln_id] * LAYERS),                      # (L, 2, W)
        "fc_w": jnp.stack(fc_w),                                 # (L, W, MLP)
        "fc_b": jnp.zeros((LAYERS, 1, MLP_DIM), jnp.float32),
        "pw": jnp.stack(pw),                                     # (L, MLP, W)
        "pb": jnp.zeros((LAYERS, 1, WIDTH), jnp.float32),
        "ln_post": ln_id,                                        # (2, W)
        "proj": proj,                                            # (W, E)
    }


# ---------------------------------------------------------------------------
# encode_image forward pass (== CLIP_encode_img.forward)
# ---------------------------------------------------------------------------
def clip_encode_img(params, x):
    """x: (B, C, H, W) float32 NCHW -> (B, EMBED_DIM) image embedding."""
    B, C, H, Wimg = x.shape
    gh, gw = H // PATCH, Wimg // PATCH
    NP = gh * gw
    k_raw = C * PATCH * PATCH
    assert params["conv_w"].shape[0] == k_raw
    assert params["pos_patch"].shape[0] == NP
    PAD_ROWS = params["cls_blk"].shape[0]
    T_PAD = NP + PAD_ROWS
    T_REAL = NP + 1

    # Images per grid step: amortize per-step overhead and enlarge matmul M.
    # BLK_B == B (grid of 1) for small batches; otherwise an 8-aligned block.
    if B <= 16:
        BLK_B = B
    else:
        BLK_B = 16 if B % 16 == 0 else 8
    assert B % BLK_B == 0
    n_blocks = B // BLK_B

    # Patch extraction at the XLA boundary, NO pad of the contraction dim.
    # TODO(synk): folding the NCHW patch gather itself into the kernel would
    # need an in-kernel strided gather; left as XLA boundary glue.
    patches = (x.reshape(B, C, gh, PATCH, gw, PATCH)
                 .transpose(0, 2, 4, 1, 3, 5)
                 .reshape(B * NP, k_raw))

    kernel = functools.partial(_encoder_kernel, blk_b=BLK_B, n_patches=NP,
                               t_pad=T_PAD, t_real=T_REAL)

    def rep(shape):
        n = len(shape)
        return pl.BlockSpec(shape, lambda i, n=n: (0,) * n)

    in_specs = [
        pl.BlockSpec((BLK_B * NP, k_raw), lambda i: (i, 0)),     # patches
        rep(params["conv_w"].shape),
        rep(params["pos_patch"].shape),
        rep(params["cls_blk"].shape),
        rep(params["ln_pre"].shape),
        rep(params["ln1"].shape),
        rep(params["wqkv"].shape),
        rep(params["bqkv"].shape),
        rep(params["wo"].shape),
        rep(params["bo"].shape),
        rep(params["ln2"].shape),
        rep(params["fc_w"].shape),
        rep(params["fc_b"].shape),
        rep(params["pw"].shape),
        rep(params["pb"].shape),
        rep(params["ln_post"].shape),
        rep(params["proj"].shape),
    ]

    out = pl.pallas_call(
        kernel,
        out_shape=jax.ShapeDtypeStruct((B, EMBED_DIM), jnp.float32),
        grid=(n_blocks,),
        in_specs=in_specs,
        out_specs=pl.BlockSpec((BLK_B, EMBED_DIM), lambda i: (i, 0)),
        compiler_params=pltpu.CompilerParams(
            dimension_semantics=("parallel",)),
    )(patches, params["conv_w"], params["pos_patch"], params["cls_blk"],
      params["ln_pre"], params["ln1"], params["wqkv"], params["bqkv"],
      params["wo"], params["bo"], params["ln2"], params["fc_w"],
      params["fc_b"], params["pw"], params["pb"], params["ln_post"],
      params["proj"])

    return out


# ---------------------------------------------------------------------------
if __name__ == "__main__":
    key = jax.random.PRNGKey(0)
    k_param, k_input = jax.random.split(key)

    params = init_params(k_param, in_channels=3, image_size=16)

    # small NCHW input consistent with an image encoder: (B=2, C=3, 16, 16)
    x = jax.random.normal(k_input, (2, 3, 16, 16), dtype=jnp.float32)

    fwd = jax.jit(clip_encode_img)
    x_emb = jax.block_until_ready(fwd(params, x))

    assert x_emb.shape == (2, EMBED_DIM)
    assert bool(jnp.all(jnp.isfinite(x_emb)))
    print("KERNEL_OK")
</pallas_src>

<mosaic_0001>
module attributes {stable_mosaic.version = 11 : i64} {
  func.func @_encoder_kernel(%arg0: i32, %arg1: memref<32x48xf32, #tpu.memory_space<vmem>>, %arg2: memref<48x32xf32, #tpu.memory_space<vmem>>, %arg3: memref<16x32xf32, #tpu.memory_space<vmem>>, %arg4: memref<8x32xf32, #tpu.memory_space<vmem>>, %arg5: memref<2x32xf32, #tpu.memory_space<vmem>>, %arg6: memref<2x2x32xf32, #tpu.memory_space<vmem>>, %arg7: memref<24x32x8xf32, #tpu.memory_space<vmem>>, %arg8: memref<24x1x8xf32, #tpu.memory_space<vmem>>, %arg9: memref<8x8x32xf32, #tpu.memory_space<vmem>>, %arg10: memref<2x1x32xf32, #tpu.memory_space<vmem>>, %arg11: memref<2x2x32xf32, #tpu.memory_space<vmem>>, %arg12: memref<2x32x128xf32, #tpu.memory_space<vmem>>, %arg13: memref<2x1x128xf32, #tpu.memory_space<vmem>>, %arg14: memref<2x128x32xf32, #tpu.memory_space<vmem>>, %arg15: memref<2x1x32xf32, #tpu.memory_space<vmem>>, %arg16: memref<2x32xf32, #tpu.memory_space<vmem>>, %arg17: memref<32x16xf32, #tpu.memory_space<vmem>>, %arg18: memref<2x16xf32, #tpu.memory_space<vmem>>) attributes {dimension_semantics = [#tpu.dimension_semantics<parallel>], iteration_bounds = array<i64: 1>, scalar_prefetch = 0 : i64, scratch_operands = 0 : i64, tpu.core_type = #tpu.core_type<tc>, window_params = [{transform_indices = @transform_0, window_bounds = array<i64: 32, 48>}, {pipeline_mode = #tpu.pipeline_mode<synchronous>, transform_indices = @transform_1, window_bounds = array<i64: 48, 32>}, {pipeline_mode = #tpu.pipeline_mode<synchronous>, transform_indices = @transform_2, window_bounds = array<i64: 16, 32>}, {pipeline_mode = #tpu.pipeline_mode<synchronous>, transform_indices = @transform_3, window_bounds = array<i64: 8, 32>}, {pipeline_mode = #tpu.pipeline_mode<synchronous>, transform_indices = @transform_4, window_bounds = array<i64: 2, 32>}, {pipeline_mode = #tpu.pipeline_mode<synchronous>, transform_indices = @transform_5, window_bounds = array<i64: 2, 2, 32>}, {pipeline_mode = #tpu.pipeline_mode<synchronous>, transform_indices = @transform_6, window_bounds = array<i64: 24, 32, 8>}, {pipeline_mode = #tpu.pipeline_mode<synchronous>, transform_indices = @transform_7, window_bounds = array<i64: 24, 1, 8>}, {pipeline_mode = #tpu.pipeline_mode<synchronous>, transform_indices = @transform_8, window_bounds = array<i64: 8, 8, 32>}, {pipeline_mode = #tpu.pipeline_mode<synchronous>, transform_indices = @transform_9, window_bounds = array<i64: 2, 1, 32>}, {pipeline_mode = #tpu.pipeline_mode<synchronous>, transform_indices = @transform_10, window_bounds = array<i64: 2, 2, 32>}, {pipeline_mode = #tpu.pipeline_mode<synchronous>, transform_indices = @transform_11, window_bounds = array<i64: 2, 32, 128>}, {pipeline_mode = #tpu.pipeline_mode<synchronous>, transform_indices = @transform_12, window_bounds = array<i64: 2, 1, 128>}, {pipeline_mode = #tpu.pipeline_mode<synchronous>, transform_indices = @transform_13, window_bounds = array<i64: 2, 128, 32>}, {pipeline_mode = #tpu.pipeline_mode<synchronous>, transform_indices = @transform_14, window_bounds = array<i64: 2, 1, 32>}, {pipeline_mode = #tpu.pipeline_mode<synchronous>, transform_indices = @transform_15, window_bounds = array<i64: 2, 32>}, {pipeline_mode = #tpu.pipeline_mode<synchronous>, transform_indices = @transform_16, window_bounds = array<i64: 32, 16>}, {transform_indices = @transform_17, window_bounds = array<i64: 2, 16>}]} {
    %c0 = arith.constant 0 : index
    %c0_0 = arith.constant 0 : index
    %0 = vector.load %arg1[%c0, %c0_0] : memref<32x48xf32, #tpu.memory_space<vmem>>, vector<32x48xf32>
    %c0_1 = arith.constant 0 : index
    %c0_2 = arith.constant 0 : index
    %1 = vector.load %arg2[%c0_1, %c0_2] : memref<48x32xf32, #tpu.memory_space<vmem>>, vector<48x32xf32>
    %cst = arith.constant dense<0.000000e+00> : vector<32x32xf32>
    %2 = tpu.matmul %0, %1, %cst {dimension_numbers = #tpu.dot_dimension_numbers<[1], [0], [0], [1], [0, 0, 1, 1], [], []>} : vector<32x48xf32>, vector<48x32xf32>, vector<32x32xf32> -> vector<32x32xf32>
    %c0_3 = arith.constant 0 : index
    %c0_4 = arith.constant 0 : index
    %3 = vector.load %arg3[%c0_3, %c0_4] : memref<16x32xf32, #tpu.memory_space<vmem>>, vector<16x32xf32>
    %c0_5 = arith.constant 0 : index
    %c0_6 = arith.constant 0 : index
    %4 = vector.load %arg4[%c0_5, %c0_6] : memref<8x32xf32, #tpu.memory_space<vmem>>, vector<8x32xf32>
    %5 = vector.extract_strided_slice %2 {offsets = [0, 0], sizes = [16, 32], strides = [1, 1]} : vector<32x32xf32> to vector<16x32xf32>
    %6 = arith.addf %5, %3 : vector<16x32xf32>
    %7 = vector.extract_strided_slice %2 {offsets = [16, 0], sizes = [16, 32], strides = [1, 1]} : vector<32x32xf32> to vector<16x32xf32>
    %8 = arith.addf %7, %3 : vector<16x32xf32>
    %9 = tpu.concatenate %6, %4, %8, %4 in 0 : vector<16x32xf32>, vector<8x32xf32>, vector<16x32xf32>, vector<8x32xf32> -> vector<48x32xf32>
    %c0_7 = arith.constant 0 : index
    %c0_8 = arith.constant 0 : index
    %10 = vector.load %arg5[%c0_7, %c0_8] : memref<2x32xf32, #tpu.memory_space<vmem>>, vector<1x32xf32>
    %c1 = arith.constant 1 : index
    %c0_9 = arith.constant 0 : index
    %11 = vector.load %arg5[%c1, %c0_9] : memref<2x32xf32, #tpu.memory_space<vmem>>, vector<1x32xf32>
    %cst_10 = arith.constant dense<0.000000e+00> : vector<48xf32>
    %12 = vector.multi_reduction <add>, %9, %cst_10 [1] : vector<48x32xf32> to vector<48xf32>
    %13 = vector.shape_cast %12 : vector<48xf32> to vector<48x1xf32>
    %cst_11 = arith.constant 3.200000e+01 : f32
    %14 = vector.broadcast %cst_11 : f32 to vector<48x1xf32>
    %15 = arith.divf %13, %14 : vector<48x1xf32>
    %16 = vector.broadcast %15 : vector<48x1xf32> to vector<48x32xf32>
    %17 = arith.subf %9, %16 : vector<48x32xf32>
    %18 = arith.mulf %17, %17 : vector<48x32xf32>
    %cst_12 = arith.constant dense<0.000000e+00> : vector<48xf32>
    %19 = vector.multi_reduction <add>, %18, %cst_12 [1] : vector<48x32xf32> to vector<48xf32>
    %20 = vector.shape_cast %19 : vector<48xf32> to vector<48x1xf32>
    %cst_13 = arith.constant 3.200000e+01 : f32
    %21 = vector.broadcast %cst_13 : f32 to vector<48x1xf32>
    %22 = arith.divf %20, %21 : vector<48x1xf32>
    %cst_14 = arith.constant 9.99999974E-6 : f32
    %23 = vector.broadcast %cst_14 : f32 to vector<48x1xf32>
    %24 = arith.addf %22, %23 : vector<48x1xf32>
    %25 = math.rsqrt %24 : vector<48x1xf32>
    %26 = vector.broadcast %25 : vector<48x1xf32> to vector<48x32xf32>
    %27 = arith.mulf %17, %26 : vector<48x32xf32>
    %28 = vector.broadcast %10 : vector<1x32xf32> to vector<48x32xf32>
    %29 = arith.mulf %27, %28 : vector<48x32xf32>
    %30 = vector.broadcast %11 : vector<1x32xf32> to vector<48x32xf32>
    %31 = arith.addf %29, %30 : vector<48x32xf32>
    %32 = tpu.iota {dimensions = array<i32: 1>} : vector<24x24xi32>
    %c17_i32 = arith.constant 17 : i32
    %33 = vector.broadcast %c17_i32 : i32 to vector<24x24xi32>
    %34 = arith.cmpi slt, %32, %33 : vector<24x24xi32>
    %cst_15 = arith.constant 0.000000e+00 : f32
    %cst_16 = arith.constant -1.000000e+09 : f32
    %35 = vector.broadcast %cst_15 : f32 to vector<24x24xf32>
    %36 = vector.broadcast %cst_16 : f32 to vector<24x24xf32>
    %37 = arith.select %34, %35, %36 : vector<24x24xi1>, vector<24x24xf32>
    %c0_17 = arith.constant 0 : index
    %c0_18 = arith.constant 0 : index
    %c0_19 = arith.constant 0 : index
    %38 = vector.load %arg6[%c0_17, %c0_18, %c0_19] : memref<2x2x32xf32, #tpu.memory_space<vmem>>, vector<1x2x32xf32>
    %39 = vector.shape_cast %38 : vector<1x2x32xf32> to vector<2x32xf32>
    %40 = vector.extract_strided_slice %39 {offsets = [0, 0], sizes = [1, 32], strides = [1, 1]} : vector<2x32xf32> to vector<1x32xf32>
    %41 = vector.extract_strided_slice %39 {offsets = [1, 0], sizes = [1, 32], strides = [1, 1]} : vector<2x32xf32> to vector<1x32xf32>
    %cst_20 = arith.constant dense<0.000000e+00> : vector<48xf32>
    %42 = vector.multi_reduction <add>, %31, %cst_20 [1] : vector<48x32xf32> to vector<48xf32>
    %43 = vector.shape_cast %42 : vector<48xf32> to vector<48x1xf32>
    %cst_21 = arith.constant 3.200000e+01 : f32
    %44 = vector.broadcast %cst_21 : f32 to vector<48x1xf32>
    %45 = arith.divf %43, %44 : vector<48x1xf32>
    %46 = vector.broadcast %45 : vector<48x1xf32> to vector<48x32xf32>
    %47 = arith.subf %31, %46 : vector<48x32xf32>
    %48 = arith.mulf %47, %47 : vector<48x32xf32>
    %cst_22 = arith.constant dense<0.000000e+00> : vector<48xf32>
    %49 = vector.multi_reduction <add>, %48, %cst_22 [1] : vector<48x32xf32> to vector<48xf32>
    %50 = vector.shape_cast %49 : vector<48xf32> to vector<48x1xf32>
    %cst_23 = arith.constant 3.200000e+01 : f32
    %51 = vector.broadcast %cst_23 : f32 to vector<48x1xf32>
    %52 = arith.divf %50, %51 : vector<48x1xf32>
    %cst_24 = arith.constant 9.99999974E-6 : f32
    %53 = vector.broadcast %cst_24 : f32 to vector<48x1xf32>
    %54 = arith.addf %52, %53 : vector<48x1xf32>
    %55 = math.rsqrt %54 : vector<48x1xf32>
    %56 = vector.broadcast %55 : vector<48x1xf32> to vector<48x32xf32>
    %57 = arith.mulf %47, %56 : vector<48x32xf32>
    %58 = vector.broadcast %40 : vector<1x32xf32> to vector<48x32xf32>
    %59 = arith.mulf %57, %58 : vector<48x32xf32>
    %60 = vector.broadcast %41 : vector<1x32xf32> to vector<48x32xf32>
    %61 = arith.addf %59, %60 : vector<48x32xf32>
    %c0_25 = arith.constant 0 : index
    %c0_26 = arith.constant 0 : index
    %c0_27 = arith.constant 0 : index
    %62 = vector.load %arg7[%c0_25, %c0_26, %c0_27] : memref<24x32x8xf32, #tpu.memory_space<vmem>>, vector<1x32x8xf32>
    %63 = vector.shape_cast %62 : vector<1x32x8xf32> to vector<32x8xf32>
    %cst_28 = arith.constant dense<0.000000e+00> : vector<48x8xf32>
    %64 = tpu.matmul %61, %63, %cst_28 {dimension_numbers = #tpu.dot_dimension_numbers<[1], [0], [0], [1], [0, 0, 1, 1], [], []>} : vector<48x32xf32>, vector<32x8xf32>, vector<48x8xf32> -> vector<48x8xf32>
    %c0_29 = arith.constant 0 : index
    %c0_30 = arith.constant 0 : index
    %c0_31 = arith.constant 0 : index
    %65 = vector.load %arg8[%c0_29, %c0_30, %c0_31] : memref<24x1x8xf32, #tpu.memory_space<vmem>>, vector<1x1x8xf32>
    %66 = vector.shape_cast %65 : vector<1x1x8xf32> to vector<1x8xf32>
    %67 = vector.broadcast %66 : vector<1x8xf32> to vector<48x8xf32>
    %68 = arith.addf %64, %67 : vector<48x8xf32>
    %c4 = arith.constant 4 : index
    %c0_32 = arith.constant 0 : index
    %c0_33 = arith.constant 0 : index
    %69 = vector.load %arg7[%c4, %c0_32, %c0_33] : memref<24x32x8xf32, #tpu.memory_space<vmem>>, vector<1x32x8xf32>
    %70 = vector.shape_cast %69 : vector<1x32x8xf32> to vector<32x8xf32>
    %cst_34 = arith.constant dense<0.000000e+00> : vector<48x8xf32>
    %71 = tpu.matmul %61, %70, %cst_34 {dimension_numbers = #tpu.dot_dimension_numbers<[1], [0], [0], [1], [0, 0, 1, 1], [], []>} : vector<48x32xf32>, vector<32x8xf32>, vector<48x8xf32> -> vector<48x8xf32>
    %c4_35 = arith.constant 4 : index
    %c0_36 = arith.constant 0 : index
    %c0_37 = arith.constant 0 : index
    %72 = vector.load %arg8[%c4_35, %c0_36, %c0_37] : memref<24x1x8xf32, #tpu.memory_space<vmem>>, vector<1x1x8xf32>
    %73 = vector.shape_cast %72 : vector<1x1x8xf32> to vector<1x8xf32>
    %74 = vector.broadcast %73 : vector<1x8xf32> to vector<48x8xf32>
    %75 = arith.addf %71, %74 : vector<48x8xf32>
    %c8 = arith.constant 8 : index
    %c0_38 = arith.constant 0 : index
    %c0_39 = arith.constant 0 : index
    %76 = vector.load %arg7[%c8, %c0_38, %c0_39] : memref<24x32x8xf32, #tpu.memory_space<vmem>>, vector<1x32x8xf32>
    %77 = vector.shape_cast %76 : vector<1x32x8xf32> to vector<32x8xf32>
    %cst_40 = arith.constant dense<0.000000e+00> : vector<48x8xf32>
    %78 = tpu.matmul %61, %77, %cst_40 {dimension_numbers = #tpu.dot_dimension_numbers<[1], [0], [0], [1], [0, 0, 1, 1], [], []>} : vector<48x32xf32>, vector<32x8xf32>, vector<48x8xf32> -> vector<48x8xf32>
    %c8_41 = arith.constant 8 : index
    %c0_42 = arith.constant 0 : index
    %c0_43 = arith.constant 0 : index
    %79 = vector.load %arg8[%c8_41, %c0_42, %c0_43] : memref<24x1x8xf32, #tpu.memory_space<vmem>>, vector<1x1x8xf32>
    %80 = vector.shape_cast %79 : vector<1x1x8xf32> to vector<1x8xf32>
    %81 = vector.broadcast %80 : vector<1x8xf32> to vector<48x8xf32>
    %82 = arith.addf %78, %81 : vector<48x8xf32>
    %c1_44 = arith.constant 1 : index
    %c0_45 = arith.constant 0 : index
    %c0_46 = arith.constant 0 : index
    %83 = vector.load %arg7[%c1_44, %c0_45, %c0_46] : memref<24x32x8xf32, #tpu.memory_space<vmem>>, vector<1x32x8xf32>
    %84 = vector.shape_cast %83 : vector<1x32x8xf32> to vector<32x8xf32>
    %cst_47 = arith.constant dense<0.000000e+00> : vector<48x8xf32>
    %85 = tpu.matmul %61, %84, %cst_47 {dimension_numbers = #tpu.dot_dimension_numbers<[1], [0], [0], [1], [0, 0, 1, 1], [], []>} : vector<48x32xf32>, vector<32x8xf32>, vector<48x8xf32> -> vector<48x8xf32>
    %c1_48 = arith.constant 1 : index
    %c0_49 = arith.constant 0 : index
    %c0_50 = arith.constant 0 : index
    %86 = vector.load %arg8[%c1_48, %c0_49, %c0_50] : memref<24x1x8xf32, #tpu.memory_space<vmem>>, vector<1x1x8xf32>
    %87 = vector.shape_cast %86 : vector<1x1x8xf32> to vector<1x8xf32>
    %88 = vector.broadcast %87 : vector<1x8xf32> to vector<48x8xf32>
    %89 = arith.addf %85, %88 : vector<48x8xf32>
    %c5 = arith.constant 5 : index
    %c0_51 = arith.constant 0 : index
    %c0_52 = arith.constant 0 : index
    %90 = vector.load %arg7[%c5, %c0_51, %c0_52] : memref<24x32x8xf32, #tpu.memory_space<vmem>>, vector<1x32x8xf32>
    %91 = vector.shape_cast %90 : vector<1x32x8xf32> to vector<32x8xf32>
    %cst_53 = arith.constant dense<0.000000e+00> : vector<48x8xf32>
    %92 = tpu.matmul %61, %91, %cst_53 {dimension_numbers = #tpu.dot_dimension_numbers<[1], [0], [0], [1], [0, 0, 1, 1], [], []>} : vector<48x32xf32>, vector<32x8xf32>, vector<48x8xf32> -> vector<48x8xf32>
    %c5_54 = arith.constant 5 : index
    %c0_55 = arith.constant 0 : index
    %c0_56 = arith.constant 0 : index
    %93 = vector.load %arg8[%c5_54, %c0_55, %c0_56] : memref<24x1x8xf32, #tpu.memory_space<vmem>>, vector<1x1x8xf32>
    %94 = vector.shape_cast %93 : vector<1x1x8xf32> to vector<1x8xf32>
    %95 = vector.broadcast %94 : vector<1x8xf32> to vector<48x8xf32>
    %96 = arith.addf %92, %95 : vector<48x8xf32>
    %c9 = arith.constant 9 : index
    %c0_57 = arith.constant 0 : index
    %c0_58 = arith.constant 0 : index
    %97 = vector.load %arg7[%c9, %c0_57, %c0_58] : memref<24x32x8xf32, #tpu.memory_space<vmem>>, vector<1x32x8xf32>
    %98 = vector.shape_cast %97 : vector<1x32x8xf32> to vector<32x8xf32>
    %cst_59 = arith.constant dense<0.000000e+00> : vector<48x8xf32>
    %99 = tpu.matmul %61, %98, %cst_59 {dimension_numbers = #tpu.dot_dimension_numbers<[1], [0], [0], [1], [0, 0, 1, 1], [], []>} : vector<48x32xf32>, vector<32x8xf32>, vector<48x8xf32> -> vector<48x8xf32>
    %c9_60 = arith.constant 9 : index
    %c0_61 = arith.constant 0 : index
    %c0_62 = arith.constant 0 : index
    %100 = vector.load %arg8[%c9_60, %c0_61, %c0_62] : memref<24x1x8xf32, #tpu.memory_space<vmem>>, vector<1x1x8xf32>
    %101 = vector.shape_cast %100 : vector<1x1x8xf32> to vector<1x8xf32>
    %102 = vector.broadcast %101 : vector<1x8xf32> to vector<48x8xf32>
    %103 = arith.addf %99, %102 : vector<48x8xf32>
    %c2 = arith.constant 2 : index
    %c0_63 = arith.constant 0 : index
    %c0_64 = arith.constant 0 : index
    %104 = vector.load %arg7[%c2, %c0_63, %c0_64] : memref<24x32x8xf32, #tpu.memory_space<vmem>>, vector<1x32x8xf32>
    %105 = vector.shape_cast %104 : vector<1x32x8xf32> to vector<32x8xf32>
    %cst_65 = arith.constant dense<0.000000e+00> : vector<48x8xf32>
    %106 = tpu.matmul %61, %105, %cst_65 {dimension_numbers = #tpu.dot_dimension_numbers<[1], [0], [0], [1], [0, 0, 1, 1], [], []>} : vector<48x32xf32>, vector<32x8xf32>, vector<48x8xf32> -> vector<48x8xf32>
    %c2_66 = arith.constant 2 : index
    %c0_67 = arith.constant 0 : index
    %c0_68 = arith.constant 0 : index
    %107 = vector.load %arg8[%c2_66, %c0_67, %c0_68] : memref<24x1x8xf32, #tpu.memory_space<vmem>>, vector<1x1x8xf32>
    %108 = vector.shape_cast %107 : vector<1x1x8xf32> to vector<1x8xf32>
    %109 = vector.broadcast %108 : vector<1x8xf32> to vector<48x8xf32>
    %110 = arith.addf %106, %109 : vector<48x8xf32>
    %c6 = arith.constant 6 : index
    %c0_69 = arith.constant 0 : index
    %c0_70 = arith.constant 0 : index
    %111 = vector.load %arg7[%c6, %c0_69, %c0_70] : memref<24x32x8xf32, #tpu.memory_space<vmem>>, vector<1x32x8xf32>
    %112 = vector.shape_cast %111 : vector<1x32x8xf32> to vector<32x8xf32>
    %cst_71 = arith.constant dense<0.000000e+00> : vector<48x8xf32>
    %113 = tpu.matmul %61, %112, %cst_71 {dimension_numbers = #tpu.dot_dimension_numbers<[1], [0], [0], [1], [0, 0, 1, 1], [], []>} : vector<48x32xf32>, vector<32x8xf32>, vector<48x8xf32> -> vector<48x8xf32>
    %c6_72 = arith.constant 6 : index
    %c0_73 = arith.constant 0 : index
    %c0_74 = arith.constant 0 : index
    %114 = vector.load %arg8[%c6_72, %c0_73, %c0_74] : memref<24x1x8xf32, #tpu.memory_space<vmem>>, vector<1x1x8xf32>
    %115 = vector.shape_cast %114 : vector<1x1x8xf32> to vector<1x8xf32>
    %116 = vector.broadcast %115 : vector<1x8xf32> to vector<48x8xf32>
    %117 = arith.addf %113, %116 : vector<48x8xf32>
    %c10 = arith.constant 10 : index
    %c0_75 = arith.constant 0 : index
    %c0_76 = arith.constant 0 : index
    %118 = vector.load %arg7[%c10, %c0_75, %c0_76] : memref<24x32x8xf32, #tpu.memory_space<vmem>>, vector<1x32x8xf32>
    %119 = vector.shape_cast %118 : vector<1x32x8xf32> to vector<32x8xf32>
    %cst_77 = arith.constant dense<0.000000e+00> : vector<48x8xf32>
    %120 = tpu.matmul %61, %119, %cst_77 {dimension_numbers = #tpu.dot_dimension_numbers<[1], [0], [0], [1], [0, 0, 1, 1], [], []>} : vector<48x32xf32>, vector<32x8xf32>, vector<48x8xf32> -> vector<48x8xf32>
    %c10_78 = arith.constant 10 : index
    %c0_79 = arith.constant 0 : index
    %c0_80 = arith.constant 0 : index
    %121 = vector.load %arg8[%c10_78, %c0_79, %c0_80] : memref<24x1x8xf32, #tpu.memory_space<vmem>>, vector<1x1x8xf32>
    %122 = vector.shape_cast %121 : vector<1x1x8xf32> to vector<1x8xf32>
    %123 = vector.broadcast %122 : vector<1x8xf32> to vector<48x8xf32>
    %124 = arith.addf %120, %123 : vector<48x8xf32>
    %c3 = arith.constant 3 : index
    %c0_81 = arith.constant 0 : index
    %c0_82 = arith.constant 0 : index
    %125 = vector.load %arg7[%c3, %c0_81, %c0_82] : memref<24x32x8xf32, #tpu.memory_space<vmem>>, vector<1x32x8xf32>
    %126 = vector.shape_cast %125 : vector<1x32x8xf32> to vector<32x8xf32>
    %cst_83 = arith.constant dense<0.000000e+00> : vector<48x8xf32>
    %127 = tpu.matmul %61, %126, %cst_83 {dimension_numbers = #tpu.dot_dimension_numbers<[1], [0], [0], [1], [0, 0, 1, 1], [], []>} : vector<48x32xf32>, vector<32x8xf32>, vector<48x8xf32> -> vector<48x8xf32>
    %c3_84 = arith.constant 3 : index
    %c0_85 = arith.constant 0 : index
    %c0_86 = arith.constant 0 : index
    %128 = vector.load %arg8[%c3_84, %c0_85, %c0_86] : memref<24x1x8xf32, #tpu.memory_space<vmem>>, vector<1x1x8xf32>
    %129 = vector.shape_cast %128 : vector<1x1x8xf32> to vector<1x8xf32>
    %130 = vector.broadcast %129 : vector<1x8xf32> to vector<48x8xf32>
    %131 = arith.addf %127, %130 : vector<48x8xf32>
    %c7 = arith.constant 7 : index
    %c0_87 = arith.constant 0 : index
    %c0_88 = arith.constant 0 : index
    %132 = vector.load %arg7[%c7, %c0_87, %c0_88] : memref<24x32x8xf32, #tpu.memory_space<vmem>>, vector<1x32x8xf32>
    %133 = vector.shape_cast %132 : vector<1x32x8xf32> to vector<32x8xf32>
    %cst_89 = arith.constant dense<0.000000e+00> : vector<48x8xf32>
    %134 = tpu.matmul %61, %133, %cst_89 {dimension_numbers = #tpu.dot_dimension_numbers<[1], [0], [0], [1], [0, 0, 1, 1], [], []>} : vector<48x32xf32>, vector<32x8xf32>, vector<48x8xf32> -> vector<48x8xf32>
    %c7_90 = arith.constant 7 : index
    %c0_91 = arith.constant 0 : index
    %c0_92 = arith.constant 0 : index
    %135 = vector.load %arg8[%c7_90, %c0_91, %c0_92] : memref<24x1x8xf32, #tpu.memory_space<vmem>>, vector<1x1x8xf32>
    %136 = vector.shape_cast %135 : vector<1x1x8xf32> to vector<1x8xf32>
    %137 = vector.broadcast %136 : vector<1x8xf32> to vector<48x8xf32>
    %138 = arith.addf %134, %137 : vector<48x8xf32>
    %c11 = arith.constant 11 : index
    %c0_93 = arith.constant 0 : index
    %c0_94 = arith.constant 0 : index
    %139 = vector.load %arg7[%c11, %c0_93, %c0_94] : memref<24x32x8xf32, #tpu.memory_space<vmem>>, vector<1x32x8xf32>
    %140 = vector.shape_cast %139 : vector<1x32x8xf32> to vector<32x8xf32>
    %cst_95 = arith.constant dense<0.000000e+00> : vector<48x8xf32>
    %141 = tpu.matmul %61, %140, %cst_95 {dimension_numbers = #tpu.dot_dimension_numbers<[1], [0], [0], [1], [0, 0, 1, 1], [], []>} : vector<48x32xf32>, vector<32x8xf32>, vector<48x8xf32> -> vector<48x8xf32>
    %c11_96 = arith.constant 11 : index
    %c0_97 = arith.constant 0 : index
    %c0_98 = arith.constant 0 : index
    %142 = vector.load %arg8[%c11_96, %c0_97, %c0_98] : memref<24x1x8xf32, #tpu.memory_space<vmem>>, vector<1x1x8xf32>
    %143 = vector.shape_cast %142 : vector<1x1x8xf32> to vector<1x8xf32>
    %144 = vector.broadcast %143 : vector<1x8xf32> to vector<48x8xf32>
    %145 = arith.addf %141, %144 : vector<48x8xf32>
    %146 = vector.extract_strided_slice %68 {offsets = [0, 0], sizes = [24, 8], strides = [1, 1]} : vector<48x8xf32> to vector<24x8xf32>
    %147 = vector.extract_strided_slice %75 {offsets = [0, 0], sizes = [24, 8], strides = [1, 1]} : vector<48x8xf32> to vector<24x8xf32>
    %148 = vector.extract_strided_slice %82 {offsets = [0, 0], sizes = [24, 8], strides = [1, 1]} : vector<48x8xf32> to vector<24x8xf32>
    %cst_99 = arith.constant dense<0.000000e+00> : vector<24x24xf32>
    %149 = tpu.matmul %146, %147, %cst_99 {dimension_numbers = #tpu.dot_dimension_numbers<[1], [1], [0], [0], [0, 0, 1, 0], [], []>} : vector<24x8xf32>, vector<24x8xf32>, vector<24x24xf32> -> vector<24x24xf32>
    %150 = arith.addf %149, %37 : vector<24x24xf32>
    %cst_100 = arith.constant dense<0xFF800000> : vector<24xf32>
    %151 = vector.multi_reduction <maximumf>, %150, %cst_100 [1] : vector<24x24xf32> to vector<24xf32>
    %152 = vector.shape_cast %151 : vector<24xf32> to vector<24x1xf32>
    %153 = vector.broadcast %152 : vector<24x1xf32> to vector<24x24xf32>
    %154 = arith.subf %150, %153 : vector<24x24xf32>
    %155 = math.exp %154 : vector<24x24xf32>
    %cst_101 = arith.constant dense<0.000000e+00> : vector<24xf32>
    %156 = vector.multi_reduction <add>, %155, %cst_101 [1] : vector<24x24xf32> to vector<24xf32>
    %157 = vector.shape_cast %156 : vector<24xf32> to vector<24x1xf32>
    %158 = tpu.reciprocal %157 {approx = true} : vector<24x1xf32> -> vector<24x1xf32>
    %159 = vector.broadcast %158 : vector<24x1xf32> to vector<24x24xf32>
    %160 = arith.mulf %155, %159 : vector<24x24xf32>
    %cst_102 = arith.constant dense<0.000000e+00> : vector<24x8xf32>
    %161 = tpu.matmul %160, %148, %cst_102 {dimension_numbers = #tpu.dot_dimension_numbers<[1], [0], [0], [1], [0, 0, 1, 1], [], []>} : vector<24x24xf32>, vector<24x8xf32>, vector<24x8xf32> -> vector<24x8xf32>
    %c0_103 = arith.constant 0 : index
    %c0_104 = arith.constant 0 : index
    %c0_105 = arith.constant 0 : index
    %162 = vector.load %arg9[%c0_103, %c0_104, %c0_105] : memref<8x8x32xf32, #tpu.memory_space<vmem>>, vector<1x8x32xf32>
    %163 = vector.shape_cast %162 : vector<1x8x32xf32> to vector<8x32xf32>
    %cst_106 = arith.constant dense<0.000000e+00> : vector<24x32xf32>
    %164 = tpu.matmul %161, %163, %cst_106 {dimension_numbers = #tpu.dot_dimension_numbers<[1], [0], [0], [1], [0, 0, 1, 1], [], []>} : vector<24x8xf32>, vector<8x32xf32>, vector<24x32xf32> -> vector<24x32xf32>
    %165 = vector.extract_strided_slice %89 {offsets = [0, 0], sizes = [24, 8], strides = [1, 1]} : vector<48x8xf32> to vector<24x8xf32>
    %166 = vector.extract_strided_slice %96 {offsets = [0, 0], sizes = [24, 8], strides = [1, 1]} : vector<48x8xf32> to vector<24x8xf32>
    %167 = vector.extract_strided_slice %103 {offsets = [0, 0], sizes = [24, 8], strides = [1, 1]} : vector<48x8xf32> to vector<24x8xf32>
    %cst_107 = arith.constant dense<0.000000e+00> : vector<24x24xf32>
    %168 = tpu.matmul %165, %166, %cst_107 {dimension_numbers = #tpu.dot_dimension_numbers<[1], [1], [0], [0], [0, 0, 1, 0], [], []>} : vector<24x8xf32>, vector<24x8xf32>, vector<24x24xf32> -> vector<24x24xf32>
    %169 = arith.addf %168, %37 : vector<24x24xf32>
    %cst_108 = arith.constant dense<0xFF800000> : vector<24xf32>
    %170 = vector.multi_reduction <maximumf>, %169, %cst_108 [1] : vector<24x24xf32> to vector<24xf32>
    %171 = vector.shape_cast %170 : vector<24xf32> to vector<24x1xf32>
    %172 = vector.broadcast %171 : vector<24x1xf32> to vector<24x24xf32>
    %173 = arith.subf %169, %172 : vector<24x24xf32>
    %174 = math.exp %173 : vector<24x24xf32>
    %cst_109 = arith.constant dense<0.000000e+00> : vector<24xf32>
    %175 = vector.multi_reduction <add>, %174, %cst_109 [1] : vector<24x24xf32> to vector<24xf32>
    %176 = vector.shape_cast %175 : vector<24xf32> to vector<24x1xf32>
    %177 = tpu.reciprocal %176 {approx = true} : vector<24x1xf32> -> vector<24x1xf32>
    %178 = vector.broadcast %177 : vector<24x1xf32> to vector<24x24xf32>
    %179 = arith.mulf %174, %178 : vector<24x24xf32>
    %cst_110 = arith.constant dense<0.000000e+00> : vector<24x8xf32>
    %180 = tpu.matmul %179, %167, %cst_110 {dimension_numbers = #tpu.dot_dimension_numbers<[1], [0], [0], [1], [0, 0, 1, 1], [], []>} : vector<24x24xf32>, vector<24x8xf32>, vector<24x8xf32> -> vector<24x8xf32>
    %c1_111 = arith.constant 1 : index
    %c0_112 = arith.constant 0 : index
    %c0_113 = arith.constant 0 : index
    %181 = vector.load %arg9[%c1_111, %c0_112, %c0_113] : memref<8x8x32xf32, #tpu.memory_space<vmem>>, vector<1x8x32xf32>
    %182 = vector.shape_cast %181 : vector<1x8x32xf32> to vector<8x32xf32>
    %cst_114 = arith.constant dense<0.000000e+00> : vector<24x32xf32>
    %183 = tpu.matmul %180, %182, %cst_114 {dimension_numbers = #tpu.dot_dimension_numbers<[1], [0], [0], [1], [0, 0, 1, 1], [], []>} : vector<24x8xf32>, vector<8x32xf32>, vector<24x32xf32> -> vector<24x32xf32>
    %184 = arith.addf %164, %183 : vector<24x32xf32>
    %185 = vector.extract_strided_slice %110 {offsets = [0, 0], sizes = [24, 8], strides = [1, 1]} : vector<48x8xf32> to vector<24x8xf32>
    %186 = vector.extract_strided_slice %117 {offsets = [0, 0], sizes = [24, 8], strides = [1, 1]} : vector<48x8xf32> to vector<24x8xf32>
    %187 = vector.extract_strided_slice %124 {offsets = [0, 0], sizes = [24, 8], strides = [1, 1]} : vector<48x8xf32> to vector<24x8xf32>
    %cst_115 = arith.constant dense<0.000000e+00> : vector<24x24xf32>
    %188 = tpu.matmul %185, %186, %cst_115 {dimension_numbers = #tpu.dot_dimension_numbers<[1], [1], [0], [0], [0, 0, 1, 0], [], []>} : vector<24x8xf32>, vector<24x8xf32>, vector<24x24xf32> -> vector<24x24xf32>
    %189 = arith.addf %188, %37 : vector<24x24xf32>
    %cst_116 = arith.constant dense<0xFF800000> : vector<24xf32>
    %190 = vector.multi_reduction <maximumf>, %189, %cst_116 [1] : vector<24x24xf32> to vector<24xf32>
    %191 = vector.shape_cast %190 : vector<24xf32> to vector<24x1xf32>
    %192 = vector.broadcast %191 : vector<24x1xf32> to vector<24x24xf32>
    %193 = arith.subf %189, %192 : vector<24x24xf32>
    %194 = math.exp %193 : vector<24x24xf32>
    %cst_117 = arith.constant dense<0.000000e+00> : vector<24xf32>
    %195 = vector.multi_reduction <add>, %194, %cst_117 [1] : vector<24x24xf32> to vector<24xf32>
    %196 = vector.shape_cast %195 : vector<24xf32> to vector<24x1xf32>
    %197 = tpu.reciprocal %196 {approx = true} : vector<24x1xf32> -> vector<24x1xf32>
    %198 = vector.broadcast %197 : vector<24x1xf32> to vector<24x24xf32>
    %199 = arith.mulf %194, %198 : vector<24x24xf32>
    %cst_118 = arith.constant dense<0.000000e+00> : vector<24x8xf32>
    %200 = tpu.matmul %199, %187, %cst_118 {dimension_numbers = #tpu.dot_dimension_numbers<[1], [0], [0], [1], [0, 0, 1, 1], [], []>} : vector<24x24xf32>, vector<24x8xf32>, vector<24x8xf32> -> vector<24x8xf32>
    %c2_119 = arith.constant 2 : index
    %c0_120 = arith.constant 0 : index
    %c0_121 = arith.constant 0 : index
    %201 = vector.load %arg9[%c2_119, %c0_120, %c0_121] : memref<8x8x32xf32, #tpu.memory_space<vmem>>, vector<1x8x32xf32>
    %202 = vector.shape_cast %201 : vector<1x8x32xf32> to vector<8x32xf32>
    %cst_122 = arith.constant dense<0.000000e+00> : vector<24x32xf32>
    %203 = tpu.matmul %200, %202, %cst_122 {dimension_numbers = #tpu.dot_dimension_numbers<[1], [0], [0], [1], [0, 0, 1, 1], [], []>} : vector<24x8xf32>, vector<8x32xf32>, vector<24x32xf32> -> vector<24x32xf32>
    %204 = arith.addf %184, %203 : vector<24x32xf32>
    %205 = vector.extract_strided_slice %131 {offsets = [0, 0], sizes = [24, 8], strides = [1, 1]} : vector<48x8xf32> to vector<24x8xf32>
    %206 = vector.extract_strided_slice %138 {offsets = [0, 0], sizes = [24, 8], strides = [1, 1]} : vector<48x8xf32> to vector<24x8xf32>
    %207 = vector.extract_strided_slice %145 {offsets = [0, 0], sizes = [24, 8], strides = [1, 1]} : vector<48x8xf32> to vector<24x8xf32>
    %cst_123 = arith.constant dense<0.000000e+00> : vector<24x24xf32>
    %208 = tpu.matmul %205, %206, %cst_123 {dimension_numbers = #tpu.dot_dimension_numbers<[1], [1], [0], [0], [0, 0, 1, 0], [], []>} : vector<24x8xf32>, vector<24x8xf32>, vector<24x24xf32> -> vector<24x24xf32>
    %209 = arith.addf %208, %37 : vector<24x24xf32>
    %cst_124 = arith.constant dense<0xFF800000> : vector<24xf32>
    %210 = vector.multi_reduction <maximumf>, %209, %cst_124 [1] : vector<24x24xf32> to vector<24xf32>
    %211 = vector.shape_cast %210 : vector<24xf32> to vector<24x1xf32>
    %212 = vector.broadcast %211 : vector<24x1xf32> to vector<24x24xf32>
    %213 = arith.subf %209, %212 : vector<24x24xf32>
    %214 = math.exp %213 : vector<24x24xf32>
    %cst_125 = arith.constant dense<0.000000e+00> : vector<24xf32>
    %215 = vector.multi_reduction <add>, %214, %cst_125 [1] : vector<24x24xf32> to vector<24xf32>
    %216 = vector.shape_cast %215 : vector<24xf32> to vector<24x1xf32>
    %217 = tpu.reciprocal %216 {approx = true} : vector<24x1xf32> -> vector<24x1xf32>
    %218 = vector.broadcast %217 : vector<24x1xf32> to vector<24x24xf32>
    %219 = arith.mulf %214, %218 : vector<24x24xf32>
    %cst_126 = arith.constant dense<0.000000e+00> : vector<24x8xf32>
    %220 = tpu.matmul %219, %207, %cst_126 {dimension_numbers = #tpu.dot_dimension_numbers<[1], [0], [0], [1], [0, 0, 1, 1], [], []>} : vector<24x24xf32>, vector<24x8xf32>, vector<24x8xf32> -> vector<24x8xf32>
    %c3_127 = arith.constant 3 : index
    %c0_128 = arith.constant 0 : index
    %c0_129 = arith.constant 0 : index
    %221 = vector.load %arg9[%c3_127, %c0_128, %c0_129] : memref<8x8x32xf32, #tpu.memory_space<vmem>>, vector<1x8x32xf32>
    %222 = vector.shape_cast %221 : vector<1x8x32xf32> to vector<8x32xf32>
    %cst_130 = arith.constant dense<0.000000e+00> : vector<24x32xf32>
    %223 = tpu.matmul %220, %222, %cst_130 {dimension_numbers = #tpu.dot_dimension_numbers<[1], [0], [0], [1], [0, 0, 1, 1], [], []>} : vector<24x8xf32>, vector<8x32xf32>, vector<24x32xf32> -> vector<24x32xf32>
    %224 = arith.addf %204, %223 : vector<24x32xf32>
    %225 = vector.extract_strided_slice %68 {offsets = [24, 0], sizes = [24, 8], strides = [1, 1]} : vector<48x8xf32> to vector<24x8xf32>
    %226 = vector.extract_strided_slice %75 {offsets = [24, 0], sizes = [24, 8], strides = [1, 1]} : vector<48x8xf32> to vector<24x8xf32>
    %227 = vector.extract_strided_slice %82 {offsets = [24, 0], sizes = [24, 8], strides = [1, 1]} : vector<48x8xf32> to vector<24x8xf32>
    %cst_131 = arith.constant dense<0.000000e+00> : vector<24x24xf32>
    %228 = tpu.matmul %225, %226, %cst_131 {dimension_numbers = #tpu.dot_dimension_numbers<[1], [1], [0], [0], [0, 0, 1, 0], [], []>} : vector<24x8xf32>, vector<24x8xf32>, vector<24x24xf32> -> vector<24x24xf32>
    %229 = arith.addf %228, %37 : vector<24x24xf32>
    %cst_132 = arith.constant dense<0xFF800000> : vector<24xf32>
    %230 = vector.multi_reduction <maximumf>, %229, %cst_132 [1] : vector<24x24xf32> to vector<24xf32>
    %231 = vector.shape_cast %230 : vector<24xf32> to vector<24x1xf32>
    %232 = vector.broadcast %231 : vector<24x1xf32> to vector<24x24xf32>
    %233 = arith.subf %229, %232 : vector<24x24xf32>
    %234 = math.exp %233 : vector<24x24xf32>
    %cst_133 = arith.constant dense<0.000000e+00> : vector<24xf32>
    %235 = vector.multi_reduction <add>, %234, %cst_133 [1] : vector<24x24xf32> to vector<24xf32>
    %236 = vector.shape_cast %235 : vector<24xf32> to vector<24x1xf32>
    %237 = tpu.reciprocal %236 {approx = true} : vector<24x1xf32> -> vector<24x1xf32>
    %238 = vector.broadcast %237 : vector<24x1xf32> to vector<24x24xf32>
    %239 = arith.mulf %234, %238 : vector<24x24xf32>
    %cst_134 = arith.constant dense<0.000000e+00> : vector<24x8xf32>
    %240 = tpu.matmul %239, %227, %cst_134 {dimension_numbers = #tpu.dot_dimension_numbers<[1], [0], [0], [1], [0, 0, 1, 1], [], []>} : vector<24x24xf32>, vector<24x8xf32>, vector<24x8xf32> -> vector<24x8xf32>
    %c0_135 = arith.constant 0 : index
    %c0_136 = arith.constant 0 : index
    %c0_137 = arith.constant 0 : index
    %241 = vector.load %arg9[%c0_135, %c0_136, %c0_137] : memref<8x8x32xf32, #tpu.memory_space<vmem>>, vector<1x8x32xf32>
    %242 = vector.shape_cast %241 : vector<1x8x32xf32> to vector<8x32xf32>
    %cst_138 = arith.constant dense<0.000000e+00> : vector<24x32xf32>
    %243 = tpu.matmul %240, %242, %cst_138 {dimension_numbers = #tpu.dot_dimension_numbers<[1], [0], [0], [1], [0, 0, 1, 1], [], []>} : vector<24x8xf32>, vector<8x32xf32>, vector<24x32xf32> -> vector<24x32xf32>
    %244 = vector.extract_strided_slice %89 {offsets = [24, 0], sizes = [24, 8], strides = [1, 1]} : vector<48x8xf32> to vector<24x8xf32>
    %245 = vector.extract_strided_slice %96 {offsets = [24, 0], sizes = [24, 8], strides = [1, 1]} : vector<48x8xf32> to vector<24x8xf32>
    %246 = vector.extract_strided_slice %103 {offsets = [24, 0], sizes = [24, 8], strides = [1, 1]} : vector<48x8xf32> to vector<24x8xf32>
    %cst_139 = arith.constant dense<0.000000e+00> : vector<24x24xf32>
    %247 = tpu.matmul %244, %245, %cst_139 {dimension_numbers = #tpu.dot_dimension_numbers<[1], [1], [0], [0], [0, 0, 1, 0], [], []>} : vector<24x8xf32>, vector<24x8xf32>, vector<24x24xf32> -> vector<24x24xf32>
    %248 = arith.addf %247, %37 : vector<24x24xf32>
    %cst_140 = arith.constant dense<0xFF800000> : vector<24xf32>
    %249 = vector.multi_reduction <maximumf>, %248, %cst_140 [1] : vector<24x24xf32> to vector<24xf32>
    %250 = vector.shape_cast %249 : vector<24xf32> to vector<24x1xf32>
    %251 = vector.broadcast %250 : vector<24x1xf32> to vector<24x24xf32>
    %252 = arith.subf %248, %251 : vector<24x24xf32>
    %253 = math.exp %252 : vector<24x24xf32>
    %cst_141 = arith.constant dense<0.000000e+00> : vector<24xf32>
    %254 = vector.multi_reduction <add>, %253, %cst_141 [1] : vector<24x24xf32> to vector<24xf32>
    %255 = vector.shape_cast %254 : vector<24xf32> to vector<24x1xf32>
    %256 = tpu.reciprocal %255 {approx = true} : vector<24x1xf32> -> vector<24x1xf32>
    %257 = vector.broadcast %256 : vector<24x1xf32> to vector<24x24xf32>
    %258 = arith.mulf %253, %257 : vector<24x24xf32>
    %cst_142 = arith.constant dense<0.000000e+00> : vector<24x8xf32>
    %259 = tpu.matmul %258, %246, %cst_142 {dimension_numbers = #tpu.dot_dimension_numbers<[1], [0], [0], [1], [0, 0, 1, 1], [], []>} : vector<24x24xf32>, vector<24x8xf32>, vector<24x8xf32> -> vector<24x8xf32>
    %c1_143 = arith.constant 1 : index
    %c0_144 = arith.constant 0 : index
    %c0_145 = arith.constant 0 : index
    %260 = vector.load %arg9[%c1_143, %c0_144, %c0_145] : memref<8x8x32xf32, #tpu.memory_space<vmem>>, vector<1x8x32xf32>
    %261 = vector.shape_cast %260 : vector<1x8x32xf32> to vector<8x32xf32>
    %cst_146 = arith.constant dense<0.000000e+00> : vector<24x32xf32>
    %262 = tpu.matmul %259, %261, %cst_146 {dimension_numbers = #tpu.dot_dimension_numbers<[1], [0], [0], [1], [0, 0, 1, 1], [], []>} : vector<24x8xf32>, vector<8x32xf32>, vector<24x32xf32> -> vector<24x32xf32>
    %263 = arith.addf %243, %262 : vector<24x32xf32>
    %264 = vector.extract_strided_slice %110 {offsets = [24, 0], sizes = [24, 8], strides = [1, 1]} : vector<48x8xf32> to vector<24x8xf32>
    %265 = vector.extract_strided_slice %117 {offsets = [24, 0], sizes = [24, 8], strides = [1, 1]} : vector<48x8xf32> to vector<24x8xf32>
    %266 = vector.extract_strided_slice %124 {offsets = [24, 0], sizes = [24, 8], strides = [1, 1]} : vector<48x8xf32> to vector<24x8xf32>
    %cst_147 = arith.constant dense<0.000000e+00> : vector<24x24xf32>
    %267 = tpu.matmul %264, %265, %cst_147 {dimension_numbers = #tpu.dot_dimension_numbers<[1], [1], [0], [0], [0, 0, 1, 0], [], []>} : vector<24x8xf32>, vector<24x8xf32>, vector<24x24xf32> -> vector<24x24xf32>
    %268 = arith.addf %267, %37 : vector<24x24xf32>
    %cst_148 = arith.constant dense<0xFF800000> : vector<24xf32>
    %269 = vector.multi_reduction <maximumf>, %268, %cst_148 [1] : vector<24x24xf32> to vector<24xf32>
    %270 = vector.shape_cast %269 : vector<24xf32> to vector<24x1xf32>
    %271 = vector.broadcast %270 : vector<24x1xf32> to vector<24x24xf32>
    %272 = arith.subf %268, %271 : vector<24x24xf32>
    %273 = math.exp %272 : vector<24x24xf32>
    %cst_149 = arith.constant dense<0.000000e+00> : vector<24xf32>
    %274 = vector.multi_reduction <add>, %273, %cst_149 [1] : vector<24x24xf32> to vector<24xf32>
    %275 = vector.shape_cast %274 : vector<24xf32> to vector<24x1xf32>
    %276 = tpu.reciprocal %275 {approx = true} : vector<24x1xf32> -> vector<24x1xf32>
    %277 = vector.broadcast %276 : vector<24x1xf32> to vector<24x24xf32>
    %278 = arith.mulf %273, %277 : vector<24x24xf32>
    %cst_150 = arith.constant dense<0.000000e+00> : vector<24x8xf32>
    %279 = tpu.matmul %278, %266, %cst_150 {dimension_numbers = #tpu.dot_dimension_numbers<[1], [0], [0], [1], [0, 0, 1, 1], [], []>} : vector<24x24xf32>, vector<24x8xf32>, vector<24x8xf32> -> vector<24x8xf32>
    %c2_151 = arith.constant 2 : index
    %c0_152 = arith.constant 0 : index
    %c0_153 = arith.constant 0 : index
    %280 = vector.load %arg9[%c2_151, %c0_152, %c0_153] : memref<8x8x32xf32, #tpu.memory_space<vmem>>, vector<1x8x32xf32>
    %281 = vector.shape_cast %280 : vector<1x8x32xf32> to vector<8x32xf32>
    %cst_154 = arith.constant dense<0.000000e+00> : vector<24x32xf32>
    %282 = tpu.matmul %279, %281, %cst_154 {dimension_numbers = #tpu.dot_dimension_numbers<[1], [0], [0], [1], [0, 0, 1, 1], [], []>} : vector<24x8xf32>, vector<8x32xf32>, vector<24x32xf32> -> vector<24x32xf32>
    %283 = arith.addf %263, %282 : vector<24x32xf32>
    %284 = vector.extract_strided_slice %131 {offsets = [24, 0], sizes = [24, 8], strides = [1, 1]} : vector<48x8xf32> to vector<24x8xf32>
    %285 = vector.extract_strided_slice %138 {offsets = [24, 0], sizes = [24, 8], strides = [1, 1]} : vector<48x8xf32> to vector<24x8xf32>
    %286 = vector.extract_strided_slice %145 {offsets = [24, 0], sizes = [24, 8], strides = [1, 1]} : vector<48x8xf32> to vector<24x8xf32>
    %cst_155 = arith.constant dense<0.000000e+00> : vector<24x24xf32>
    %287 = tpu.matmul %284, %285, %cst_155 {dimension_numbers = #tpu.dot_dimension_numbers<[1], [1], [0], [0], [0, 0, 1, 0], [], []>} : vector<24x8xf32>, vector<24x8xf32>, vector<24x24xf32> -> vector<24x24xf32>
    %288 = arith.addf %287, %37 : vector<24x24xf32>
    %cst_156 = arith.constant dense<0xFF800000> : vector<24xf32>
    %289 = vector.multi_reduction <maximumf>, %288, %cst_156 [1] : vector<24x24xf32> to vector<24xf32>
    %290 = vector.shape_cast %289 : vector<24xf32> to vector<24x1xf32>
    %291 = vector.broadcast %290 : vector<24x1xf32> to vector<24x24xf32>
    %292 = arith.subf %288, %291 : vector<24x24xf32>
    %293 = math.exp %292 : vector<24x24xf32>
    %cst_157 = arith.constant dense<0.000000e+00> : vector<24xf32>
    %294 = vector.multi_reduction <add>, %293, %cst_157 [1] : vector<24x24xf32> to vector<24xf32>
    %295 = vector.shape_cast %294 : vector<24xf32> to vector<24x1xf32>
    %296 = tpu.reciprocal %295 {approx = true} : vector<24x1xf32> -> vector<24x1xf32>
    %297 = vector.broadcast %296 : vector<24x1xf32> to vector<24x24xf32>
    %298 = arith.mulf %293, %297 : vector<24x24xf32>
    %cst_158 = arith.constant dense<0.000000e+00> : vector<24x8xf32>
    %299 = tpu.matmul %298, %286, %cst_158 {dimension_numbers = #tpu.dot_dimension_numbers<[1], [0], [0], [1], [0, 0, 1, 1], [], []>} : vector<24x24xf32>, vector<24x8xf32>, vector<24x8xf32> -> vector<24x8xf32>
    %c3_159 = arith.constant 3 : index
    %c0_160 = arith.constant 0 : index
    %c0_161 = arith.constant 0 : index
    %300 = vector.load %arg9[%c3_159, %c0_160, %c0_161] : memref<8x8x32xf32, #tpu.memory_space<vmem>>, vector<1x8x32xf32>
    %301 = vector.shape_cast %300 : vector<1x8x32xf32> to vector<8x32xf32>
    %cst_162 = arith.constant dense<0.000000e+00> : vector<24x32xf32>
    %302 = tpu.matmul %299, %301, %cst_162 {dimension_numbers = #tpu.dot_dimension_numbers<[1], [0], [0], [1], [0, 0, 1, 1], [], []>} : vector<24x8xf32>, vector<8x32xf32>, vector<24x32xf32> -> vector<24x32xf32>
    %303 = arith.addf %283, %302 : vector<24x32xf32>
    %304 = tpu.concatenate %224, %303 in 0 : vector<24x32xf32>, vector<24x32xf32> -> vector<48x32xf32>
    %305 = arith.addf %31, %304 : vector<48x32xf32>
    %c0_163 = arith.constant 0 : index
    %c0_164 = arith.constant 0 : index
    %c0_165 = arith.constant 0 : index
    %306 = vector.load %arg10[%c0_163, %c0_164, %c0_165] : memref<2x1x32xf32, #tpu.memory_space<vmem>>, vector<1x1x32xf32>
    %307 = vector.shape_cast %306 : vector<1x1x32xf32> to vector<1x32xf32>
    %308 = vector.broadcast %307 : vector<1x32xf32> to vector<48x32xf32>
    %309 = arith.addf %305, %308 : vector<48x32xf32>
    %c0_166 = arith.constant 0 : index
    %c0_167 = arith.constant 0 : index
    %c0_168 = arith.constant 0 : index
    %310 = vector.load %arg11[%c0_166, %c0_167, %c0_168] : memref<2x2x32xf32, #tpu.memory_space<vmem>>, vector<1x2x32xf32>
    %311 = vector.shape_cast %310 : vector<1x2x32xf32> to vector<2x32xf32>
    %312 = vector.extract_strided_slice %311 {offsets = [0, 0], sizes = [1, 32], strides = [1, 1]} : vector<2x32xf32> to vector<1x32xf32>
    %313 = vector.extract_strided_slice %311 {offsets = [1, 0], sizes = [1, 32], strides = [1, 1]} : vector<2x32xf32> to vector<1x32xf32>
    %cst_169 = arith.constant dense<0.000000e+00> : vector<48xf32>
    %314 = vector.multi_reduction <add>, %309, %cst_169 [1] : vector<48x32xf32> to vector<48xf32>
    %315 = vector.shape_cast %314 : vector<48xf32> to vector<48x1xf32>
    %cst_170 = arith.constant 3.200000e+01 : f32
    %316 = vector.broadcast %cst_170 : f32 to vector<48x1xf32>
    %317 = arith.divf %315, %316 : vector<48x1xf32>
    %318 = vector.broadcast %317 : vector<48x1xf32> to vector<48x32xf32>
    %319 = arith.subf %309, %318 : vector<48x32xf32>
    %320 = arith.mulf %319, %319 : vector<48x32xf32>
    %cst_171 = arith.constant dense<0.000000e+00> : vector<48xf32>
    %321 = vector.multi_reduction <add>, %320, %cst_171 [1] : vector<48x32xf32> to vector<48xf32>
    %322 = vector.shape_cast %321 : vector<48xf32> to vector<48x1xf32>
    %cst_172 = arith.constant 3.200000e+01 : f32
    %323 = vector.broadcast %cst_172 : f32 to vector<48x1xf32>
    %324 = arith.divf %322, %323 : vector<48x1xf32>
    %cst_173 = arith.constant 9.99999974E-6 : f32
    %325 = vector.broadcast %cst_173 : f32 to vector<48x1xf32>
    %326 = arith.addf %324, %325 : vector<48x1xf32>
    %327 = math.rsqrt %326 : vector<48x1xf32>
    %328 = vector.broadcast %327 : vector<48x1xf32> to vector<48x32xf32>
    %329 = arith.mulf %319, %328 : vector<48x32xf32>
    %330 = vector.broadcast %312 : vector<1x32xf32> to vector<48x32xf32>
    %331 = arith.mulf %329, %330 : vector<48x32xf32>
    %332 = vector.broadcast %313 : vector<1x32xf32> to vector<48x32xf32>
    %333 = arith.addf %331, %332 : vector<48x32xf32>
    %c0_174 = arith.constant 0 : index
    %c0_175 = arith.constant 0 : index
    %c0_176 = arith.constant 0 : index
    %334 = vector.load %arg12[%c0_174, %c0_175, %c0_176] : memref<2x32x128xf32, #tpu.memory_space<vmem>>, vector<1x32x128xf32>
    %335 = vector.shape_cast %334 : vector<1x32x128xf32> to vector<32x128xf32>
    %cst_177 = arith.constant dense<0.000000e+00> : vector<48x128xf32>
    %336 = tpu.matmul %333, %335, %cst_177 {dimension_numbers = #tpu.dot_dimension_numbers<[1], [0], [0], [1], [0, 0, 1, 1], [], []>} : vector<48x32xf32>, vector<32x128xf32>, vector<48x128xf32> -> vector<48x128xf32>
    %c0_178 = arith.constant 0 : index
    %c0_179 = arith.constant 0 : index
    %c0_180 = arith.constant 0 : index
    %337 = vector.load %arg13[%c0_178, %c0_179, %c0_180] : memref<2x1x128xf32, #tpu.memory_space<vmem>>, vector<1x1x128xf32>
    %338 = vector.shape_cast %337 : vector<1x1x128xf32> to vector<1x128xf32>
    %339 = vector.broadcast %338 : vector<1x128xf32> to vector<48x128xf32>
    %340 = arith.addf %336, %339 : vector<48x128xf32>
    %cst_181 = arith.constant 1.702000e+00 : f32
    %341 = vector.broadcast %cst_181 : f32 to vector<48x128xf32>
    %342 = arith.mulf %341, %340 : vector<48x128xf32>
    %343 = arith.negf %342 : vector<48x128xf32>
    %344 = math.exp %343 : vector<48x128xf32>
    %cst_182 = arith.constant 1.000000e+00 : f32
    %345 = vector.broadcast %cst_182 : f32 to vector<48x128xf32>
    %346 = arith.addf %345, %344 : vector<48x128xf32>
    %347 = arith.divf %345, %346 : vector<48x128xf32>
    %348 = arith.mulf %340, %347 : vector<48x128xf32>
    %c0_183 = arith.constant 0 : index
    %c0_184 = arith.constant 0 : index
    %c0_185 = arith.constant 0 : index
    %349 = vector.load %arg14[%c0_183, %c0_184, %c0_185] : memref<2x128x32xf32, #tpu.memory_space<vmem>>, vector<1x128x32xf32>
    %350 = vector.shape_cast %349 : vector<1x128x32xf32> to vector<128x32xf32>
    %cst_186 = arith.constant dense<0.000000e+00> : vector<48x32xf32>
    %351 = tpu.matmul %348, %350, %cst_186 {dimension_numbers = #tpu.dot_dimension_numbers<[1], [0], [0], [1], [0, 0, 1, 1], [], []>} : vector<48x128xf32>, vector<128x32xf32>, vector<48x32xf32> -> vector<48x32xf32>
    %c0_187 = arith.constant 0 : index
    %c0_188 = arith.constant 0 : index
    %c0_189 = arith.constant 0 : index
    %352 = vector.load %arg15[%c0_187, %c0_188, %c0_189] : memref<2x1x32xf32, #tpu.memory_space<vmem>>, vector<1x1x32xf32>
    %353 = vector.shape_cast %352 : vector<1x1x32xf32> to vector<1x32xf32>
    %354 = vector.broadcast %353 : vector<1x32xf32> to vector<48x32xf32>
    %355 = arith.addf %351, %354 : vector<48x32xf32>
    %356 = arith.addf %309, %355 : vector<48x32xf32>
    %c1_190 = arith.constant 1 : index
    %c0_191 = arith.constant 0 : index
    %c0_192 = arith.constant 0 : index
    %357 = vector.load %arg6[%c1_190, %c0_191, %c0_192] : memref<2x2x32xf32, #tpu.memory_space<vmem>>, vector<1x2x32xf32>
    %358 = vector.shape_cast %357 : vector<1x2x32xf32> to vector<2x32xf32>
    %359 = vector.extract_strided_slice %358 {offsets = [0, 0], sizes = [1, 32], strides = [1, 1]} : vector<2x32xf32> to vector<1x32xf32>
    %360 = vector.extract_strided_slice %358 {offsets = [1, 0], sizes = [1, 32], strides = [1, 1]} : vector<2x32xf32> to vector<1x32xf32>
    %cst_193 = arith.constant dense<0.000000e+00> : vector<48xf32>
    %361 = vector.multi_reduction <add>, %356, %cst_193 [1] : vector<48x32xf32> to vector<48xf32>
    %362 = vector.shape_cast %361 : vector<48xf32> to vector<48x1xf32>
    %cst_194 = arith.constant 3.200000e+01 : f32
    %363 = vector.broadcast %cst_194 : f32 to vector<48x1xf32>
    %364 = arith.divf %362, %363 : vector<48x1xf32>
    %365 = vector.broadcast %364 : vector<48x1xf32> to vector<48x32xf32>
    %366 = arith.subf %356, %365 : vector<48x32xf32>
    %367 = arith.mulf %366, %366 : vector<48x32xf32>
    %cst_195 = arith.constant dense<0.000000e+00> : vector<48xf32>
    %368 = vector.multi_reduction <add>, %367, %cst_195 [1] : vector<48x32xf32> to vector<48xf32>
    %369 = vector.shape_cast %368 : vector<48xf32> to vector<48x1xf32>
    %cst_196 = arith.constant 3.200000e+01 : f32
    %370 = vector.broadcast %cst_196 : f32 to vector<48x1xf32>
    %371 = arith.divf %369, %370 : vector<48x1xf32>
    %cst_197 = arith.constant 9.99999974E-6 : f32
    %372 = vector.broadcast %cst_197 : f32 to vector<48x1xf32>
    %373 = arith.addf %371, %372 : vector<48x1xf32>
    %374 = math.rsqrt %373 : vector<48x1xf32>
    %375 = vector.broadcast %374 : vector<48x1xf32> to vector<48x32xf32>
    %376 = arith.mulf %366, %375 : vector<48x32xf32>
    %377 = vector.broadcast %359 : vector<1x32xf32> to vector<48x32xf32>
    %378 = arith.mulf %376, %377 : vector<48x32xf32>
    %379 = vector.broadcast %360 : vector<1x32xf32> to vector<48x32xf32>
    %380 = arith.addf %378, %379 : vector<48x32xf32>
    %c12 = arith.constant 12 : index
    %c0_198 = arith.constant 0 : index
    %c0_199 = arith.constant 0 : index
    %381 = vector.load %arg7[%c12, %c0_198, %c0_199] : memref<24x32x8xf32, #tpu.memory_space<vmem>>, vector<1x32x8xf32>
    %382 = vector.shape_cast %381 : vector<1x32x8xf32> to vector<32x8xf32>
    %cst_200 = arith.constant dense<0.000000e+00> : vector<48x8xf32>
    %383 = tpu.matmul %380, %382, %cst_200 {dimension_numbers = #tpu.dot_dimension_numbers<[1], [0], [0], [1], [0, 0, 1, 1], [], []>} : vector<48x32xf32>, vector<32x8xf32>, vector<48x8xf32> -> vector<48x8xf32>
    %c12_201 = arith.constant 12 : index
    %c0_202 = arith.constant 0 : index
    %c0_203 = arith.constant 0 : index
    %384 = vector.load %arg8[%c12_201, %c0_202, %c0_203] : memref<24x1x8xf32, #tpu.memory_space<vmem>>, vector<1x1x8xf32>
    %385 = vector.shape_cast %384 : vector<1x1x8xf32> to vector<1x8xf32>
    %386 = vector.broadcast %385 : vector<1x8xf32> to vector<48x8xf32>
    %387 = arith.addf %383, %386 : vector<48x8xf32>
    %c16 = arith.constant 16 : index
    %c0_204 = arith.constant 0 : index
    %c0_205 = arith.constant 0 : index
    %388 = vector.load %arg7[%c16, %c0_204, %c0_205] : memref<24x32x8xf32, #tpu.memory_space<vmem>>, vector<1x32x8xf32>
    %389 = vector.shape_cast %388 : vector<1x32x8xf32> to vector<32x8xf32>
    %cst_206 = arith.constant dense<0.000000e+00> : vector<48x8xf32>
    %390 = tpu.matmul %380, %389, %cst_206 {dimension_numbers = #tpu.dot_dimension_numbers<[1], [0], [0], [1], [0, 0, 1, 1], [], []>} : vector<48x32xf32>, vector<32x8xf32>, vector<48x8xf32> -> vector<48x8xf32>
    %c16_207 = arith.constant 16 : index
    %c0_208 = arith.constant 0 : index
    %c0_209 = arith.constant 0 : index
    %391 = vector.load %arg8[%c16_207, %c0_208, %c0_209] : memref<24x1x8xf32, #tpu.memory_space<vmem>>, vector<1x1x8xf32>
    %392 = vector.shape_cast %391 : vector<1x1x8xf32> to vector<1x8xf32>
    %393 = vector.broadcast %392 : vector<1x8xf32> to vector<48x8xf32>
    %394 = arith.addf %390, %393 : vector<48x8xf32>
    %c20 = arith.constant 20 : index
    %c0_210 = arith.constant 0 : index
    %c0_211 = arith.constant 0 : index
    %395 = vector.load %arg7[%c20, %c0_210, %c0_211] : memref<24x32x8xf32, #tpu.memory_space<vmem>>, vector<1x32x8xf32>
    %396 = vector.shape_cast %395 : vector<1x32x8xf32> to vector<32x8xf32>
    %cst_212 = arith.constant dense<0.000000e+00> : vector<48x8xf32>
    %397 = tpu.matmul %380, %396, %cst_212 {dimension_numbers = #tpu.dot_dimension_numbers<[1], [0], [0], [1], [0, 0, 1, 1], [], []>} : vector<48x32xf32>, vector<32x8xf32>, vector<48x8xf32> -> vector<48x8xf32>
    %c20_213 = arith.constant 20 : index
    %c0_214 = arith.constant 0 : index
    %c0_215 = arith.constant 0 : index
    %398 = vector.load %arg8[%c20_213, %c0_214, %c0_215] : memref<24x1x8xf32, #tpu.memory_space<vmem>>, vector<1x1x8xf32>
    %399 = vector.shape_cast %398 : vector<1x1x8xf32> to vector<1x8xf32>
    %400 = vector.broadcast %399 : vector<1x8xf32> to vector<48x8xf32>
    %401 = arith.addf %397, %400 : vector<48x8xf32>
    %c13 = arith.constant 13 : index
    %c0_216 = arith.constant 0 : index
    %c0_217 = arith.constant 0 : index
    %402 = vector.load %arg7[%c13, %c0_216, %c0_217] : memref<24x32x8xf32, #tpu.memory_space<vmem>>, vector<1x32x8xf32>
    %403 = vector.shape_cast %402 : vector<1x32x8xf32> to vector<32x8xf32>
    %cst_218 = arith.constant dense<0.000000e+00> : vector<48x8xf32>
    %404 = tpu.matmul %380, %403, %cst_218 {dimension_numbers = #tpu.dot_dimension_numbers<[1], [0], [0], [1], [0, 0, 1, 1], [], []>} : vector<48x32xf32>, vector<32x8xf32>, vector<48x8xf32> -> vector<48x8xf32>
    %c13_219 = arith.constant 13 : index
    %c0_220 = arith.constant 0 : index
    %c0_221 = arith.constant 0 : index
    %405 = vector.load %arg8[%c13_219, %c0_220, %c0_221] : memref<24x1x8xf32, #tpu.memory_space<vmem>>, vector<1x1x8xf32>
    %406 = vector.shape_cast %405 : vector<1x1x8xf32> to vector<1x8xf32>
    %407 = vector.broadcast %406 : vector<1x8xf32> to vector<48x8xf32>
    %408 = arith.addf %404, %407 : vector<48x8xf32>
    %c17 = arith.constant 17 : index
    %c0_222 = arith.constant 0 : index
    %c0_223 = arith.constant 0 : index
    %409 = vector.load %arg7[%c17, %c0_222, %c0_223] : memref<24x32x8xf32, #tpu.memory_space<vmem>>, vector<1x32x8xf32>
    %410 = vector.shape_cast %409 : vector<1x32x8xf32> to vector<32x8xf32>
    %cst_224 = arith.constant dense<0.000000e+00> : vector<48x8xf32>
    %411 = tpu.matmul %380, %410, %cst_224 {dimension_numbers = #tpu.dot_dimension_numbers<[1], [0], [0], [1], [0, 0, 1, 1], [], []>} : vector<48x32xf32>, vector<32x8xf32>, vector<48x8xf32> -> vector<48x8xf32>
    %c17_225 = arith.constant 17 : index
    %c0_226 = arith.constant 0 : index
    %c0_227 = arith.constant 0 : index
    %412 = vector.load %arg8[%c17_225, %c0_226, %c0_227] : memref<24x1x8xf32, #tpu.memory_space<vmem>>, vector<1x1x8xf32>
    %413 = vector.shape_cast %412 : vector<1x1x8xf32> to vector<1x8xf32>
    %414 = vector.broadcast %413 : vector<1x8xf32> to vector<48x8xf32>
    %415 = arith.addf %411, %414 : vector<48x8xf32>
    %c21 = arith.constant 21 : index
    %c0_228 = arith.constant 0 : index
    %c0_229 = arith.constant 0 : index
    %416 = vector.load %arg7[%c21, %c0_228, %c0_229] : memref<24x32x8xf32, #tpu.memory_space<vmem>>, vector<1x32x8xf32>
    %417 = vector.shape_cast %416 : vector<1x32x8xf32> to vector<32x8xf32>
    %cst_230 = arith.constant dense<0.000000e+00> : vector<48x8xf32>
    %418 = tpu.matmul %380, %417, %cst_230 {dimension_numbers = #tpu.dot_dimension_numbers<[1], [0], [0], [1], [0, 0, 1, 1], [], []>} : vector<48x32xf32>, vector<32x8xf32>, vector<48x8xf32> -> vector<48x8xf32>
    %c21_231 = arith.constant 21 : index
    %c0_232 = arith.constant 0 : index
    %c0_233 = arith.constant 0 : index
    %419 = vector.load %arg8[%c21_231, %c0_232, %c0_233] : memref<24x1x8xf32, #tpu.memory_space<vmem>>, vector<1x1x8xf32>
    %420 = vector.shape_cast %419 : vector<1x1x8xf32> to vector<1x8xf32>
    %421 = vector.broadcast %420 : vector<1x8xf32> to vector<48x8xf32>
    %422 = arith.addf %418, %421 : vector<48x8xf32>
    %c14 = arith.constant 14 : index
    %c0_234 = arith.constant 0 : index
    %c0_235 = arith.constant 0 : index
    %423 = vector.load %arg7[%c14, %c0_234, %c0_235] : memref<24x32x8xf32, #tpu.memory_space<vmem>>, vector<1x32x8xf32>
    %424 = vector.shape_cast %423 : vector<1x32x8xf32> to vector<32x8xf32>
    %cst_236 = arith.constant dense<0.000000e+00> : vector<48x8xf32>
    %425 = tpu.matmul %380, %424, %cst_236 {dimension_numbers = #tpu.dot_dimension_numbers<[1], [0], [0], [1], [0, 0, 1, 1], [], []>} : vector<48x32xf32>, vector<32x8xf32>, vector<48x8xf32> -> vector<48x8xf32>
    %c14_237 = arith.constant 14 : index
    %c0_238 = arith.constant 0 : index
    %c0_239 = arith.constant 0 : index
    %426 = vector.load %arg8[%c14_237, %c0_238, %c0_239] : memref<24x1x8xf32, #tpu.memory_space<vmem>>, vector<1x1x8xf32>
    %427 = vector.shape_cast %426 : vector<1x1x8xf32> to vector<1x8xf32>
    %428 = vector.broadcast %427 : vector<1x8xf32> to vector<48x8xf32>
    %429 = arith.addf %425, %428 : vector<48x8xf32>
    %c18 = arith.constant 18 : index
    %c0_240 = arith.constant 0 : index
    %c0_241 = arith.constant 0 : index
    %430 = vector.load %arg7[%c18, %c0_240, %c0_241] : memref<24x32x8xf32, #tpu.memory_space<vmem>>, vector<1x32x8xf32>
    %431 = vector.shape_cast %430 : vector<1x32x8xf32> to vector<32x8xf32>
    %cst_242 = arith.constant dense<0.000000e+00> : vector<48x8xf32>
    %432 = tpu.matmul %380, %431, %cst_242 {dimension_numbers = #tpu.dot_dimension_numbers<[1], [0], [0], [1], [0, 0, 1, 1], [], []>} : vector<48x32xf32>, vector<32x8xf32>, vector<48x8xf32> -> vector<48x8xf32>
    %c18_243 = arith.constant 18 : index
    %c0_244 = arith.constant 0 : index
    %c0_245 = arith.constant 0 : index
    %433 = vector.load %arg8[%c18_243, %c0_244, %c0_245] : memref<24x1x8xf32, #tpu.memory_space<vmem>>, vector<1x1x8xf32>
    %434 = vector.shape_cast %433 : vector<1x1x8xf32> to vector<1x8xf32>
    %435 = vector.broadcast %434 : vector<1x8xf32> to vector<48x8xf32>
    %436 = arith.addf %432, %435 : vector<48x8xf32>
    %c22 = arith.constant 22 : index
    %c0_246 = arith.constant 0 : index
    %c0_247 = arith.constant 0 : index
    %437 = vector.load %arg7[%c22, %c0_246, %c0_247] : memref<24x32x8xf32, #tpu.memory_space<vmem>>, vector<1x32x8xf32>
    %438 = vector.shape_cast %437 : vector<1x32x8xf32> to vector<32x8xf32>
    %cst_248 = arith.constant dense<0.000000e+00> : vector<48x8xf32>
    %439 = tpu.matmul %380, %438, %cst_248 {dimension_numbers = #tpu.dot_dimension_numbers<[1], [0], [0], [1], [0, 0, 1, 1], [], []>} : vector<48x32xf32>, vector<32x8xf32>, vector<48x8xf32> -> vector<48x8xf32>
    %c22_249 = arith.constant 22 : index
    %c0_250 = arith.constant 0 : index
    %c0_251 = arith.constant 0 : index
    %440 = vector.load %arg8[%c22_249, %c0_250, %c0_251] : memref<24x1x8xf32, #tpu.memory_space<vmem>>, vector<1x1x8xf32>
    %441 = vector.shape_cast %440 : vector<1x1x8xf32> to vector<1x8xf32>
    %442 = vector.broadcast %441 : vector<1x8xf32> to vector<48x8xf32>
    %443 = arith.addf %439, %442 : vector<48x8xf32>
    %c15 = arith.constant 15 : index
    %c0_252 = arith.constant 0 : index
    %c0_253 = arith.constant 0 : index
    %444 = vector.load %arg7[%c15, %c0_252, %c0_253] : memref<24x32x8xf32, #tpu.memory_space<vmem>>, vector<1x32x8xf32>
    %445 = vector.shape_cast %444 : vector<1x32x8xf32> to vector<32x8xf32>
    %cst_254 = arith.constant dense<0.000000e+00> : vector<48x8xf32>
    %446 = tpu.matmul %380, %445, %cst_254 {dimension_numbers = #tpu.dot_dimension_numbers<[1], [0], [0], [1], [0, 0, 1, 1], [], []>} : vector<48x32xf32>, vector<32x8xf32>, vector<48x8xf32> -> vector<48x8xf32>
    %c15_255 = arith.constant 15 : index
    %c0_256 = arith.constant 0 : index
    %c0_257 = arith.constant 0 : index
    %447 = vector.load %arg8[%c15_255, %c0_256, %c0_257] : memref<24x1x8xf32, #tpu.memory_space<vmem>>, vector<1x1x8xf32>
    %448 = vector.shape_cast %447 : vector<1x1x8xf32> to vector<1x8xf32>
    %449 = vector.broadcast %448 : vector<1x8xf32> to vector<48x8xf32>
    %450 = arith.addf %446, %449 : vector<48x8xf32>
    %c19 = arith.constant 19 : index
    %c0_258 = arith.constant 0 : index
    %c0_259 = arith.constant 0 : index
    %451 = vector.load %arg7[%c19, %c0_258, %c0_259] : memref<24x32x8xf32, #tpu.memory_space<vmem>>, vector<1x32x8xf32>
    %452 = vector.shape_cast %451 : vector<1x32x8xf32> to vector<32x8xf32>
    %cst_260 = arith.constant dense<0.000000e+00> : vector<48x8xf32>
    %453 = tpu.matmul %380, %452, %cst_260 {dimension_numbers = #tpu.dot_dimension_numbers<[1], [0], [0], [1], [0, 0, 1, 1], [], []>} : vector<48x32xf32>, vector<32x8xf32>, vector<48x8xf32> -> vector<48x8xf32>
    %c19_261 = arith.constant 19 : index
    %c0_262 = arith.constant 0 : index
    %c0_263 = arith.constant 0 : index
    %454 = vector.load %arg8[%c19_261, %c0_262, %c0_263] : memref<24x1x8xf32, #tpu.memory_space<vmem>>, vector<1x1x8xf32>
    %455 = vector.shape_cast %454 : vector<1x1x8xf32> to vector<1x8xf32>
    %456 = vector.broadcast %455 : vector<1x8xf32> to vector<48x8xf32>
    %457 = arith.addf %453, %456 : vector<48x8xf32>
    %c23 = arith.constant 23 : index
    %c0_264 = arith.constant 0 : index
    %c0_265 = arith.constant 0 : index
    %458 = vector.load %arg7[%c23, %c0_264, %c0_265] : memref<24x32x8xf32, #tpu.memory_space<vmem>>, vector<1x32x8xf32>
    %459 = vector.shape_cast %458 : vector<1x32x8xf32> to vector<32x8xf32>
    %cst_266 = arith.constant dense<0.000000e+00> : vector<48x8xf32>
    %460 = tpu.matmul %380, %459, %cst_266 {dimension_numbers = #tpu.dot_dimension_numbers<[1], [0], [0], [1], [0, 0, 1, 1], [], []>} : vector<48x32xf32>, vector<32x8xf32>, vector<48x8xf32> -> vector<48x8xf32>
    %c23_267 = arith.constant 23 : index
    %c0_268 = arith.constant 0 : index
    %c0_269 = arith.constant 0 : index
    %461 = vector.load %arg8[%c23_267, %c0_268, %c0_269] : memref<24x1x8xf32, #tpu.memory_space<vmem>>, vector<1x1x8xf32>
    %462 = vector.shape_cast %461 : vector<1x1x8xf32> to vector<1x8xf32>
    %463 = vector.broadcast %462 : vector<1x8xf32> to vector<48x8xf32>
    %464 = arith.addf %460, %463 : vector<48x8xf32>
    %465 = vector.extract_strided_slice %387 {offsets = [0, 0], sizes = [24, 8], strides = [1, 1]} : vector<48x8xf32> to vector<24x8xf32>
    %466 = vector.extract_strided_slice %394 {offsets = [0, 0], sizes = [24, 8], strides = [1, 1]} : vector<48x8xf32> to vector<24x8xf32>
    %467 = vector.extract_strided_slice %401 {offsets = [0, 0], sizes = [24, 8], strides = [1, 1]} : vector<48x8xf32> to vector<24x8xf32>
    %cst_270 = arith.constant dense<0.000000e+00> : vector<24x24xf32>
    %468 = tpu.matmul %465, %466, %cst_270 {dimension_numbers = #tpu.dot_dimension_numbers<[1], [1], [0], [0], [0, 0, 1, 0], [], []>} : vector<24x8xf32>, vector<24x8xf32>, vector<24x24xf32> -> vector<24x24xf32>
    %469 = arith.addf %468, %37 : vector<24x24xf32>
    %cst_271 = arith.constant dense<0xFF800000> : vector<24xf32>
    %470 = vector.multi_reduction <maximumf>, %469, %cst_271 [1] : vector<24x24xf32> to vector<24xf32>
    %471 = vector.shape_cast %470 : vector<24xf32> to vector<24x1xf32>
    %472 = vector.broadcast %471 : vector<24x1xf32> to vector<24x24xf32>
    %473 = arith.subf %469, %472 : vector<24x24xf32>
    %474 = math.exp %473 : vector<24x24xf32>
    %cst_272 = arith.constant dense<0.000000e+00> : vector<24xf32>
    %475 = vector.multi_reduction <add>, %474, %cst_272 [1] : vector<24x24xf32> to vector<24xf32>
    %476 = vector.shape_cast %475 : vector<24xf32> to vector<24x1xf32>
    %477 = tpu.reciprocal %476 {approx = true} : vector<24x1xf32> -> vector<24x1xf32>
    %478 = vector.broadcast %477 : vector<24x1xf32> to vector<24x24xf32>
    %479 = arith.mulf %474, %478 : vector<24x24xf32>
    %cst_273 = arith.constant dense<0.000000e+00> : vector<24x8xf32>
    %480 = tpu.matmul %479, %467, %cst_273 {dimension_numbers = #tpu.dot_dimension_numbers<[1], [0], [0], [1], [0, 0, 1, 1], [], []>} : vector<24x24xf32>, vector<24x8xf32>, vector<24x8xf32> -> vector<24x8xf32>
    %c4_274 = arith.constant 4 : index
    %c0_275 = arith.constant 0 : index
    %c0_276 = arith.constant 0 : index
    %481 = vector.load %arg9[%c4_274, %c0_275, %c0_276] : memref<8x8x32xf32, #tpu.memory_space<vmem>>, vector<1x8x32xf32>
    %482 = vector.shape_cast %481 : vector<1x8x32xf32> to vector<8x32xf32>
    %cst_277 = arith.constant dense<0.000000e+00> : vector<24x32xf32>
    %483 = tpu.matmul %480, %482, %cst_277 {dimension_numbers = #tpu.dot_dimension_numbers<[1], [0], [0], [1], [0, 0, 1, 1], [], []>} : vector<24x8xf32>, vector<8x32xf32>, vector<24x32xf32> -> vector<24x32xf32>
    %484 = vector.extract_strided_slice %408 {offsets = [0, 0], sizes = [24, 8], strides = [1, 1]} : vector<48x8xf32> to vector<24x8xf32>
    %485 = vector.extract_strided_slice %415 {offsets = [0, 0], sizes = [24, 8], strides = [1, 1]} : vector<48x8xf32> to vector<24x8xf32>
    %486 = vector.extract_strided_slice %422 {offsets = [0, 0], sizes = [24, 8], strides = [1, 1]} : vector<48x8xf32> to vector<24x8xf32>
    %cst_278 = arith.constant dense<0.000000e+00> : vector<24x24xf32>
    %487 = tpu.matmul %484, %485, %cst_278 {dimension_numbers = #tpu.dot_dimension_numbers<[1], [1], [0], [0], [0, 0, 1, 0], [], []>} : vector<24x8xf32>, vector<24x8xf32>, vector<24x24xf32> -> vector<24x24xf32>
    %488 = arith.addf %487, %37 : vector<24x24xf32>
    %cst_279 = arith.constant dense<0xFF800000> : vector<24xf32>
    %489 = vector.multi_reduction <maximumf>, %488, %cst_279 [1] : vector<24x24xf32> to vector<24xf32>
    %490 = vector.shape_cast %489 : vector<24xf32> to vector<24x1xf32>
    %491 = vector.broadcast %490 : vector<24x1xf32> to vector<24x24xf32>
    %492 = arith.subf %488, %491 : vector<24x24xf32>
    %493 = math.exp %492 : vector<24x24xf32>
    %cst_280 = arith.constant dense<0.000000e+00> : vector<24xf32>
    %494 = vector.multi_reduction <add>, %493, %cst_280 [1] : vector<24x24xf32> to vector<24xf32>
    %495 = vector.shape_cast %494 : vector<24xf32> to vector<24x1xf32>
    %496 = tpu.reciprocal %495 {approx = true} : vector<24x1xf32> -> vector<24x1xf32>
    %497 = vector.broadcast %496 : vector<24x1xf32> to vector<24x24xf32>
    %498 = arith.mulf %493, %497 : vector<24x24xf32>
    %cst_281 = arith.constant dense<0.000000e+00> : vector<24x8xf32>
    %499 = tpu.matmul %498, %486, %cst_281 {dimension_numbers = #tpu.dot_dimension_numbers<[1], [0], [0], [1], [0, 0, 1, 1], [], []>} : vector<24x24xf32>, vector<24x8xf32>, vector<24x8xf32> -> vector<24x8xf32>
    %c5_282 = arith.constant 5 : index
    %c0_283 = arith.constant 0 : index
    %c0_284 = arith.constant 0 : index
    %500 = vector.load %arg9[%c5_282, %c0_283, %c0_284] : memref<8x8x32xf32, #tpu.memory_space<vmem>>, vector<1x8x32xf32>
    %501 = vector.shape_cast %500 : vector<1x8x32xf32> to vector<8x32xf32>
    %cst_285 = arith.constant dense<0.000000e+00> : vector<24x32xf32>
    %502 = tpu.matmul %499, %501, %cst_285 {dimension_numbers = #tpu.dot_dimension_numbers<[1], [0], [0], [1], [0, 0, 1, 1], [], []>} : vector<24x8xf32>, vector<8x32xf32>, vector<24x32xf32> -> vector<24x32xf32>
    %503 = arith.addf %483, %502 : vector<24x32xf32>
    %504 = vector.extract_strided_slice %429 {offsets = [0, 0], sizes = [24, 8], strides = [1, 1]} : vector<48x8xf32> to vector<24x8xf32>
    %505 = vector.extract_strided_slice %436 {offsets = [0, 0], sizes = [24, 8], strides = [1, 1]} : vector<48x8xf32> to vector<24x8xf32>
    %506 = vector.extract_strided_slice %443 {offsets = [0, 0], sizes = [24, 8], strides = [1, 1]} : vector<48x8xf32> to vector<24x8xf32>
    %cst_286 = arith.constant dense<0.000000e+00> : vector<24x24xf32>
    %507 = tpu.matmul %504, %505, %cst_286 {dimension_numbers = #tpu.dot_dimension_numbers<[1], [1], [0], [0], [0, 0, 1, 0], [], []>} : vector<24x8xf32>, vector<24x8xf32>, vector<24x24xf32> -> vector<24x24xf32>
    %508 = arith.addf %507, %37 : vector<24x24xf32>
    %cst_287 = arith.constant dense<0xFF800000> : vector<24xf32>
    %509 = vector.multi_reduction <maximumf>, %508, %cst_287 [1] : vector<24x24xf32> to vector<24xf32>
    %510 = vector.shape_cast %509 : vector<24xf32> to vector<24x1xf32>
    %511 = vector.broadcast %510 : vector<24x1xf32> to vector<24x24xf32>
    %512 = arith.subf %508, %511 : vector<24x24xf32>
    %513 = math.exp %512 : vector<24x24xf32>
    %cst_288 = arith.constant dense<0.000000e+00> : vector<24xf32>
    %514 = vector.multi_reduction <add>, %513, %cst_288 [1] : vector<24x24xf32> to vector<24xf32>
    %515 = vector.shape_cast %514 : vector<24xf32> to vector<24x1xf32>
    %516 = tpu.reciprocal %515 {approx = true} : vector<24x1xf32> -> vector<24x1xf32>
    %517 = vector.broadcast %516 : vector<24x1xf32> to vector<24x24xf32>
    %518 = arith.mulf %513, %517 : vector<24x24xf32>
    %cst_289 = arith.constant dense<0.000000e+00> : vector<24x8xf32>
    %519 = tpu.matmul %518, %506, %cst_289 {dimension_numbers = #tpu.dot_dimension_numbers<[1], [0], [0], [1], [0, 0, 1, 1], [], []>} : vector<24x24xf32>, vector<24x8xf32>, vector<24x8xf32> -> vector<24x8xf32>
    %c6_290 = arith.constant 6 : index
    %c0_291 = arith.constant 0 : index
    %c0_292 = arith.constant 0 : index
    %520 = vector.load %arg9[%c6_290, %c0_291, %c0_292] : memref<8x8x32xf32, #tpu.memory_space<vmem>>, vector<1x8x32xf32>
    %521 = vector.shape_cast %520 : vector<1x8x32xf32> to vector<8x32xf32>
    %cst_293 = arith.constant dense<0.000000e+00> : vector<24x32xf32>
    %522 = tpu.matmul %519, %521, %cst_293 {dimension_numbers = #tpu.dot_dimension_numbers<[1], [0], [0], [1], [0, 0, 1, 1], [], []>} : vector<24x8xf32>, vector<8x32xf32>, vector<24x32xf32> -> vector<24x32xf32>
    %523 = arith.addf %503, %522 : vector<24x32xf32>
    %524 = vector.extract_strided_slice %450 {offsets = [0, 0], sizes = [24, 8], strides = [1, 1]} : vector<48x8xf32> to vector<24x8xf32>
    %525 = vector.extract_strided_slice %457 {offsets = [0, 0], sizes = [24, 8], strides = [1, 1]} : vector<48x8xf32> to vector<24x8xf32>
    %526 = vector.extract_strided_slice %464 {offsets = [0, 0], sizes = [24, 8], strides = [1, 1]} : vector<48x8xf32> to vector<24x8xf32>
    %cst_294 = arith.constant dense<0.000000e+00> : vector<24x24xf32>
    %527 = tpu.matmul %524, %525, %cst_294 {dimension_numbers = #tpu.dot_dimension_numbers<[1], [1], [0], [0], [0, 0, 1, 0], [], []>} : vector<24x8xf32>, vector<24x8xf32>, vector<24x24xf32> -> vector<24x24xf32>
    %528 = arith.addf %527, %37 : vector<24x24xf32>
    %cst_295 = arith.constant dense<0xFF800000> : vector<24xf32>
    %529 = vector.multi_reduction <maximumf>, %528, %cst_295 [1] : vector<24x24xf32> to vector<24xf32>
    %530 = vector.shape_cast %529 : vector<24xf32> to vector<24x1xf32>
    %531 = vector.broadcast %530 : vector<24x1xf32> to vector<24x24xf32>
    %532 = arith.subf %528, %531 : vector<24x24xf32>
    %533 = math.exp %532 : vector<24x24xf32>
    %cst_296 = arith.constant dense<0.000000e+00> : vector<24xf32>
    %534 = vector.multi_reduction <add>, %533, %cst_296 [1] : vector<24x24xf32> to vector<24xf32>
    %535 = vector.shape_cast %534 : vector<24xf32> to vector<24x1xf32>
    %536 = tpu.reciprocal %535 {approx = true} : vector<24x1xf32> -> vector<24x1xf32>
    %537 = vector.broadcast %536 : vector<24x1xf32> to vector<24x24xf32>
    %538 = arith.mulf %533, %537 : vector<24x24xf32>
    %cst_297 = arith.constant dense<0.000000e+00> : vector<24x8xf32>
    %539 = tpu.matmul %538, %526, %cst_297 {dimension_numbers = #tpu.dot_dimension_numbers<[1], [0], [0], [1], [0, 0, 1, 1], [], []>} : vector<24x24xf32>, vector<24x8xf32>, vector<24x8xf32> -> vector<24x8xf32>
    %c7_298 = arith.constant 7 : index
    %c0_299 = arith.constant 0 : index
    %c0_300 = arith.constant 0 : index
    %540 = vector.load %arg9[%c7_298, %c0_299, %c0_300] : memref<8x8x32xf32, #tpu.memory_space<vmem>>, vector<1x8x32xf32>
    %541 = vector.shape_cast %540 : vector<1x8x32xf32> to vector<8x32xf32>
    %cst_301 = arith.constant dense<0.000000e+00> : vector<24x32xf32>
    %542 = tpu.matmul %539, %541, %cst_301 {dimension_numbers = #tpu.dot_dimension_numbers<[1], [0], [0], [1], [0, 0, 1, 1], [], []>} : vector<24x8xf32>, vector<8x32xf32>, vector<24x32xf32> -> vector<24x32xf32>
    %543 = arith.addf %523, %542 : vector<24x32xf32>
    %544 = vector.extract_strided_slice %387 {offsets = [24, 0], sizes = [24, 8], strides = [1, 1]} : vector<48x8xf32> to vector<24x8xf32>
    %545 = vector.extract_strided_slice %394 {offsets = [24, 0], sizes = [24, 8], strides = [1, 1]} : vector<48x8xf32> to vector<24x8xf32>
    %546 = vector.extract_strided_slice %401 {offsets = [24, 0], sizes = [24, 8], strides = [1, 1]} : vector<48x8xf32> to vector<24x8xf32>
    %cst_302 = arith.constant dense<0.000000e+00> : vector<24x24xf32>
    %547 = tpu.matmul %544, %545, %cst_302 {dimension_numbers = #tpu.dot_dimension_numbers<[1], [1], [0], [0], [0, 0, 1, 0], [], []>} : vector<24x8xf32>, vector<24x8xf32>, vector<24x24xf32> -> vector<24x24xf32>
    %548 = arith.addf %547, %37 : vector<24x24xf32>
    %cst_303 = arith.constant dense<0xFF800000> : vector<24xf32>
    %549 = vector.multi_reduction <maximumf>, %548, %cst_303 [1] : vector<24x24xf32> to vector<24xf32>
    %550 = vector.shape_cast %549 : vector<24xf32> to vector<24x1xf32>
    %551 = vector.broadcast %550 : vector<24x1xf32> to vector<24x24xf32>
    %552 = arith.subf %548, %551 : vector<24x24xf32>
    %553 = math.exp %552 : vector<24x24xf32>
    %cst_304 = arith.constant dense<0.000000e+00> : vector<24xf32>
    %554 = vector.multi_reduction <add>, %553, %cst_304 [1] : vector<24x24xf32> to vector<24xf32>
    %555 = vector.shape_cast %554 : vector<24xf32> to vector<24x1xf32>
    %556 = tpu.reciprocal %555 {approx = true} : vector<24x1xf32> -> vector<24x1xf32>
    %557 = vector.broadcast %556 : vector<24x1xf32> to vector<24x24xf32>
    %558 = arith.mulf %553, %557 : vector<24x24xf32>
    %cst_305 = arith.constant dense<0.000000e+00> : vector<24x8xf32>
    %559 = tpu.matmul %558, %546, %cst_305 {dimension_numbers = #tpu.dot_dimension_numbers<[1], [0], [0], [1], [0, 0, 1, 1], [], []>} : vector<24x24xf32>, vector<24x8xf32>, vector<24x8xf32> -> vector<24x8xf32>
    %c4_306 = arith.constant 4 : index
    %c0_307 = arith.constant 0 : index
    %c0_308 = arith.constant 0 : index
    %560 = vector.load %arg9[%c4_306, %c0_307, %c0_308] : memref<8x8x32xf32, #tpu.memory_space<vmem>>, vector<1x8x32xf32>
    %561 = vector.shape_cast %560 : vector<1x8x32xf32> to vector<8x32xf32>
    %cst_309 = arith.constant dense<0.000000e+00> : vector<24x32xf32>
    %562 = tpu.matmul %559, %561, %cst_309 {dimension_numbers = #tpu.dot_dimension_numbers<[1], [0], [0], [1], [0, 0, 1, 1], [], []>} : vector<24x8xf32>, vector<8x32xf32>, vector<24x32xf32> -> vector<24x32xf32>
    %563 = vector.extract_strided_slice %408 {offsets = [24, 0], sizes = [24, 8], strides = [1, 1]} : vector<48x8xf32> to vector<24x8xf32>
    %564 = vector.extract_strided_slice %415 {offsets = [24, 0], sizes = [24, 8], strides = [1, 1]} : vector<48x8xf32> to vector<24x8xf32>
    %565 = vector.extract_strided_slice %422 {offsets = [24, 0], sizes = [24, 8], strides = [1, 1]} : vector<48x8xf32> to vector<24x8xf32>
    %cst_310 = arith.constant dense<0.000000e+00> : vector<24x24xf32>
    %566 = tpu.matmul %563, %564, %cst_310 {dimension_numbers = #tpu.dot_dimension_numbers<[1], [1], [0], [0], [0, 0, 1, 0], [], []>} : vector<24x8xf32>, vector<24x8xf32>, vector<24x24xf32> -> vector<24x24xf32>
    %567 = arith.addf %566, %37 : vector<24x24xf32>
    %cst_311 = arith.constant dense<0xFF800000> : vector<24xf32>
    %568 = vector.multi_reduction <maximumf>, %567, %cst_311 [1] : vector<24x24xf32> to vector<24xf32>
    %569 = vector.shape_cast %568 : vector<24xf32> to vector<24x1xf32>
    %570 = vector.broadcast %569 : vector<24x1xf32> to vector<24x24xf32>
    %571 = arith.subf %567, %570 : vector<24x24xf32>
    %572 = math.exp %571 : vector<24x24xf32>
    %cst_312 = arith.constant dense<0.000000e+00> : vector<24xf32>
    %573 = vector.multi_reduction <add>, %572, %cst_312 [1] : vector<24x24xf32> to vector<24xf32>
    %574 = vector.shape_cast %573 : vector<24xf32> to vector<24x1xf32>
    %575 = tpu.reciprocal %574 {approx = true} : vector<24x1xf32> -> vector<24x1xf32>
    %576 = vector.broadcast %575 : vector<24x1xf32> to vector<24x24xf32>
    %577 = arith.mulf %572, %576 : vector<24x24xf32>
    %cst_313 = arith.constant dense<0.000000e+00> : vector<24x8xf32>
    %578 = tpu.matmul %577, %565, %cst_313 {dimension_numbers = #tpu.dot_dimension_numbers<[1], [0], [0], [1], [0, 0, 1, 1], [], []>} : vector<24x24xf32>, vector<24x8xf32>, vector<24x8xf32> -> vector<24x8xf32>
    %c5_314 = arith.constant 5 : index
    %c0_315 = arith.constant 0 : index
    %c0_316 = arith.constant 0 : index
    %579 = vector.load %arg9[%c5_314, %c0_315, %c0_316] : memref<8x8x32xf32, #tpu.memory_space<vmem>>, vector<1x8x32xf32>
    %580 = vector.shape_cast %579 : vector<1x8x32xf32> to vector<8x32xf32>
    %cst_317 = arith.constant dense<0.000000e+00> : vector<24x32xf32>
    %581 = tpu.matmul %578, %580, %cst_317 {dimension_numbers = #tpu.dot_dimension_numbers<[1], [0], [0], [1], [0, 0, 1, 1], [], []>} : vector<24x8xf32>, vector<8x32xf32>, vector<24x32xf32> -> vector<24x32xf32>
    %582 = arith.addf %562, %581 : vector<24x32xf32>
    %583 = vector.extract_strided_slice %429 {offsets = [24, 0], sizes = [24, 8], strides = [1, 1]} : vector<48x8xf32> to vector<24x8xf32>
    %584 = vector.extract_strided_slice %436 {offsets = [24, 0], sizes = [24, 8], strides = [1, 1]} : vector<48x8xf32> to vector<24x8xf32>
    %585 = vector.extract_strided_slice %443 {offsets = [24, 0], sizes = [24, 8], strides = [1, 1]} : vector<48x8xf32> to vector<24x8xf32>
    %cst_318 = arith.constant dense<0.000000e+00> : vector<24x24xf32>
    %586 = tpu.matmul %583, %584, %cst_318 {dimension_numbers = #tpu.dot_dimension_numbers<[1], [1], [0], [0], [0, 0, 1, 0], [], []>} : vector<24x8xf32>, vector<24x8xf32>, vector<24x24xf32> -> vector<24x24xf32>
    %587 = arith.addf %586, %37 : vector<24x24xf32>
    %cst_319 = arith.constant dense<0xFF800000> : vector<24xf32>
    %588 = vector.multi_reduction <maximumf>, %587, %cst_319 [1] : vector<24x24xf32> to vector<24xf32>
    %589 = vector.shape_cast %588 : vector<24xf32> to vector<24x1xf32>
    %590 = vector.broadcast %589 : vector<24x1xf32> to vector<24x24xf32>
    %591 = arith.subf %587, %590 : vector<24x24xf32>
    %592 = math.exp %591 : vector<24x24xf32>
    %cst_320 = arith.constant dense<0.000000e+00> : vector<24xf32>
    %593 = vector.multi_reduction <add>, %592, %cst_320 [1] : vector<24x24xf32> to vector<24xf32>
    %594 = vector.shape_cast %593 : vector<24xf32> to vector<24x1xf32>
    %595 = tpu.reciprocal %594 {approx = true} : vector<24x1xf32> -> vector<24x1xf32>
    %596 = vector.broadcast %595 : vector<24x1xf32> to vector<24x24xf32>
    %597 = arith.mulf %592, %596 : vector<24x24xf32>
    %cst_321 = arith.constant dense<0.000000e+00> : vector<24x8xf32>
    %598 = tpu.matmul %597, %585, %cst_321 {dimension_numbers = #tpu.dot_dimension_numbers<[1], [0], [0], [1], [0, 0, 1, 1], [], []>} : vector<24x24xf32>, vector<24x8xf32>, vector<24x8xf32> -> vector<24x8xf32>
    %c6_322 = arith.constant 6 : index
    %c0_323 = arith.constant 0 : index
    %c0_324 = arith.constant 0 : index
    %599 = vector.load %arg9[%c6_322, %c0_323, %c0_324] : memref<8x8x32xf32, #tpu.memory_space<vmem>>, vector<1x8x32xf32>
    %600 = vector.shape_cast %599 : vector<1x8x32xf32> to vector<8x32xf32>
    %cst_325 = arith.constant dense<0.000000e+00> : vector<24x32xf32>
    %601 = tpu.matmul %598, %600, %cst_325 {dimension_numbers = #tpu.dot_dimension_numbers<[1], [0], [0], [1], [0, 0, 1, 1], [], []>} : vector<24x8xf32>, vector<8x32xf32>, vector<24x32xf32> -> vector<24x32xf32>
    %602 = arith.addf %582, %601 : vector<24x32xf32>
    %603 = vector.extract_strided_slice %450 {offsets = [24, 0], sizes = [24, 8], strides = [1, 1]} : vector<48x8xf32> to vector<24x8xf32>
    %604 = vector.extract_strided_slice %457 {offsets = [24, 0], sizes = [24, 8], strides = [1, 1]} : vector<48x8xf32> to vector<24x8xf32>
    %605 = vector.extract_strided_slice %464 {offsets = [24, 0], sizes = [24, 8], strides = [1, 1]} : vector<48x8xf32> to vector<24x8xf32>
    %cst_326 = arith.constant dense<0.000000e+00> : vector<24x24xf32>
    %606 = tpu.matmul %603, %604, %cst_326 {dimension_numbers = #tpu.dot_dimension_numbers<[1], [1], [0], [0], [0, 0, 1, 0], [], []>} : vector<24x8xf32>, vector<24x8xf32>, vector<24x24xf32> -> vector<24x24xf32>
    %607 = arith.addf %606, %37 : vector<24x24xf32>
    %cst_327 = arith.constant dense<0xFF800000> : vector<24xf32>
    %608 = vector.multi_reduction <maximumf>, %607, %cst_327 [1] : vector<24x24xf32> to vector<24xf32>
    %609 = vector.shape_cast %608 : vector<24xf32> to vector<24x1xf32>
    %610 = vector.broadcast %609 : vector<24x1xf32> to vector<24x24xf32>
    %611 = arith.subf %607, %610 : vector<24x24xf32>
    %612 = math.exp %611 : vector<24x24xf32>
    %cst_328 = arith.constant dense<0.000000e+00> : vector<24xf32>
    %613 = vector.multi_reduction <add>, %612, %cst_328 [1] : vector<24x24xf32> to vector<24xf32>
    %614 = vector.shape_cast %613 : vector<24xf32> to vector<24x1xf32>
    %615 = tpu.reciprocal %614 {approx = true} : vector<24x1xf32> -> vector<24x1xf32>
    %616 = vector.broadcast %615 : vector<24x1xf32> to vector<24x24xf32>
    %617 = arith.mulf %612, %616 : vector<24x24xf32>
    %cst_329 = arith.constant dense<0.000000e+00> : vector<24x8xf32>
    %618 = tpu.matmul %617, %605, %cst_329 {dimension_numbers = #tpu.dot_dimension_numbers<[1], [0], [0], [1], [0, 0, 1, 1], [], []>} : vector<24x24xf32>, vector<24x8xf32>, vector<24x8xf32> -> vector<24x8xf32>
    %c7_330 = arith.constant 7 : index
    %c0_331 = arith.constant 0 : index
    %c0_332 = arith.constant 0 : index
    %619 = vector.load %arg9[%c7_330, %c0_331, %c0_332] : memref<8x8x32xf32, #tpu.memory_space<vmem>>, vector<1x8x32xf32>
    %620 = vector.shape_cast %619 : vector<1x8x32xf32> to vector<8x32xf32>
    %cst_333 = arith.constant dense<0.000000e+00> : vector<24x32xf32>
    %621 = tpu.matmul %618, %620, %cst_333 {dimension_numbers = #tpu.dot_dimension_numbers<[1], [0], [0], [1], [0, 0, 1, 1], [], []>} : vector<24x8xf32>, vector<8x32xf32>, vector<24x32xf32> -> vector<24x32xf32>
    %622 = arith.addf %602, %621 : vector<24x32xf32>
    %623 = tpu.concatenate %543, %622 in 0 : vector<24x32xf32>, vector<24x32xf32> -> vector<48x32xf32>
    %624 = arith.addf %356, %623 : vector<48x32xf32>
    %c1_334 = arith.constant 1 : index
    %c0_335 = arith.constant 0 : index
    %c0_336 = arith.constant 0 : index
    %625 = vector.load %arg10[%c1_334, %c0_335, %c0_336] : memref<2x1x32xf32, #tpu.memory_space<vmem>>, vector<1x1x32xf32>
    %626 = vector.shape_cast %625 : vector<1x1x32xf32> to vector<1x32xf32>
    %627 = vector.broadcast %626 : vector<1x32xf32> to vector<48x32xf32>
    %628 = arith.addf %624, %627 : vector<48x32xf32>
    %c1_337 = arith.constant 1 : index
    %c0_338 = arith.constant 0 : index
    %c0_339 = arith.constant 0 : index
    %629 = vector.load %arg11[%c1_337, %c0_338, %c0_339] : memref<2x2x32xf32, #tpu.memory_space<vmem>>, vector<1x2x32xf32>
    %630 = vector.shape_cast %629 : vector<1x2x32xf32> to vector<2x32xf32>
    %631 = vector.extract_strided_slice %630 {offsets = [0, 0], sizes = [1, 32], strides = [1, 1]} : vector<2x32xf32> to vector<1x32xf32>
    %632 = vector.extract_strided_slice %630 {offsets = [1, 0], sizes = [1, 32], strides = [1, 1]} : vector<2x32xf32> to vector<1x32xf32>
    %cst_340 = arith.constant dense<0.000000e+00> : vector<48xf32>
    %633 = vector.multi_reduction <add>, %628, %cst_340 [1] : vector<48x32xf32> to vector<48xf32>
    %634 = vector.shape_cast %633 : vector<48xf32> to vector<48x1xf32>
    %cst_341 = arith.constant 3.200000e+01 : f32
    %635 = vector.broadcast %cst_341 : f32 to vector<48x1xf32>
    %636 = arith.divf %634, %635 : vector<48x1xf32>
    %637 = vector.broadcast %636 : vector<48x1xf32> to vector<48x32xf32>
    %638 = arith.subf %628, %637 : vector<48x32xf32>
    %639 = arith.mulf %638, %638 : vector<48x32xf32>
    %cst_342 = arith.constant dense<0.000000e+00> : vector<48xf32>
    %640 = vector.multi_reduction <add>, %639, %cst_342 [1] : vector<48x32xf32> to vector<48xf32>
    %641 = vector.shape_cast %640 : vector<48xf32> to vector<48x1xf32>
    %cst_343 = arith.constant 3.200000e+01 : f32
    %642 = vector.broadcast %cst_343 : f32 to vector<48x1xf32>
    %643 = arith.divf %641, %642 : vector<48x1xf32>
    %cst_344 = arith.constant 9.99999974E-6 : f32
    %644 = vector.broadcast %cst_344 : f32 to vector<48x1xf32>
    %645 = arith.addf %643, %644 : vector<48x1xf32>
    %646 = math.rsqrt %645 : vector<48x1xf32>
    %647 = vector.broadcast %646 : vector<48x1xf32> to vector<48x32xf32>
    %648 = arith.mulf %638, %647 : vector<48x32xf32>
    %649 = vector.broadcast %631 : vector<1x32xf32> to vector<48x32xf32>
    %650 = arith.mulf %648, %649 : vector<48x32xf32>
    %651 = vector.broadcast %632 : vector<1x32xf32> to vector<48x32xf32>
    %652 = arith.addf %650, %651 : vector<48x32xf32>
    %c1_345 = arith.constant 1 : index
    %c0_346 = arith.constant 0 : index
    %c0_347 = arith.constant 0 : index
    %653 = vector.load %arg12[%c1_345, %c0_346, %c0_347] : memref<2x32x128xf32, #tpu.memory_space<vmem>>, vector<1x32x128xf32>
    %654 = vector.shape_cast %653 : vector<1x32x128xf32> to vector<32x128xf32>
    %cst_348 = arith.constant dense<0.000000e+00> : vector<48x128xf32>
    %655 = tpu.matmul %652, %654, %cst_348 {dimension_numbers = #tpu.dot_dimension_numbers<[1], [0], [0], [1], [0, 0, 1, 1], [], []>} : vector<48x32xf32>, vector<32x128xf32>, vector<48x128xf32> -> vector<48x128xf32>
    %c1_349 = arith.constant 1 : index
    %c0_350 = arith.constant 0 : index
    %c0_351 = arith.constant 0 : index
    %656 = vector.load %arg13[%c1_349, %c0_350, %c0_351] : memref<2x1x128xf32, #tpu.memory_space<vmem>>, vector<1x1x128xf32>
    %657 = vector.shape_cast %656 : vector<1x1x128xf32> to vector<1x128xf32>
    %658 = vector.broadcast %657 : vector<1x128xf32> to vector<48x128xf32>
    %659 = arith.addf %655, %658 : vector<48x128xf32>
    %cst_352 = arith.constant 1.702000e+00 : f32
    %660 = vector.broadcast %cst_352 : f32 to vector<48x128xf32>
    %661 = arith.mulf %660, %659 : vector<48x128xf32>
    %662 = arith.negf %661 : vector<48x128xf32>
    %663 = math.exp %662 : vector<48x128xf32>
    %cst_353 = arith.constant 1.000000e+00 : f32
    %664 = vector.broadcast %cst_353 : f32 to vector<48x128xf32>
    %665 = arith.addf %664, %663 : vector<48x128xf32>
    %666 = arith.divf %664, %665 : vector<48x128xf32>
    %667 = arith.mulf %659, %666 : vector<48x128xf32>
    %c1_354 = arith.constant 1 : index
    %c0_355 = arith.constant 0 : index
    %c0_356 = arith.constant 0 : index
    %668 = vector.load %arg14[%c1_354, %c0_355, %c0_356] : memref<2x128x32xf32, #tpu.memory_space<vmem>>, vector<1x128x32xf32>
    %669 = vector.shape_cast %668 : vector<1x128x32xf32> to vector<128x32xf32>
    %cst_357 = arith.constant dense<0.000000e+00> : vector<48x32xf32>
    %670 = tpu.matmul %667, %669, %cst_357 {dimension_numbers = #tpu.dot_dimension_numbers<[1], [0], [0], [1], [0, 0, 1, 1], [], []>} : vector<48x128xf32>, vector<128x32xf32>, vector<48x32xf32> -> vector<48x32xf32>
    %c1_358 = arith.constant 1 : index
    %c0_359 = arith.constant 0 : index
    %c0_360 = arith.constant 0 : index
    %671 = vector.load %arg15[%c1_358, %c0_359, %c0_360] : memref<2x1x32xf32, #tpu.memory_space<vmem>>, vector<1x1x32xf32>
    %672 = vector.shape_cast %671 : vector<1x1x32xf32> to vector<1x32xf32>
    %673 = vector.broadcast %672 : vector<1x32xf32> to vector<48x32xf32>
    %674 = arith.addf %670, %673 : vector<48x32xf32>
    %675 = arith.addf %628, %674 : vector<48x32xf32>
    %676 = vector.extract_strided_slice %675 {offsets = [16, 0], sizes = [1, 32], strides = [1, 1]} : vector<48x32xf32> to vector<1x32xf32>
    %677 = vector.extract_strided_slice %675 {offsets = [40, 0], sizes = [1, 32], strides = [1, 1]} : vector<48x32xf32> to vector<1x32xf32>
    %678 = tpu.concatenate %676, %677 in 0 : vector<1x32xf32>, vector<1x32xf32> -> vector<2x32xf32>
    %c0_361 = arith.constant 0 : index
    %c0_362 = arith.constant 0 : index
    %679 = vector.load %arg16[%c0_361, %c0_362] : memref<2x32xf32, #tpu.memory_space<vmem>>, vector<1x32xf32>
    %c1_363 = arith.constant 1 : index
    %c0_364 = arith.constant 0 : index
    %680 = vector.load %arg16[%c1_363, %c0_364] : memref<2x32xf32, #tpu.memory_space<vmem>>, vector<1x32xf32>
    %cst_365 = arith.constant dense<0.000000e+00> : vector<2xf32>
    %681 = vector.multi_reduction <add>, %678, %cst_365 [1] : vector<2x32xf32> to vector<2xf32>
    %682 = vector.shape_cast %681 : vector<2xf32> to vector<2x1xf32>
    %cst_366 = arith.constant 3.200000e+01 : f32
    %683 = vector.broadcast %cst_366 : f32 to vector<2x1xf32>
    %684 = arith.divf %682, %683 : vector<2x1xf32>
    %685 = vector.broadcast %684 : vector<2x1xf32> to vector<2x32xf32>
    %686 = arith.subf %678, %685 : vector<2x32xf32>
    %687 = arith.mulf %686, %686 : vector<2x32xf32>
    %cst_367 = arith.constant dense<0.000000e+00> : vector<2xf32>
    %688 = vector.multi_reduction <add>, %687, %cst_367 [1] : vector<2x32xf32> to vector<2xf32>
    %689 = vector.shape_cast %688 : vector<2xf32> to vector<2x1xf32>
    %cst_368 = arith.constant 3.200000e+01 : f32
    %690 = vector.broadcast %cst_368 : f32 to vector<2x1xf32>
    %691 = arith.divf %689, %690 : vector<2x1xf32>
    %cst_369 = arith.constant 9.99999974E-6 : f32
    %692 = vector.broadcast %cst_369 : f32 to vector<2x1xf32>
    %693 = arith.addf %691, %692 : vector<2x1xf32>
    %694 = math.rsqrt %693 : vector<2x1xf32>
    %695 = vector.broadcast %694 : vector<2x1xf32> to vector<2x32xf32>
    %696 = arith.mulf %686, %695 : vector<2x32xf32>
    %697 = vector.broadcast %679 : vector<1x32xf32> to vector<2x32xf32>
    %698 = arith.mulf %696, %697 : vector<2x32xf32>
    %699 = vector.broadcast %680 : vector<1x32xf32> to vector<2x32xf32>
    %700 = arith.addf %698, %699 : vector<2x32xf32>
    %c0_370 = arith.constant 0 : index
    %c0_371 = arith.constant 0 : index
    %701 = vector.load %arg17[%c0_370, %c0_371] : memref<32x16xf32, #tpu.memory_space<vmem>>, vector<32x16xf32>
    %cst_372 = arith.constant dense<0.000000e+00> : vector<2x16xf32>
    %702 = tpu.matmul %700, %701, %cst_372 {dimension_numbers = #tpu.dot_dimension_numbers<[1], [0], [0], [1], [0, 0, 1, 1], [], []>} : vector<2x32xf32>, vector<32x16xf32>, vector<2x16xf32> -> vector<2x16xf32>
    %c0_373 = arith.constant 0 : index
    %c0_374 = arith.constant 0 : index
    %703 = vector.load %arg18[%c0_373, %c0_374] : memref<2x16xf32, #tpu.memory_space<vmem>>, vector<2x16xf32>
    tpu.vector_store %arg18[%c0_373, %c0_374], %702 {strides = array<i32>} : memref<2x16xf32, #tpu.memory_space<vmem>>, vector<2x16xf32>,
    return
  }
  func.func @transform_0(%arg0: i32) -> (i32, i32) {
    %c0_i32 = arith.constant 0 : i32
    %c0_i32_0 = arith.constant 0 : i32
    return %arg0, %c0_i32 : i32, i32
  }
  func.func @transform_1(%arg0: i32) -> (i32, i32) {
    %c0_i32 = arith.constant 0 : i32
    %c0_i32_0 = arith.constant 0 : i32
    %c0_i32_1 = arith.constant 0 : i32
    return %c0_i32, %c0_i32_0 : i32, i32
  }
  func.func @transform_2(%arg0: i32) -> (i32, i32) {
    %c0_i32 = arith.constant 0 : i32
    %c0_i32_0 = arith.constant 0 : i32
    %c0_i32_1 = arith.constant 0 : i32
    return %c0_i32, %c0_i32_0 : i32, i32
  }
  func.func @transform_3(%arg0: i32) -> (i32, i32) {
    %c0_i32 = arith.constant 0 : i32
    %c0_i32_0 = arith.constant 0 : i32
    %c0_i32_1 = arith.constant 0 : i32
    return %c0_i32, %c0_i32_0 : i32, i32
  }
  func.func @transform_4(%arg0: i32) -> (i32, i32) {
    %c0_i32 = arith.constant 0 : i32
    %c0_i32_0 = arith.constant 0 : i32
    %c0_i32_1 = arith.constant 0 : i32
    return %c0_i32, %c0_i32_0 : i32, i32
  }
  func.func @transform_5(%arg0: i32) -> (i32, i32, i32) {
    %c0_i32 = arith.constant 0 : i32
    %c0_i32_0 = arith.constant 0 : i32
    %c0_i32_1 = arith.constant 0 : i32
    %c0_i32_2 = arith.constant 0 : i32
    return %c0_i32, %c0_i32_0, %c0_i32_1 : i32, i32, i32
  }
  func.func @transform_6(%arg0: i32) -> (i32, i32, i32) {
    %c0_i32 = arith.constant 0 : i32
    %c0_i32_0 = arith.constant 0 : i32
    %c0_i32_1 = arith.constant 0 : i32
    %c0_i32_2 = arith.constant 0 : i32
    return %c0_i32, %c0_i32_0, %c0_i32_1 : i32, i32, i32
  }
  func.func @transform_7(%arg0: i32) -> (i32, i32, i32) {
    %c0_i32 = arith.constant 0 : i32
    %c0_i32_0 = arith.constant 0 : i32
    %c0_i32_1 = arith.constant 0 : i32
    %c0_i32_2 = arith.constant 0 : i32
    return %c0_i32, %c0_i32_0, %c0_i32_1 : i32, i32, i32
  }
  func.func @transform_8(%arg0: i32) -> (i32, i32, i32) {
    %c0_i32 = arith.constant 0 : i32
    %c0_i32_0 = arith.constant 0 : i32
    %c0_i32_1 = arith.constant 0 : i32
    %c0_i32_2 = arith.constant 0 : i32
    return %c0_i32, %c0_i32_0, %c0_i32_1 : i32, i32, i32
  }
  func.func @transform_9(%arg0: i32) -> (i32, i32, i32) {
    %c0_i32 = arith.constant 0 : i32
    %c0_i32_0 = arith.constant 0 : i32
    %c0_i32_1 = arith.constant 0 : i32
    %c0_i32_2 = arith.constant 0 : i32
    return %c0_i32, %c0_i32_0, %c0_i32_1 : i32, i32, i32
  }
  func.func @transform_10(%arg0: i32) -> (i32, i32, i32) {
    %c0_i32 = arith.constant 0 : i32
    %c0_i32_0 = arith.constant 0 : i32
    %c0_i32_1 = arith.constant 0 : i32
    %c0_i32_2 = arith.constant 0 : i32
    return %c0_i32, %c0_i32_0, %c0_i32_1 : i32, i32, i32
  }
  func.func @transform_11(%arg0: i32) -> (i32, i32, i32) {
    %c0_i32 = arith.constant 0 : i32
    %c0_i32_0 = arith.constant 0 : i32
    %c0_i32_1 = arith.constant 0 : i32
    %c0_i32_2 = arith.constant 0 : i32
    return %c0_i32, %c0_i32_0, %c0_i32_1 : i32, i32, i32
  }
  func.func @transform_12(%arg0: i32) -> (i32, i32, i32) {
    %c0_i32 = arith.constant 0 : i32
    %c0_i32_0 = arith.constant 0 : i32
    %c0_i32_1 = arith.constant 0 : i32
    %c0_i32_2 = arith.constant 0 : i32
    return %c0_i32, %c0_i32_0, %c0_i32_1 : i32, i32, i32
  }
  func.func @transform_13(%arg0: i32) -> (i32, i32, i32) {
    %c0_i32 = arith.constant 0 : i32
    %c0_i32_0 = arith.constant 0 : i32
    %c0_i32_1 = arith.constant 0 : i32
    %c0_i32_2 = arith.constant 0 : i32
    return %c0_i32, %c0_i32_0, %c0_i32_1 : i32, i32, i32
  }
  func.func @transform_14(%arg0: i32) -> (i32, i32, i32) {
    %c0_i32 = arith.constant 0 : i32
    %c0_i32_0 = arith.constant 0 : i32
    %c0_i32_1 = arith.constant 0 : i32
    %c0_i32_2 = arith.constant 0 : i32
    return %c0_i32, %c0_i32_0, %c0_i32_1 : i32, i32, i32
  }
  func.func @transform_15(%arg0: i32) -> (i32, i32) {
    %c0_i32 = arith.constant 0 : i32
    %c0_i32_0 = arith.constant 0 : i32
    %c0_i32_1 = arith.constant 0 : i32
    return %c0_i32, %c0_i32_0 : i32, i32
  }
  func.func @transform_16(%arg0: i32) -> (i32, i32) {
    %c0_i32 = arith.constant 0 : i32
    %c0_i32_0 = arith.constant 0 : i32
    %c0_i32_1 = arith.constant 0 : i32
    return %c0_i32, %c0_i32_0 : i32, i32
  }
  func.func @transform_17(%arg0: i32) -> (i32, i32) {
    %c0_i32 = arith.constant 0 : i32
    %c0_i32_0 = arith.constant 0 : i32
    return %arg0, %c0_i32 : i32, i32
  }
}

</mosaic_0001>

<llo_original>
// kernel: clip_encode_img.1
$region0: #{clip_encode_img.1}
  #allocation0 [shape = 'u32[]', space=smem, size = 0x4, offset = 0x4, fixed_abs, tag = 'smem constant byte address 0x4 - core index']
  #allocation1 [shape = 'u32[72,128]{1,0:T(1,128)}', space=vmem, size = 0x9000, scoped, tag = 'internal scratch']
  %s0 = inlined_call_operand.vmem [shape: f32[32,48], index: 0, kind: input, shape index: {}]
  %s1 = inlined_call_operand.vmem [shape: f32[48,32], index: 1, kind: input, shape index: {}]
  %s2 = inlined_call_operand.vmem [shape: f32[16,32], index: 2, kind: input, shape index: {}]
  %s3 = inlined_call_operand.vmem [shape: f32[8,32], index: 3, kind: input, shape index: {}]
  %s4 = inlined_call_operand.vmem [shape: f32[2,32], index: 4, kind: input, shape index: {}]
  %s5 = inlined_call_operand.vmem [shape: f32[2,2,32], index: 5, kind: input, shape index: {}]
  %s6 = inlined_call_operand.vmem [shape: f32[24,32,8], index: 6, kind: input, shape index: {}]
  %s7 = inlined_call_operand.vmem [shape: f32[24,1,8], index: 7, kind: input, shape index: {}]
  %s8 = inlined_call_operand.vmem [shape: f32[8,8,32], index: 8, kind: input, shape index: {}]
  %s9 = inlined_call_operand.vmem [shape: f32[2,1,32], index: 9, kind: input, shape index: {}]
  %s10 = inlined_call_operand.vmem [shape: f32[2,2,32], index: 10, kind: input, shape index: {}]
  %s11 = inlined_call_operand.vmem [shape: f32[2,32,128], index: 11, kind: input, shape index: {}]
  %s12 = inlined_call_operand.vmem [shape: f32[2,1,128], index: 12, kind: input, shape index: {}]
  %s13 = inlined_call_operand.vmem [shape: f32[2,128,32], index: 13, kind: input, shape index: {}]
  %s14 = inlined_call_operand.vmem [shape: f32[2,1,32], index: 14, kind: input, shape index: {}]
  %s15 = inlined_call_operand.vmem [shape: f32[2,32], index: 15, kind: input, shape index: {}]
  %s16 = inlined_call_operand.vmem [shape: f32[32,16], index: 16, kind: input, shape index: {}]
  %s17 = inlined_call_operand.hbm [shape: f32[2,16], index: 17, kind: output, shape index: {}]
  %s18 = sld [smem:[#allocation0]]
  $region78: #{clip_encode_img.1} parent=0
    _
  %s20 = ssub.s32 1, %s18
  %s21 = scalar_select 0, %s20, %s18
  $region1: #{clip_encode_img.1} parent=0
    #allocation2 [shape = 'u8[1024]{0}', space=vmem, size = 0x400, scoped, tag = 'output window, operand 0, single buffered']
    #allocation3 [shape = 's32[1]{0}', space=sflag, size = 0x4, scoped, tag = 'scoped memory for clip_encode_img.1']
    %22 = vsyncpa [#allocation3], 0
    // Predicated region
    $region2: #{clip_encode_img.1} parent=1 // pred_check
      _
    $region3: #{clip_encode_img.1} parent=1 // pred_check_branch
      %24 = sbr.rel (0) target = $region5
    $region4: #{clip_encode_img.1} parent=1 // pred_region
      _
    $region5: #{clip_encode_img.1} parent=1 // pred_fallthru
      _
    // Predicated region
    $region6: #{clip_encode_img.1} parent=1 // pred_check
      _
    $region7: #{clip_encode_img.1} parent=1 // pred_check_branch
      %26 = sbr.rel (0) target = $region9
    $region8: #{clip_encode_img.1} parent=1 // pred_region
      _
    $region9: #{clip_encode_img.1} parent=1 // pred_fallthru
      _
    // Predicated region
    $region10: #{clip_encode_img.1} parent=1 // pred_check
      _
    $region11: #{clip_encode_img.1} parent=1 // pred_check_branch
      %28 = sbr.rel (0) target = $region13
    $region12: #{clip_encode_img.1} parent=1 // pred_region
      _
    $region13: #{clip_encode_img.1} parent=1 // pred_fallthru
      _
    // Predicated region
    $region14: #{clip_encode_img.1} parent=1 // pred_check
      _
    $region15: #{clip_encode_img.1} parent=1 // pred_check_branch
      %30 = sbr.rel (0) target = $region17
    $region16: #{clip_encode_img.1} parent=1 // pred_region
      _
    $region17: #{clip_encode_img.1} parent=1 // pred_fallthru
      _
    // Predicated region
    $region18: #{clip_encode_img.1} parent=1 // pred_check
      _
    $region19: #{clip_encode_img.1} parent=1 // pred_check_branch
      %32 = sbr.rel (0) target = $region21
    $region20: #{clip_encode_img.1} parent=1 // pred_region
      _
    $region21: #{clip_encode_img.1} parent=1 // pred_fallthru
      _
    // Predicated region
    $region22: #{clip_encode_img.1} parent=1 // pred_check
      _
    $region23: #{clip_encode_img.1} parent=1 // pred_check_branch
      %34 = sbr.rel (0) target = $region25
    $region24: #{clip_encode_img.1} parent=1 // pred_region
      _
    $region25: #{clip_encode_img.1} parent=1 // pred_fallthru
      _
    // Predicated region
    $region26: #{clip_encode_img.1} parent=1 // pred_check
      _
    $region27: #{clip_encode_img.1} parent=1 // pred_check_branch
      %36 = sbr.rel (0) target = $region29
    $region28: #{clip_encode_img.1} parent=1 // pred_region
      _
    $region29: #{clip_encode_img.1} parent=1 // pred_fallthru
      _
    // Predicated region
    $region30: #{clip_encode_img.1} parent=1 // pred_check
      _
    $region31: #{clip_encode_img.1} parent=1 // pred_check_branch
      %38 = sbr.rel (0) target = $region33
    $region32: #{clip_encode_img.1} parent=1 // pred_region
      _
    $region33: #{clip_encode_img.1} parent=1 // pred_fallthru
      _
    // Predicated region
    $region34: #{clip_encode_img.1} parent=1 // pred_check
      _
    $region35: #{clip_encode_img.1} parent=1 // pred_check_branch
      %40 = sbr.rel (0) target = $region37
    $region36: #{clip_encode_img.1} parent=1 // pred_region
      _
    $region37: #{clip_encode_img.1} parent=1 // pred_fallthru
      _
    // Predicated region
    $region38: #{clip_encode_img.1} parent=1 // pred_check
      _
    $region39: #{clip_encode_img.1} parent=1 // pred_check_branch
      %42 = sbr.rel (0) target = $region41
    $region40: #{clip_encode_img.1} parent=1 // pred_region
      _
    $region41: #{clip_encode_img.1} parent=1 // pred_fallthru
      _
    // Predicated region
    $region42: #{clip_encode_img.1} parent=1 // pred_check
      _
    $region43: #{clip_encode_img.1} parent=1 // pred_check_branch
      %44 = sbr.rel (0) target = $region45
    $region44: #{clip_encode_img.1} parent=1 // pred_region
      _
    $region45: #{clip_encode_img.1} parent=1 // pred_fallthru
      _
    // Predicated region
    $region46: #{clip_encode_img.1} parent=1 // pred_check
      _
    $region47: #{clip_encode_img.1} parent=1 // pred_check_branch
      %46 = sbr.rel (0) target = $region49
    $region48: #{clip_encode_img.1} parent=1 // pred_region
      _
    $region49: #{clip_encode_img.1} parent=1 // pred_fallthru
      _
    // Predicated region
    $region50: #{clip_encode_img.1} parent=1 // pred_check
      _
    $region51: #{clip_encode_img.1} parent=1 // pred_check_branch
      %48 = sbr.rel (0) target = $region53
    $region52: #{clip_encode_img.1} parent=1 // pred_region
      _
    $region53: #{clip_encode_img.1} parent=1 // pred_fallthru
      _
    // Predicated region
    $region54: #{clip_encode_img.1} parent=1 // pred_check
      _
    $region55: #{clip_encode_img.1} parent=1 // pred_check_branch
      %50 = sbr.rel (0) target = $region57
    $region56: #{clip_encode_img.1} parent=1 // pred_region
      _
    $region57: #{clip_encode_img.1} parent=1 // pred_fallthru
      _
    // Predicated region
    $region58: #{clip_encode_img.1} parent=1 // pred_check
      _
    $region59: #{clip_encode_img.1} parent=1 // pred_check_branch
      %52 = sbr.rel (0) target = $region61
    $region60: #{clip_encode_img.1} parent=1 // pred_region
      _
    $region61: #{clip_encode_img.1} parent=1 // pred_fallthru
      _
    // Predicated region
    $region62: #{clip_encode_img.1} parent=1 // pred_check
      _
    $region63: #{clip_encode_img.1} parent=1 // pred_check_branch
      %54 = sbr.rel (0) target = $region65
    $region64: #{clip_encode_img.1} parent=1 // pred_region
      _
    $region65: #{clip_encode_img.1} parent=1 // pred_fallthru
      _
    // Predicated region
    $region66: #{clip_encode_img.1} parent=1 // pred_check
      _
    $region67: #{clip_encode_img.1} parent=1 // pred_check_branch
      %56 = sbr.rel (0) target = $region69
    $region68: #{clip_encode_img.1} parent=1 // pred_region
      _
    $region69: #{clip_encode_img.1} parent=1 // pred_fallthru
      _
    %v57 = vld [vmem:[%s0] sm:$0xff]
    %v58 = vld [vmem:[%s0 + $0x8] sm:$0xff]
    %v59 = vld [vmem:[%s0 + $0x10] sm:$0xff]
    %v60 = vld [vmem:[%s0 + $0x18] sm:$0xff]
    %v61 = vld [vmem:[%s1] sm:$0xff]
    %v62 = vld [vmem:[%s1 + $0x8] sm:$0xff]
    %v63 = vld [vmem:[%s1 + $0x10] sm:$0xff]
    %v64 = vld [vmem:[%s1 + $0x18] sm:$0xff]
    %v65 = vld [vmem:[%s1 + $0x20] sm:$0xff]
    %v66 = vld [vmem:[%s1 + $0x28] sm:$0xff]
    %vm67 = vcmask 392192
    %v69 = vsel %vm67, %v57, 0
    %v72 = vsel %vm67, %v58, 0
    %v75 = vsel %vm67, %v59, 0
    %v78 = vsel %vm67, %v60, 0
    %80 = vmatpush.msra.mxu0 0.0
    %81 = vmatpush.msra.mxu0 0.0
    %82 = vmatpush.msra.mxu0 0.0
    %83 = vmatpush.msra.mxu0 0.0
    %84 = vmatpush.msra.mxu0 0.0
    %85 = vmatpush.msra.mxu0 0.0
    %86 = vmatpush.msra.mxu0 0.0
    %87 = vmatpush.msra.mxu0 0.0
    %88 = vmatpush.msra.mxu0 0.0
    %89 = vmatpush.msra.mxu0 0.0
    %90 = vmatpush.msra.mxu0 %v66
    %91 = vmatpush.msra.mxu0 %v65
    %92 = vmatpush.msra.mxu0 %v64
    %93 = vmatpush.msra.mxu0 %v63
    %94 = vmatpush.msra.mxu0 %v62
    %95 = vmatpush.msra.mxu0 %v61
    %96 = vmatmul.f32.gmra.mxu0 %v69
    %v97 = vpop.f32.mrf.mxu0
    %v98 = vadd.f32 0.0, %v97
    %99 = vmatmul.f32.gmra.mxu0 %v72
    %v100 = vpop.f32.mrf.mxu0
    %v101 = vadd.f32 0.0, %v100
    %102 = vmatmul.f32.gmra.mxu0 %v75
    %v103 = vpop.f32.mrf.mxu0
    %v104 = vadd.f32 0.0, %v103
    %105 = vmatmul.f32.gmra.mxu0 %v78
    %v106 = vpop.f32.mrf.mxu0
    %v107 = vadd.f32 0.0, %v106
    %108 = vdwg.mxu0
    %v109 = vld [vmem:[%s2] sm:$0xff]
    %v110 = vld [vmem:[%s2 + $0x8] sm:$0xff]
    %v111 = vld [vmem:[%s3] sm:$0xff]
    %v112 = vadd.f32 %v98, %v109
    %v113 = vadd.f32 %v101, %v110
    %v114 = vadd.f32 %v104, %v109
    %v115 = vadd.f32 %v107, %v110
    %v116 = vld [vmem:[%s4] sm:$0x1]
    %v117 = vld [vmem:[%s4 + $0x1] sm:$0x1]
    %vm118 = vcmask 261120
    %v119 = vsel %vm118, %v112, 0.0
    %120 = vadd.xlane.f32.xlu0 %v119
    %v121 = vpop.xlane.xlu0 %120
    %v122 = vsel %vm118, %v113, 0.0
    %123 = vadd.xlane.f32.xlu0 %v122
    %v124 = vpop.xlane.xlu0 %123
    %v125 = vsel %vm118, %v111, 0.0
    %126 = vadd.xlane.f32.xlu0 %v125
    %v127 = vpop.xlane.xlu0 %126
    %v128 = vsel %vm118, %v114, 0.0
    %129 = vadd.xlane.f32.xlu0 %v128
    %v130 = vpop.xlane.xlu0 %129
    %v131 = vsel %vm118, %v115, 0.0
    %132 = vadd.xlane.f32.xlu0 %v131
    %v133 = vpop.xlane.xlu0 %132
    %v134 = vrcp.pop 32.0
    %v135 = vmul.f32 32.0, %v134
    %v136 = vsub.f32 1.0, %v135
    %v137 = vmul.f32 %v134, %v136
    %v138 = vadd.f32 %v134, %v137
    %vm139 = vweird.f32 %v134
    %v140 = vsel %vm139, %v134, %v138
    %v141 = vmul.f32 %v121, %v140
    %v142 = vmul.f32 %v124, %v140
    %v143 = vmul.f32 %v127, %v140
    %v144 = vmul.f32 %v130, %v140
    %v145 = vmul.f32 %v133, %v140
    %v146 = vsub.f32 %v112, %v141
    %v147 = vsub.f32 %v113, %v142
    %v148 = vsub.f32 %v111, %v143
    %v149 = vsub.f32 %v114, %v144
    %v150 = vsub.f32 %v115, %v145
    %v151 = vmul.f32 %v146, %v146
    %v152 = vmul.f32 %v147, %v147
    %v153 = vmul.f32 %v148, %v148
    %v154 = vmul.f32 %v149, %v149
    %v155 = vmul.f32 %v150, %v150
    %v156 = vsel %vm118, %v151, 0.0
    %157 = vadd.xlane.f32.xlu0 %v156
    %v158 = vpop.xlane.xlu0 %157
    %v159 = vsel %vm118, %v152, 0.0
    %160 = vadd.xlane.f32.xlu0 %v159
    %v161 = vpop.xlane.xlu0 %160
    %v162 = vsel %vm118, %v153, 0.0
    %163 = vadd.xlane.f32.xlu0 %v162
    %v164 = vpop.xlane.xlu0 %163
    %v165 = vsel %vm118, %v154, 0.0
    %166 = vadd.xlane.f32.xlu0 %v165
    %v167 = vpop.xlane.xlu0 %166
    %v168 = vsel %vm118, %v155, 0.0
    %169 = vadd.xlane.f32.xlu0 %v168
    %v170 = vpop.xlane.xlu0 %169
    %v171 = vmul.f32 %v158, %v140
    %v172 = vmul.f32 %v161, %v140
    %v173 = vmul.f32 %v164, %v140
    %v174 = vmul.f32 %v167, %v140
    %v175 = vmul.f32 %v170, %v140
    %v176 = vadd.f32 %v171, 1e-05
    %v177 = vadd.f32 %v172, 1e-05
    %v178 = vadd.f32 %v173, 1e-05
    %v179 = vadd.f32 %v174, 1e-05
    %v180 = vadd.f32 %v175, 1e-05
    %v181 = vrsqrt.pop %v176
    %v182 = vmul.f32 %v181, %v176
    %v183 = vmul.f32 %v182, %v181
    %v184 = vmul.f32 0.5, %v183
    %v185 = vsub.f32 1.5, %v184
    %v186 = vmul.f32 %v181, %v185
    %vm187 = vweird.f32 %v176
    %vm188 = vweird.f32 %v181
    %vm189 = vmor %vm187, %vm188
    %v190 = vsel %vm189, %v181, %v186
    %v191 = vrsqrt.pop %v177
    %v192 = vmul.f32 %v191, %v177
    %v193 = vmul.f32 %v192, %v191
    %v194 = vmul.f32 0.5, %v193
    %v195 = vsub.f32 1.5, %v194
    %v196 = vmul.f32 %v191, %v195
    %vm197 = vweird.f32 %v177
    %vm198 = vweird.f32 %v191
    %vm199 = vmor %vm197, %vm198
    %v200 = vsel %vm199, %v191, %v196
    %v201 = vrsqrt.pop %v178
    %v202 = vmul.f32 %v201, %v178
    %v203 = vmul.f32 %v202, %v201
    %v204 = vmul.f32 0.5, %v203
    %v205 = vsub.f32 1.5, %v204
    %v206 = vmul.f32 %v201, %v205
    %vm207 = vweird.f32 %v178
    %vm208 = vweird.f32 %v201
    %vm209 = vmor %vm207, %vm208
    %v210 = vsel %vm209, %v201, %v206
    %v211 = vrsqrt.pop %v179
    %v212 = vmul.f32 %v211, %v179
    %v213 = vmul.f32 %v212, %v211
    %v214 = vmul.f32 0.5, %v213
    %v215 = vsub.f32 1.5, %v214
    %v216 = vmul.f32 %v211, %v215
    %vm217 = vweird.f32 %v179
    %vm218 = vweird.f32 %v211
    %vm219 = vmor %vm217, %vm218
    %v220 = vsel %vm219, %v211, %v216
    %v221 = vrsqrt.pop %v180
    %v222 = vmul.f32 %v221, %v180
    %v223 = vmul.f32 %v222, %v221
    %v224 = vmul.f32 0.5, %v223
    %v225 = vsub.f32 1.5, %v224
    %v226 = vmul.f32 %v221, %v225
    %vm227 = vweird.f32 %v180
    %vm228 = vweird.f32 %v221
    %vm229 = vmor %vm227, %vm228
    %v230 = vsel %vm229, %v221, %v226
    %v231 = vmul.f32 %v146, %v190
    %v232 = vmul.f32 %v147, %v200
    %v233 = vmul.f32 %v148, %v210
    %v234 = vmul.f32 %v149, %v220
    %v235 = vmul.f32 %v150, %v230
    %v236 = vperm.slane %v116, 0
    %v237 = vmul.f32 %v231, %v236
    %v238 = vmul.f32 %v232, %v236
    %v239 = vmul.f32 %v233, %v236
    %v240 = vmul.f32 %v234, %v236
    %v241 = vmul.f32 %v235, %v236
    %v242 = vperm.slane %v117, 0
    %v243 = vadd.f32 %v237, %v242
    %v244 = vadd.f32 %v238, %v242
    %v245 = vadd.f32 %v239, %v242
    %v246 = vadd.f32 %v240, %v242
    %v247 = vadd.f32 %v241, %v242
    %v248 = vlaneseq
    %v249 = vand.u32 %v248, 127
    %vm250 = vcmp.lt.s32.totalorder %v249, 17
    %v251 = vsel %vm250, 0.0, -1e+09
    %v252 = vld [vmem:[%s5] sm:$0x3]
    %v253 = vsel %vm118, %v243, 0.0
    %254 = vadd.xlane.f32.xlu0 %v253
    %v255 = vpop.xlane.xlu0 %254
    %v256 = vsel %vm118, %v244, 0.0
    %257 = vadd.xlane.f32.xlu0 %v256
    %v258 = vpop.xlane.xlu0 %257
    %v259 = vsel %vm118, %v245, 0.0
    %260 = vadd.xlane.f32.xlu0 %v259
    %v261 = vpop.xlane.xlu0 %260
    %v262 = vsel %vm118, %v246, 0.0
    %263 = vadd.xlane.f32.xlu0 %v262
    %v264 = vpop.xlane.xlu0 %263
    %v265 = vsel %vm118, %v247, 0.0
    %266 = vadd.xlane.f32.xlu0 %v265
    %v267 = vpop.xlane.xlu0 %266
    %v268 = vmul.f32 %v255, %v140
    %v269 = vmul.f32 %v258, %v140
    %v270 = vmul.f32 %v261, %v140
    %v271 = vmul.f32 %v264, %v140
    %v272 = vmul.f32 %v267, %v140
    %v273 = vsub.f32 %v243, %v268
    %v274 = vsub.f32 %v244, %v269
    %v275 = vsub.f32 %v245, %v270
    %v276 = vsub.f32 %v246, %v271
    %v277 = vsub.f32 %v247, %v272
    %v278 = vmul.f32 %v273, %v273
    %v279 = vmul.f32 %v274, %v274
    %v280 = vmul.f32 %v275, %v275
    %v281 = vmul.f32 %v276, %v276
    %v282 = vmul.f32 %v277, %v277
    %v283 = vsel %vm118, %v278, 0.0
    %284 = vadd.xlane.f32.xlu0 %v283
    %v285 = vpop.xlane.xlu0 %284
    %v286 = vsel %vm118, %v279, 0.0
    %287 = vadd.xlane.f32.xlu0 %v286
    %v288 = vpop.xlane.xlu0 %287
    %v289 = vsel %vm118, %v280, 0.0
    %290 = vadd.xlane.f32.xlu0 %v289
    %v291 = vpop.xlane.xlu0 %290
    %v292 = vsel %vm118, %v281, 0.0
    %293 = vadd.xlane.f32.xlu0 %v292
    %v294 = vpop.xlane.xlu0 %293
    %v295 = vsel %vm118, %v282, 0.0
    %296 = vadd.xlane.f32.xlu0 %v295
    %v297 = vpop.xlane.xlu0 %296
    %v298 = vmul.f32 %v285, %v140
    %v299 = vmul.f32 %v288, %v140
    %v300 = vmul.f32 %v291, %v140
    %v301 = vmul.f32 %v294, %v140
    %v302 = vmul.f32 %v297, %v140
    %v303 = vadd.f32 %v298, 1e-05
    %v304 = vadd.f32 %v299, 1e-05
    %v305 = vadd.f32 %v300, 1e-05
    %v306 = vadd.f32 %v301, 1e-05
    %v307 = vadd.f32 %v302, 1e-05
    %v308 = vrsqrt.pop %v303
    %v309 = vmul.f32 %v308, %v303
    %v310 = vmul.f32 %v309, %v308
    %v311 = vmul.f32 0.5, %v310
    %v312 = vsub.f32 1.5, %v311
    %v313 = vmul.f32 %v308, %v312
    %vm314 = vweird.f32 %v303
    %vm315 = vweird.f32 %v308
    %vm316 = vmor %vm314, %vm315
    %v317 = vsel %vm316, %v308, %v313
    %v318 = vrsqrt.pop %v304
    %v319 = vmul.f32 %v318, %v304
    %v320 = vmul.f32 %v319, %v318
    %v321 = vmul.f32 0.5, %v320
    %v322 = vsub.f32 1.5, %v321
    %v323 = vmul.f32 %v318, %v322
    %vm324 = vweird.f32 %v304
    %vm325 = vweird.f32 %v318
    %vm326 = vmor %vm324, %vm325
    %v327 = vsel %vm326, %v318, %v323
    %v328 = vrsqrt.pop %v305
    %v329 = vmul.f32 %v328, %v305
    %v330 = vmul.f32 %v329, %v328
    %v331 = vmul.f32 0.5, %v330
    %v332 = vsub.f32 1.5, %v331
    %v333 = vmul.f32 %v328, %v332
    %vm334 = vweird.f32 %v305
    %vm335 = vweird.f32 %v328
    %vm336 = vmor %vm334, %vm335
    %v337 = vsel %vm336, %v328, %v333
    %v338 = vrsqrt.pop %v306
    %v339 = vmul.f32 %v338, %v306
    %v340 = vmul.f32 %v339, %v338
    %v341 = vmul.f32 0.5, %v340
    %v342 = vsub.f32 1.5, %v341
    %v343 = vmul.f32 %v338, %v342
    %vm344 = vweird.f32 %v306
    %vm345 = vweird.f32 %v338
    %vm346 = vmor %vm344, %vm345
    %v347 = vsel %vm346, %v338, %v343
    %v348 = vrsqrt.pop %v307
    %v349 = vmul.f32 %v348, %v307
    %v350 = vmul.f32 %v349, %v348
    %v351 = vmul.f32 0.5, %v350
    %v352 = vsub.f32 1.5, %v351
    %v353 = vmul.f32 %v348, %v352
    %vm354 = vweird.f32 %v307
    %vm355 = vweird.f32 %v348
    %vm356 = vmor %vm354, %vm355
    %v357 = vsel %vm356, %v348, %v353
    %v358 = vmul.f32 %v273, %v317
    %v359 = vmul.f32 %v274, %v327
    %v360 = vmul.f32 %v275, %v337
    %v361 = vmul.f32 %v276, %v347
    %v362 = vmul.f32 %v277, %v357
    %v363 = vperm.slane %v252, 0
    %v364 = vmul.f32 %v358, %v363
    %v365 = vmul.f32 %v359, %v363
    %v366 = vmul.f32 %v360, %v363
    %v367 = vmul.f32 %v361, %v363
    %v368 = vmul.f32 %v362, %v363
    %v369 = vperm.slane %v252, 1
    %v370 = vadd.f32 %v364, %v369
    %v371 = vadd.f32 %v365, %v369
    %v372 = vadd.f32 %v366, %v369
    %v373 = vadd.f32 %v367, %v369
    %v374 = vadd.f32 %v368, %v369
    %v375 = vld [vmem:[%s6] sm:$0xff]
    %v376 = vld [vmem:[%s6 + $0x8] sm:$0xff]
    %v377 = vld [vmem:[%s6 + $0x10] sm:$0xff]
    %v378 = vld [vmem:[%s6 + $0x18] sm:$0xff]
    %v379 = vld [vmem:[%s7] sm:$0x1]
    %v381 = vperm.slane %v379, 0
    %v384 = vsel %vm118, %v370, 0
    %v387 = vsel %vm118, %v371, 0
    %v390 = vsel %vm118, %v372, 0
    %v393 = vsel %vm118, %v373, 0
    %v396 = vsel %vm118, %v374, 0
    %398 = vmatpush.msra.mxu0 0.0
    %399 = vmatpush.msra.mxu0 0.0
    %400 = vmatpush.msra.mxu0 0.0
    %401 = vmatpush.msra.mxu0 0.0
    %402 = vmatpush.msra.mxu0 0.0
    %403 = vmatpush.msra.mxu0 0.0
    %404 = vmatpush.msra.mxu0 0.0
    %405 = vmatpush.msra.mxu0 0.0
    %406 = vmatpush.msra.mxu0 0.0
    %407 = vmatpush.msra.mxu0 0.0
    %408 = vmatpush.msra.mxu0 0.0
    %409 = vmatpush.msra.mxu0 0.0
    %410 = vmatpush.msra.mxu0 %v378
    %411 = vmatpush.msra.mxu0 %v377
    %412 = vmatpush.msra.mxu0 %v376
    %413 = vmatpush.msra.mxu0 %v375
    %414 = vmatmul.f32.gmra.mxu0 %v384
    %v415 = vpop.f32.mrf.mxu0
    %v416 = vadd.f32 %v381, %v415
    %417 = vmatmul.f32.gmra.mxu0 %v387
    %v418 = vpop.f32.mrf.mxu0
    %v419 = vadd.f32 %v381, %v418
    %420 = vmatmul.f32.gmra.mxu0 %v390
    %v421 = vpop.f32.mrf.mxu0
    %v422 = vadd.f32 %v381, %v421
    %423 = vmatmul.f32.gmra.mxu0 %v393
    %v424 = vpop.f32.mrf.mxu0
    %v425 = vadd.f32 %v381, %v424
    %426 = vmatmul.f32.gmra.mxu0 %v396
    %v427 = vpop.f32.mrf.mxu0
    %v428 = vadd.f32 %v381, %v427
    %429 = vmatmul.f32.gmra.mxu0 %v390
    %v430 = vpop.f32.mrf.mxu0
    %v431 = vadd.f32 %v381, %v430
    %432 = vdwg.mxu0
    %s433 = scalar_lea.vmem %s6, 128
    %v434 = vld [vmem:[%s433] sm:$0xff]
    %v435 = vld [vmem:[%s433 + $0x8] sm:$0xff]
    %v436 = vld [vmem:[%s433 + $0x10] sm:$0xff]
    %v437 = vld [vmem:[%s433 + $0x18] sm:$0xff]
    %s438 = scalar_lea.vmem %s7, 4
    %v439 = vld [vmem:[%s438] sm:$0x1]
    %v441 = vperm.slane %v439, 0
    %443 = vmatpush.msra.mxu0 0.0
    %444 = vmatpush.msra.mxu0 0.0
    %445 = vmatpush.msra.mxu0 0.0
    %446 = vmatpush.msra.mxu0 0.0
    %447 = vmatpush.msra.mxu0 0.0
    %448 = vmatpush.msra.mxu0 0.0
    %449 = vmatpush.msra.mxu0 0.0
    %450 = vmatpush.msra.mxu0 0.0
    %451 = vmatpush.msra.mxu0 0.0
    %452 = vmatpush.msra.mxu0 0.0
    %453 = vmatpush.msra.mxu0 0.0
    %454 = vmatpush.msra.mxu0 0.0
    %455 = vmatpush.msra.mxu0 %v437
    %456 = vmatpush.msra.mxu0 %v436
    %457 = vmatpush.msra.mxu0 %v435
    %458 = vmatpush.msra.mxu0 %v434
    %459 = vmatmul.f32.gmra.mxu0 %v384
    %v460 = vpop.f32.mrf.mxu0
    %v461 = vadd.f32 %v441, %v460
    %462 = vmatmul.f32.gmra.mxu0 %v387
    %v463 = vpop.f32.mrf.mxu0
    %v464 = vadd.f32 %v441, %v463
    %465 = vmatmul.f32.gmra.mxu0 %v390
    %v466 = vpop.f32.mrf.mxu0
    %v467 = vadd.f32 %v441, %v466
    %468 = vmatmul.f32.gmra.mxu0 %v393
    %v469 = vpop.f32.mrf.mxu0
    %v470 = vadd.f32 %v441, %v469
    %471 = vmatmul.f32.gmra.mxu0 %v396
    %v472 = vpop.f32.mrf.mxu0
    %v473 = vadd.f32 %v441, %v472
    %474 = vmatmul.f32.gmra.mxu0 %v390
    %v475 = vpop.f32.mrf.mxu0
    %v476 = vadd.f32 %v441, %v475
    %477 = vdwg.mxu0
    %s478 = scalar_lea.vmem %s6, 256
    %v479 = vld [vmem:[%s478] sm:$0xff]
    %v480 = vld [vmem:[%s478 + $0x8] sm:$0xff]
    %v481 = vld [vmem:[%s478 + $0x10] sm:$0xff]
    %v482 = vld [vmem:[%s478 + $0x18] sm:$0xff]
    %s483 = scalar_lea.vmem %s7, 8
    %v484 = vld [vmem:[%s483] sm:$0x1]
    %v486 = vperm.slane %v484, 0
    %488 = vmatpush.msra.mxu0 0.0
    %489 = vmatpush.msra.mxu0 0.0
    %490 = vmatpush.msra.mxu0 0.0
    %491 = vmatpush.msra.mxu0 0.0
    %492 = vmatpush.msra.mxu0 0.0
    %493 = vmatpush.msra.mxu0 0.0
    %494 = vmatpush.msra.mxu0 0.0
    %495 = vmatpush.msra.mxu0 0.0
    %496 = vmatpush.msra.mxu0 0.0
    %497 = vmatpush.msra.mxu0 0.0
    %498 = vmatpush.msra.mxu0 0.0
    %499 = vmatpush.msra.mxu0 0.0
    %500 = vmatpush.msra.mxu0 %v482
    %501 = vmatpush.msra.mxu0 %v481
    %502 = vmatpush.msra.mxu0 %v480
    %503 = vmatpush.msra.mxu0 %v479
    %504 = vmatmul.f32.gmra.mxu0 %v384
    %v505 = vpop.f32.mrf.mxu0
    %v506 = vadd.f32 %v486, %v505
    %507 = vmatmul.f32.gmra.mxu0 %v387
    %v508 = vpop.f32.mrf.mxu0
    %v509 = vadd.f32 %v486, %v508
    %510 = vmatmul.f32.gmra.mxu0 %v390
    %v511 = vpop.f32.mrf.mxu0
    %v512 = vadd.f32 %v486, %v511
    %513 = vmatmul.f32.gmra.mxu0 %v393
    %v514 = vpop.f32.mrf.mxu0
    %v515 = vadd.f32 %v486, %v514
    %516 = vmatmul.f32.gmra.mxu0 %v396
    %v517 = vpop.f32.mrf.mxu0
    %v518 = vadd.f32 %v486, %v517
    %519 = vmatmul.f32.gmra.mxu0 %v390
    %v520 = vpop.f32.mrf.mxu0
    %v521 = vadd.f32 %v486, %v520
    %522 = vdwg.mxu0
    %s523 = scalar_lea.vmem %s6, 32
    %v524 = vld [vmem:[%s523] sm:$0xff]
    %v525 = vld [vmem:[%s523 + $0x8] sm:$0xff]
    %v526 = vld [vmem:[%s523 + $0x10] sm:$0xff]
    %v527 = vld [vmem:[%s523 + $0x18] sm:$0xff]
    %s528 = scalar_lea.vmem %s7, 1
    %v529 = vld [vmem:[%s528] sm:$0x1]
    %v531 = vperm.slane %v529, 0
    %533 = vmatpush.msra.mxu0 0.0
    %534 = vmatpush.msra.mxu0 0.0
    %535 = vmatpush.msra.mxu0 0.0
    %536 = vmatpush.msra.mxu0 0.0
    %537 = vmatpush.msra.mxu0 0.0
    %538 = vmatpush.msra.mxu0 0.0
    %539 = vmatpush.msra.mxu0 0.0
    %540 = vmatpush.msra.mxu0 0.0
    %541 = vmatpush.msra.mxu0 0.0
    %542 = vmatpush.msra.mxu0 0.0
    %543 = vmatpush.msra.mxu0 0.0
    %544 = vmatpush.msra.mxu0 0.0
    %545 = vmatpush.msra.mxu0 %v527
    %546 = vmatpush.msra.mxu0 %v526
    %547 = vmatpush.msra.mxu0 %v525
    %548 = vmatpush.msra.mxu0 %v524
    %549 = vmatmul.f32.gmra.mxu0 %v384
    %v550 = vpop.f32.mrf.mxu0
    %v551 = vadd.f32 %v531, %v550
    %552 = vmatmul.f32.gmra.mxu0 %v387
    %v553 = vpop.f32.mrf.mxu0
    %v554 = vadd.f32 %v531, %v553
    %555 = vmatmul.f32.gmra.mxu0 %v390
    %v556 = vpop.f32.mrf.mxu0
    %v557 = vadd.f32 %v531, %v556
    %558 = vmatmul.f32.gmra.mxu0 %v393
    %v559 = vpop.f32.mrf.mxu0
    %v560 = vadd.f32 %v531, %v559
    %561 = vmatmul.f32.gmra.mxu0 %v396
    %v562 = vpop.f32.mrf.mxu0
    %v563 = vadd.f32 %v531, %v562
    %564 = vmatmul.f32.gmra.mxu0 %v390
    %v565 = vpop.f32.mrf.mxu0
    %v566 = vadd.f32 %v531, %v565
    %567 = vdwg.mxu0
    %s568 = scalar_lea.vmem %s6, 160
    %v569 = vld [vmem:[%s568] sm:$0xff]
    %v570 = vld [vmem:[%s568 + $0x8] sm:$0xff]
    %v571 = vld [vmem:[%s568 + $0x10] sm:$0xff]
    %v572 = vld [vmem:[%s568 + $0x18] sm:$0xff]
    %s573 = scalar_lea.vmem %s7, 5
    %v574 = vld [vmem:[%s573] sm:$0x1]
    %v576 = vperm.slane %v574, 0
    %578 = vmatpush.msra.mxu0 0.0
    %579 = vmatpush.msra.mxu0 0.0
    %580 = vmatpush.msra.mxu0 0.0
    %581 = vmatpush.msra.mxu0 0.0
    %582 = vmatpush.msra.mxu0 0.0
    %583 = vmatpush.msra.mxu0 0.0
    %584 = vmatpush.msra.mxu0 0.0
    %585 = vmatpush.msra.mxu0 0.0
    %586 = vmatpush.msra.mxu0 0.0
    %587 = vmatpush.msra.mxu0 0.0
    %588 = vmatpush.msra.mxu0 0.0
    %589 = vmatpush.msra.mxu0 0.0
    %590 = vmatpush.msra.mxu0 %v572
    %591 = vmatpush.msra.mxu0 %v571
    %592 = vmatpush.msra.mxu0 %v570
    %593 = vmatpush.msra.mxu0 %v569
    %594 = vmatmul.f32.gmra.mxu0 %v384
    %v595 = vpop.f32.mrf.mxu0
    %v596 = vadd.f32 %v576, %v595
    %597 = vmatmul.f32.gmra.mxu0 %v387
    %v598 = vpop.f32.mrf.mxu0
    %v599 = vadd.f32 %v576, %v598
    %600 = vmatmul.f32.gmra.mxu0 %v390
    %v601 = vpop.f32.mrf.mxu0
    %v602 = vadd.f32 %v576, %v601
    %603 = vmatmul.f32.gmra.mxu0 %v393
    %v604 = vpop.f32.mrf.mxu0
    %v605 = vadd.f32 %v576, %v604
    %606 = vmatmul.f32.gmra.mxu0 %v396
    %v607 = vpop.f32.mrf.mxu0
    %v608 = vadd.f32 %v576, %v607
    %609 = vmatmul.f32.gmra.mxu0 %v390
    %v610 = vpop.f32.mrf.mxu0
    %v611 = vadd.f32 %v576, %v610
    %612 = vdwg.mxu0
    %s613 = scalar_lea.vmem %s6, 288
    %v614 = vld [vmem:[%s613] sm:$0xff]
    %v615 = vld [vmem:[%s613 + $0x8] sm:$0xff]
    %v616 = vld [vmem:[%s613 + $0x10] sm:$0xff]
    %v617 = vld [vmem:[%s613 + $0x18] sm:$0xff]
    %s618 = scalar_lea.vmem %s7, 9
    %v619 = vld [vmem:[%s618] sm:$0x1]
    %v621 = vperm.slane %v619, 0
    %623 = vmatpush.msra.mxu0 0.0
    %624 = vmatpush.msra.mxu0 0.0
    %625 = vmatpush.msra.mxu0 0.0
    %626 = vmatpush.msra.mxu0 0.0
    %627 = vmatpush.msra.mxu0 0.0
    %628 = vmatpush.msra.mxu0 0.0
    %629 = vmatpush.msra.mxu0 0.0
    %630 = vmatpush.msra.mxu0 0.0
    %631 = vmatpush.msra.mxu0 0.0
    %632 = vmatpush.msra.mxu0 0.0
    %633 = vmatpush.msra.mxu0 0.0
    %634 = vmatpush.msra.mxu0 0.0
    %635 = vmatpush.msra.mxu0 %v617
    %636 = vmatpush.msra.mxu0 %v616
    %637 = vmatpush.msra.mxu0 %v615
    %638 = vmatpush.msra.mxu0 %v614
    %639 = vmatmul.f32.gmra.mxu0 %v384
    %v640 = vpop.f32.mrf.mxu0
    %v641 = vadd.f32 %v621, %v640
    %642 = vmatmul.f32.gmra.mxu0 %v387
    %v643 = vpop.f32.mrf.mxu0
    %v644 = vadd.f32 %v621, %v643
    %645 = vmatmul.f32.gmra.mxu0 %v390
    %v646 = vpop.f32.mrf.mxu0
    %v647 = vadd.f32 %v621, %v646
    %648 = vmatmul.f32.gmra.mxu0 %v393
    %v649 = vpop.f32.mrf.mxu0
    %v650 = vadd.f32 %v621, %v649
    %651 = vmatmul.f32.gmra.mxu0 %v396
    %v652 = vpop.f32.mrf.mxu0
    %v653 = vadd.f32 %v621, %v652
    %654 = vmatmul.f32.gmra.mxu0 %v390
    %v655 = vpop.f32.mrf.mxu0
    %v656 = vadd.f32 %v621, %v655
    %657 = vdwg.mxu0
    %s658 = scalar_lea.vmem %s6, 64
    %v659 = vld [vmem:[%s658] sm:$0xff]
    %v660 = vld [vmem:[%s658 + $0x8] sm:$0xff]
    %v661 = vld [vmem:[%s658 + $0x10] sm:$0xff]
    %v662 = vld [vmem:[%s658 + $0x18] sm:$0xff]
    %s663 = scalar_lea.vmem %s7, 2
    %v664 = vld [vmem:[%s663] sm:$0x1]
    %v666 = vperm.slane %v664, 0
    %668 = vmatpush.msra.mxu0 0.0
    %669 = vmatpush.msra.mxu0 0.0
    %670 = vmatpush.msra.mxu0 0.0
    %671 = vmatpush.msra.mxu0 0.0
    %672 = vmatpush.msra.mxu0 0.0
    %673 = vmatpush.msra.mxu0 0.0
    %674 = vmatpush.msra.mxu0 0.0
    %675 = vmatpush.msra.mxu0 0.0
    %676 = vmatpush.msra.mxu0 0.0
    %677 = vmatpush.msra.mxu0 0.0
    %678 = vmatpush.msra.mxu0 0.0
    %679 = vmatpush.msra.mxu0 0.0
    %680 = vmatpush.msra.mxu0 %v662
    %681 = vmatpush.msra.mxu0 %v661
    %682 = vmatpush.msra.mxu0 %v660
    %683 = vmatpush.msra.mxu0 %v659
    %684 = vmatmul.f32.gmra.mxu0 %v384
    %v685 = vpop.f32.mrf.mxu0
    %v686 = vadd.f32 %v666, %v685
    %687 = vmatmul.f32.gmra.mxu0 %v387
    %v688 = vpop.f32.mrf.mxu0
    %v689 = vadd.f32 %v666, %v688
    %690 = vmatmul.f32.gmra.mxu0 %v390
    %v691 = vpop.f32.mrf.mxu0
    %v692 = vadd.f32 %v666, %v691
    %693 = vmatmul.f32.gmra.mxu0 %v393
    %v694 = vpop.f32.mrf.mxu0
    %v695 = vadd.f32 %v666, %v694
    %696 = vmatmul.f32.gmra.mxu0 %v396
    %v697 = vpop.f32.mrf.mxu0
    %v698 = vadd.f32 %v666, %v697
    %699 = vmatmul.f32.gmra.mxu0 %v390
    %v700 = vpop.f32.mrf.mxu0
    %v701 = vadd.f32 %v666, %v700
    %702 = vdwg.mxu0
    %s703 = scalar_lea.vmem %s6, 192
    %v704 = vld [vmem:[%s703] sm:$0xff]
    %v705 = vld [vmem:[%s703 + $0x8] sm:$0xff]
    %v706 = vld [vmem:[%s703 + $0x10] sm:$0xff]
    %v707 = vld [vmem:[%s703 + $0x18] sm:$0xff]
    %s708 = scalar_lea.vmem %s7, 6
    %v709 = vld [vmem:[%s708] sm:$0x1]
    %v711 = vperm.slane %v709, 0
    %713 = vmatpush.msra.mxu0 0.0
    %714 = vmatpush.msra.mxu0 0.0
    %715 = vmatpush.msra.mxu0 0.0
    %716 = vmatpush.msra.mxu0 0.0
    %717 = vmatpush.msra.mxu0 0.0
    %718 = vmatpush.msra.mxu0 0.0
    %719 = vmatpush.msra.mxu0 0.0
    %720 = vmatpush.msra.mxu0 0.0
    %721 = vmatpush.msra.mxu0 0.0
    %722 = vmatpush.msra.mxu0 0.0
    %723 = vmatpush.msra.mxu0 0.0
    %724 = vmatpush.msra.mxu0 0.0
    %725 = vmatpush.msra.mxu0 %v707
    %726 = vmatpush.msra.mxu0 %v706
    %727 = vmatpush.msra.mxu0 %v705
    %728 = vmatpush.msra.mxu0 %v704
    %729 = vmatmul.f32.gmra.mxu0 %v384
    %v730 = vpop.f32.mrf.mxu0
    %v731 = vadd.f32 %v711, %v730
    %732 = vmatmul.f32.gmra.mxu0 %v387
    %v733 = vpop.f32.mrf.mxu0
    %v734 = vadd.f32 %v711, %v733
    %735 = vmatmul.f32.gmra.mxu0 %v390
    %v736 = vpop.f32.mrf.mxu0
    %v737 = vadd.f32 %v711, %v736
    %738 = vmatmul.f32.gmra.mxu0 %v393
    %v739 = vpop.f32.mrf.mxu0
    %v740 = vadd.f32 %v711, %v739
    %741 = vmatmul.f32.gmra.mxu0 %v396
    %v742 = vpop.f32.mrf.mxu0
    %v743 = vadd.f32 %v711, %v742
    %744 = vmatmul.f32.gmra.mxu0 %v390
    %v745 = vpop.f32.mrf.mxu0
    %v746 = vadd.f32 %v711, %v745
    %747 = vdwg.mxu0
    %s748 = scalar_lea.vmem %s6, 320
    %v749 = vld [vmem:[%s748] sm:$0xff]
    %v750 = vld [vmem:[%s748 + $0x8] sm:$0xff]
    %v751 = vld [vmem:[%s748 + $0x10] sm:$0xff]
    %v752 = vld [vmem:[%s748 + $0x18] sm:$0xff]
    %s753 = scalar_lea.vmem %s7, 10
    %v754 = vld [vmem:[%s753] sm:$0x1]
    %v756 = vperm.slane %v754, 0
    %758 = vmatpush.msra.mxu0 0.0
    %759 = vmatpush.msra.mxu0 0.0
    %760 = vmatpush.msra.mxu0 0.0
    %761 = vmatpush.msra.mxu0 0.0
    %762 = vmatpush.msra.mxu0 0.0
    %763 = vmatpush.msra.mxu0 0.0
    %764 = vmatpush.msra.mxu0 0.0
    %765 = vmatpush.msra.mxu0 0.0
    %766 = vmatpush.msra.mxu0 0.0
    %767 = vmatpush.msra.mxu0 0.0
    %768 = vmatpush.msra.mxu0 0.0
    %769 = vmatpush.msra.mxu0 0.0
    %770 = vmatpush.msra.mxu0 %v752
    %771 = vmatpush.msra.mxu0 %v751
    %772 = vmatpush.msra.mxu0 %v750
    %773 = vmatpush.msra.mxu0 %v749
    %774 = vmatmul.f32.gmra.mxu0 %v384
    %v775 = vpop.f32.mrf.mxu0
    %v776 = vadd.f32 %v756, %v775
    %777 = vmatmul.f32.gmra.mxu0 %v387
    %v778 = vpop.f32.mrf.mxu0
    %v779 = vadd.f32 %v756, %v778
    %780 = vmatmul.f32.gmra.mxu0 %v390
    %v781 = vpop.f32.mrf.mxu0
    %v782 = vadd.f32 %v756, %v781
    %783 = vmatmul.f32.gmra.mxu0 %v393
    %v784 = vpop.f32.mrf.mxu0
    %v785 = vadd.f32 %v756, %v784
    %786 = vmatmul.f32.gmra.mxu0 %v396
    %v787 = vpop.f32.mrf.mxu0
    %v788 = vadd.f32 %v756, %v787
    %789 = vmatmul.f32.gmra.mxu0 %v390
    %v790 = vpop.f32.mrf.mxu0
    %v791 = vadd.f32 %v756, %v790
    %792 = vdwg.mxu0
    %s793 = scalar_lea.vmem %s6, 96
    %v794 = vld [vmem:[%s793] sm:$0xff]
    %v795 = vld [vmem:[%s793 + $0x8] sm:$0xff]
    %v796 = vld [vmem:[%s793 + $0x10] sm:$0xff]
    %v797 = vld [vmem:[%s793 + $0x18] sm:$0xff]
    %s798 = scalar_lea.vmem %s7, 3
    %v799 = vld [vmem:[%s798] sm:$0x1]
    %v801 = vperm.slane %v799, 0
    %803 = vmatpush.msra.mxu0 0.0
    %804 = vmatpush.msra.mxu0 0.0
    %805 = vmatpush.msra.mxu0 0.0
    %806 = vmatpush.msra.mxu0 0.0
    %807 = vmatpush.msra.mxu0 0.0
    %808 = vmatpush.msra.mxu0 0.0
    %809 = vmatpush.msra.mxu0 0.0
    %810 = vmatpush.msra.mxu0 0.0
    %811 = vmatpush.msra.mxu0 0.0
    %812 = vmatpush.msra.mxu0 0.0
    %813 = vmatpush.msra.mxu0 0.0
    %814 = vmatpush.msra.mxu0 0.0
    %815 = vmatpush.msra.mxu0 %v797
    %816 = vmatpush.msra.mxu0 %v796
    %817 = vmatpush.msra.mxu0 %v795
    %818 = vmatpush.msra.mxu0 %v794
    %819 = vmatmul.f32.gmra.mxu0 %v384
    %v820 = vpop.f32.mrf.mxu0
    %v821 = vadd.f32 %v801, %v820
    %822 = vmatmul.f32.gmra.mxu0 %v387
    %v823 = vpop.f32.mrf.mxu0
    %v824 = vadd.f32 %v801, %v823
    %825 = vmatmul.f32.gmra.mxu0 %v390
    %v826 = vpop.f32.mrf.mxu0
    %v827 = vadd.f32 %v801, %v826
    %828 = vmatmul.f32.gmra.mxu0 %v393
    %v829 = vpop.f32.mrf.mxu0
    %v830 = vadd.f32 %v801, %v829
    %831 = vmatmul.f32.gmra.mxu0 %v396
    %v832 = vpop.f32.mrf.mxu0
    %v833 = vadd.f32 %v801, %v832
    %834 = vmatmul.f32.gmra.mxu0 %v390
    %v835 = vpop.f32.mrf.mxu0
    %v836 = vadd.f32 %v801, %v835
    %837 = vdwg.mxu0
    %s838 = scalar_lea.vmem %s6, 224
    %v839 = vld [vmem:[%s838] sm:$0xff]
    %v840 = vld [vmem:[%s838 + $0x8] sm:$0xff]
    %v841 = vld [vmem:[%s838 + $0x10] sm:$0xff]
    %v842 = vld [vmem:[%s838 + $0x18] sm:$0xff]
    %s843 = scalar_lea.vmem %s7, 7
    %v844 = vld [vmem:[%s843] sm:$0x1]
    %v846 = vperm.slane %v844, 0
    %848 = vmatpush.msra.mxu0 0.0
    %849 = vmatpush.msra.mxu0 0.0
    %850 = vmatpush.msra.mxu0 0.0
    %851 = vmatpush.msra.mxu0 0.0
    %852 = vmatpush.msra.mxu0 0.0
    %853 = vmatpush.msra.mxu0 0.0
    %854 = vmatpush.msra.mxu0 0.0
    %855 = vmatpush.msra.mxu0 0.0
    %856 = vmatpush.msra.mxu0 0.0
    %857 = vmatpush.msra.mxu0 0.0
    %858 = vmatpush.msra.mxu0 0.0
    %859 = vmatpush.msra.mxu0 0.0
    %860 = vmatpush.msra.mxu0 %v842
    %861 = vmatpush.msra.mxu0 %v841
    %862 = vmatpush.msra.mxu0 %v840
    %863 = vmatpush.msra.mxu0 %v839
    %864 = vmatmul.f32.gmra.mxu0 %v384
    %v865 = vpop.f32.mrf.mxu0
    %v866 = vadd.f32 %v846, %v865
    %867 = vmatmul.f32.gmra.mxu0 %v387
    %v868 = vpop.f32.mrf.mxu0
    %v869 = vadd.f32 %v846, %v868
    %870 = vmatmul.f32.gmra.mxu0 %v390
    %v871 = vpop.f32.mrf.mxu0
    %v872 = vadd.f32 %v846, %v871
    %873 = vmatmul.f32.gmra.mxu0 %v393
    %v874 = vpop.f32.mrf.mxu0
    %v875 = vadd.f32 %v846, %v874
    %876 = vmatmul.f32.gmra.mxu0 %v396
    %v877 = vpop.f32.mrf.mxu0
    %v878 = vadd.f32 %v846, %v877
    %879 = vmatmul.f32.gmra.mxu0 %v390
    %v880 = vpop.f32.mrf.mxu0
    %v881 = vadd.f32 %v846, %v880
    %882 = vdwg.mxu0
    %s883 = scalar_lea.vmem %s6, 352
    %v884 = vld [vmem:[%s883] sm:$0xff]
    %v885 = vld [vmem:[%s883 + $0x8] sm:$0xff]
    %v886 = vld [vmem:[%s883 + $0x10] sm:$0xff]
    %v887 = vld [vmem:[%s883 + $0x18] sm:$0xff]
    %s888 = scalar_lea.vmem %s7, 11
    %v889 = vld [vmem:[%s888] sm:$0x1]
    %v891 = vperm.slane %v889, 0
    %893 = vmatpush.msra.mxu0 0.0
    %894 = vmatpush.msra.mxu0 0.0
    %895 = vmatpush.msra.mxu0 0.0
    %896 = vmatpush.msra.mxu0 0.0
    %897 = vmatpush.msra.mxu0 0.0
    %898 = vmatpush.msra.mxu0 0.0
    %899 = vmatpush.msra.mxu0 0.0
    %900 = vmatpush.msra.mxu0 0.0
    %901 = vmatpush.msra.mxu0 0.0
    %902 = vmatpush.msra.mxu0 0.0
    %903 = vmatpush.msra.mxu0 0.0
    %904 = vmatpush.msra.mxu0 0.0
    %905 = vmatpush.msra.mxu0 %v887
    %906 = vmatpush.msra.mxu0 %v886
    %907 = vmatpush.msra.mxu0 %v885
    %908 = vmatpush.msra.mxu0 %v884
    %909 = vmatmul.f32.gmra.mxu0 %v384
    %v910 = vpop.f32.mrf.mxu0
    %v911 = vadd.f32 %v891, %v910
    %912 = vmatmul.f32.gmra.mxu0 %v387
    %v913 = vpop.f32.mrf.mxu0
    %v914 = vadd.f32 %v891, %v913
    %915 = vmatmul.f32.gmra.mxu0 %v390
    %v916 = vpop.f32.mrf.mxu0
    %v917 = vadd.f32 %v891, %v916
    %918 = vmatmul.f32.gmra.mxu0 %v393
    %v919 = vpop.f32.mrf.mxu0
    %v920 = vadd.f32 %v891, %v919
    %921 = vmatmul.f32.gmra.mxu0 %v396
    %v922 = vpop.f32.mrf.mxu0
    %v923 = vadd.f32 %v891, %v922
    %924 = vmatmul.f32.gmra.mxu0 %v390
    %v925 = vpop.f32.mrf.mxu0
    %v926 = vadd.f32 %v891, %v925
    %927 = vdwg.mxu0
    %vm928 = vcmask 64512
    %v930 = vsel %vm928, %v416, 0
    %v933 = vsel %vm928, %v419, 0
    %v936 = vsel %vm928, %v422, 0
    %v939 = vsel %vm928, %v461, 0
    %v942 = vsel %vm928, %v464, 0
    %v945 = vsel %vm928, %v467, 0
    %947 = vmatpush.xpose.msra.mxu0 0.0
    %948 = vmatpush.xpose.msra.mxu0 0.0
    %949 = vmatpush.xpose.msra.mxu0 0.0
    %950 = vmatpush.xpose.msra.mxu0 0.0
    %951 = vmatpush.xpose.msra.mxu0 0.0
    %952 = vmatpush.xpose.msra.mxu0 0.0
    %953 = vmatpush.xpose.msra.mxu0 0.0
    %954 = vmatpush.xpose.msra.mxu0 0.0
    %955 = vmatpush.xpose.msra.mxu0 0.0
    %956 = vmatpush.xpose.msra.mxu0 0.0
    %957 = vmatpush.xpose.msra.mxu0 0.0
    %958 = vmatpush.xpose.msra.mxu0 0.0
    %959 = vmatpush.xpose.msra.mxu0 0.0
    %960 = vmatpush.xpose.msra.mxu0 %v945
    %961 = vmatpush.xpose.msra.mxu0 %v942
    %962 = vmatpush.xpose.msra.mxu0 %v939
    %963 = vmatmul.f32.gmra.mxu0 %v930
    %v964 = vpop.f32.mrf.mxu0
    %v965 = vadd.f32 %v251, %v964
    %966 = vmatmul.f32.gmra.mxu0 %v933
    %v967 = vpop.f32.mrf.mxu0
    %v968 = vadd.f32 %v251, %v967
    %969 = vmatmul.f32.gmra.mxu0 %v936
    %v970 = vpop.f32.mrf.mxu0
    %v971 = vadd.f32 %v251, %v970
    %972 = vdwg.mxu0
    %vm973 = vcmask 195584
    %v974 = vsel %vm973, %v965, -inf
    %975 = vmax.xlane.f32.xlu0 %v974
    %v976 = vpop.xlane.xlu0 %975
    %v977 = vsel %vm973, %v968, -inf
    %978 = vmax.xlane.f32.xlu0 %v977
    %v979 = vpop.xlane.xlu0 %978
    %v980 = vsel %vm973, %v971, -inf
    %981 = vmax.xlane.f32.xlu0 %v980
    %v982 = vpop.xlane.xlu0 %981
    %v983 = vsub.f32 %v965, %v976
    %v984 = vsub.f32 %v968, %v979
    %v985 = vsub.f32 %v971, %v982
    %v986 = vmul.f32 %v983, 1.442695
    %v987 = vpow.pop %v986
    %v988 = vmul.f32 %v984, 1.442695
    %v989 = vpow.pop %v988
    %v990 = vmul.f32 %v985, 1.442695
    %v991 = vpow.pop %v990
    %v992 = vsel %vm973, %v987, 0.0
    %993 = vadd.xlane.f32.xlu0 %v992
    %v994 = vpop.xlane.xlu0 %993
    %v995 = vsel %vm973, %v989, 0.0
    %996 = vadd.xlane.f32.xlu0 %v995
    %v997 = vpop.xlane.xlu0 %996
    %v998 = vsel %vm973, %v991, 0.0
    %999 = vadd.xlane.f32.xlu0 %v998
    %v1000 = vpop.xlane.xlu0 %999
    %v1001 = vrcp.pop %v994
    %v1002 = vrcp.pop %v997
    %v1003 = vrcp.pop %v1000
    %v1004 = vmul.f32 %v987, %v1001
    %v1005 = vmul.f32 %v989, %v1002
    %v1006 = vmul.f32 %v991, %v1003
    %v1008 = vsel %vm973, %v1004, 0
    %v1011 = vsel %vm973, %v1005, 0
    %v1014 = vsel %vm973, %v1006, 0
    %1016 = vmatpush.msra.mxu0 0.0
    %1017 = vmatpush.msra.mxu0 0.0
    %1018 = vmatpush.msra.mxu0 0.0
    %1019 = vmatpush.msra.mxu0 0.0
    %1020 = vmatpush.msra.mxu0 0.0
    %1021 = vmatpush.msra.mxu0 0.0
    %1022 = vmatpush.msra.mxu0 0.0
    %1023 = vmatpush.msra.mxu0 0.0
    %1024 = vmatpush.msra.mxu0 0.0
    %1025 = vmatpush.msra.mxu0 0.0
    %1026 = vmatpush.msra.mxu0 0.0
    %1027 = vmatpush.msra.mxu0 0.0
    %1028 = vmatpush.msra.mxu0 0.0
    %1029 = vmatpush.msra.mxu0 %v512
    %1030 = vmatpush.msra.mxu0 %v509
    %1031 = vmatpush.msra.mxu0 %v506
    %1032 = vmatmul.f32.gmra.mxu0 %v1008
    %v1033 = vpop.f32.mrf.mxu0
    %v1034 = vadd.f32 0.0, %v1033
    %1035 = vmatmul.f32.gmra.mxu0 %v1011
    %v1036 = vpop.f32.mrf.mxu0
    %v1037 = vadd.f32 0.0, %v1036
    %1038 = vmatmul.f32.gmra.mxu0 %v1014
    %v1039 = vpop.f32.mrf.mxu0
    %v1040 = vadd.f32 0.0, %v1039
    %1041 = vdwg.mxu0
    %v1042 = vld [vmem:[%s8] sm:$0xff]
    %v1044 = vsel %vm928, %v551, 0
    %v1047 = vsel %vm928, %v554, 0
    %v1050 = vsel %vm928, %v557, 0
    %v1053 = vsel %vm928, %v596, 0
    %v1056 = vsel %vm928, %v599, 0
    %v1059 = vsel %vm928, %v602, 0
    %1061 = vmatpush.xpose.msra.mxu0 0.0
    %1062 = vmatpush.xpose.msra.mxu0 0.0
    %1063 = vmatpush.xpose.msra.mxu0 0.0
    %1064 = vmatpush.xpose.msra.mxu0 0.0
    %1065 = vmatpush.xpose.msra.mxu0 0.0
    %1066 = vmatpush.xpose.msra.mxu0 0.0
    %1067 = vmatpush.xpose.msra.mxu0 0.0
    %1068 = vmatpush.xpose.msra.mxu0 0.0
    %1069 = vmatpush.xpose.msra.mxu0 0.0
    %1070 = vmatpush.xpose.msra.mxu0 0.0
    %1071 = vmatpush.xpose.msra.mxu0 0.0
    %1072 = vmatpush.xpose.msra.mxu0 0.0
    %1073 = vmatpush.xpose.msra.mxu0 0.0
    %1074 = vmatpush.xpose.msra.mxu0 %v1059
    %1075 = vmatpush.xpose.msra.mxu0 %v1056
    %1076 = vmatpush.xpose.msra.mxu0 %v1053
    %1077 = vmatmul.f32.gmra.mxu0 %v1044
    %v1078 = vpop.f32.mrf.mxu0
    %v1079 = vadd.f32 %v251, %v1078
    %1080 = vmatmul.f32.gmra.mxu0 %v1047
    %v1081 = vpop.f32.mrf.mxu0
    %v1082 = vadd.f32 %v251, %v1081
    %1083 = vmatmul.f32.gmra.mxu0 %v1050
    %v1084 = vpop.f32.mrf.mxu0
    %v1085 = vadd.f32 %v251, %v1084
    %1086 = vdwg.mxu0
    %v1087 = vsel %vm973, %v1079, -inf
    %1088 = vmax.xlane.f32.xlu0 %v1087
    %v1089 = vpop.xlane.xlu0 %1088
    %v1090 = vsel %vm973, %v1082, -inf
    %1091 = vmax.xlane.f32.xlu0 %v1090
    %v1092 = vpop.xlane.xlu0 %1091
    %v1093 = vsel %vm973, %v1085, -inf
    %1094 = vmax.xlane.f32.xlu0 %v1093
    %v1095 = vpop.xlane.xlu0 %1094
    %v1096 = vsub.f32 %v1079, %v1089
    %v1097 = vsub.f32 %v1082, %v1092
    %v1098 = vsub.f32 %v1085, %v1095
    %v1099 = vmul.f32 %v1096, 1.442695
    %v1100 = vpow.pop %v1099
    %v1101 = vmul.f32 %v1097, 1.442695
    %v1102 = vpow.pop %v1101
    %v1103 = vmul.f32 %v1098, 1.442695
    %v1104 = vpow.pop %v1103
    %v1105 = vsel %vm973, %v1100, 0.0
    %1106 = vadd.xlane.f32.xlu0 %v1105
    %v1107 = vpop.xlane.xlu0 %1106
    %v1108 = vsel %vm973, %v1102, 0.0
    %1109 = vadd.xlane.f32.xlu0 %v1108
    %v1110 = vpop.xlane.xlu0 %1109
    %v1111 = vsel %vm973, %v1104, 0.0
    %1112 = vadd.xlane.f32.xlu0 %v1111
    %v1113 = vpop.xlane.xlu0 %1112
    %v1114 = vrcp.pop %v1107
    %v1115 = vrcp.pop %v1110
    %v1116 = vrcp.pop %v1113
    %v1117 = vmul.f32 %v1100, %v1114
    %v1118 = vmul.f32 %v1102, %v1115
    %v1119 = vmul.f32 %v1104, %v1116
    %v1121 = vsel %vm973, %v1117, 0
    %v1124 = vsel %vm973, %v1118, 0
    %v1127 = vsel %vm973, %v1119, 0
    %1129 = vmatpush.msra.mxu0 0.0
    %1130 = vmatpush.msra.mxu0 0.0
    %1131 = vmatpush.msra.mxu0 0.0
    %1132 = vmatpush.msra.mxu0 0.0
    %1133 = vmatpush.msra.mxu0 0.0
    %1134 = vmatpush.msra.mxu0 0.0
    %1135 = vmatpush.msra.mxu0 0.0
    %1136 = vmatpush.msra.mxu0 0.0
    %1137 = vmatpush.msra.mxu0 0.0
    %1138 = vmatpush.msra.mxu0 0.0
    %1139 = vmatpush.msra.mxu0 0.0
    %1140 = vmatpush.msra.mxu0 0.0
    %1141 = vmatpush.msra.mxu0 0.0
    %1142 = vmatpush.msra.mxu0 %v647
    %1143 = vmatpush.msra.mxu0 %v644
    %1144 = vmatpush.msra.mxu0 %v641
    %1145 = vmatmul.f32.gmra.mxu0 %v1121
    %v1146 = vpop.f32.mrf.mxu0
    %v1147 = vadd.f32 0.0, %v1146
    %1148 = vmatmul.f32.gmra.mxu0 %v1124
    %v1149 = vpop.f32.mrf.mxu0
    %v1150 = vadd.f32 0.0, %v1149
    %1151 = vmatmul.f32.gmra.mxu0 %v1127
    %v1152 = vpop.f32.mrf.mxu0
    %v1153 = vadd.f32 0.0, %v1152
    %1154 = vdwg.mxu0
    %s1155 = scalar_lea.vmem %s8, 8
    %v1156 = vld [vmem:[%s1155] sm:$0xff]
    %v1158 = vsel %vm928, %v1147, 0
    %v1161 = vsel %vm928, %v1150, 0
    %v1164 = vsel %vm928, %v1153, 0
    %1166 = vmatpush.msra.mxu0 0.0
    %1167 = vmatpush.msra.mxu0 0.0
    %1168 = vmatpush.msra.mxu0 0.0
    %1169 = vmatpush.msra.mxu0 0.0
    %1170 = vmatpush.msra.mxu0 0.0
    %1171 = vmatpush.msra.mxu0 0.0
    %1172 = vmatpush.msra.mxu0 0.0
    %1173 = vmatpush.msra.mxu0 0.0
    %1174 = vmatpush.msra.mxu0 0.0
    %1175 = vmatpush.msra.mxu0 0.0
    %1176 = vmatpush.msra.mxu0 0.0
    %1177 = vmatpush.msra.mxu0 0.0
    %1178 = vmatpush.msra.mxu0 0.0
    %1179 = vmatpush.msra.mxu0 0.0
    %1180 = vmatpush.msra.mxu0 0.0
    %1181 = vmatpush.msra.mxu0 %v1156
    %1182 = vmatmul.f32.gmra.mxu0 %v1158
    %v1183 = vpop.f32.mrf.mxu0
    %v1184 = vadd.f32 0.0, %v1183
    %1185 = vmatmul.f32.gmra.mxu0 %v1161
    %v1186 = vpop.f32.mrf.mxu0
    %v1187 = vadd.f32 0.0, %v1186
    %1188 = vmatmul.f32.gmra.mxu0 %v1164
    %v1189 = vpop.f32.mrf.mxu0
    %v1190 = vadd.f32 0.0, %v1189
    %1191 = vdwg.mxu0
    %v1193 = vsel %vm928, %v1034, 0
    %v1196 = vsel %vm928, %v1037, 0
    %v1199 = vsel %vm928, %v1040, 0
    %1201 = vmatpush.msra.mxu0 0.0
    %1202 = vmatpush.msra.mxu0 0.0
    %1203 = vmatpush.msra.mxu0 0.0
    %1204 = vmatpush.msra.mxu0 0.0
    %1205 = vmatpush.msra.mxu0 0.0
    %1206 = vmatpush.msra.mxu0 0.0
    %1207 = vmatpush.msra.mxu0 0.0
    %1208 = vmatpush.msra.mxu0 0.0
    %1209 = vmatpush.msra.mxu0 0.0
    %1210 = vmatpush.msra.mxu0 0.0
    %1211 = vmatpush.msra.mxu0 0.0
    %1212 = vmatpush.msra.mxu0 0.0
    %1213 = vmatpush.msra.mxu0 0.0
    %1214 = vmatpush.msra.mxu0 0.0
    %1215 = vmatpush.msra.mxu0 0.0
    %1216 = vmatpush.msra.mxu0 %v1042
    %1217 = vmatmul.f32.gmra.mxu0 %v1193
    %v1218 = vpop.f32.mrf.mxu0
    %v1219 = vadd.f32 %v1184, %v1218
    %1220 = vmatmul.f32.gmra.mxu0 %v1196
    %v1221 = vpop.f32.mrf.mxu0
    %v1222 = vadd.f32 %v1187, %v1221
    %1223 = vmatmul.f32.gmra.mxu0 %v1199
    %v1224 = vpop.f32.mrf.mxu0
    %v1225 = vadd.f32 %v1190, %v1224
    %1226 = vdwg.mxu0
    %v1228 = vsel %vm928, %v686, 0
    %v1231 = vsel %vm928, %v689, 0
    %v1234 = vsel %vm928, %v692, 0
    %v1237 = vsel %vm928, %v731, 0
    %v1240 = vsel %vm928, %v734, 0
    %v1243 = vsel %vm928, %v737, 0
    %1245 = vmatpush.xpose.msra.mxu0 0.0
    %1246 = vmatpush.xpose.msra.mxu0 0.0
    %1247 = vmatpush.xpose.msra.mxu0 0.0
    %1248 = vmatpush.xpose.msra.mxu0 0.0
    %1249 = vmatpush.xpose.msra.mxu0 0.0
    %1250 = vmatpush.xpose.msra.mxu0 0.0
    %1251 = vmatpush.xpose.msra.mxu0 0.0
    %1252 = vmatpush.xpose.msra.mxu0 0.0
    %1253 = vmatpush.xpose.msra.mxu0 0.0
    %1254 = vmatpush.xpose.msra.mxu0 0.0
    %1255 = vmatpush.xpose.msra.mxu0 0.0
    %1256 = vmatpush.xpose.msra.mxu0 0.0
    %1257 = vmatpush.xpose.msra.mxu0 0.0
    %1258 = vmatpush.xpose.msra.mxu0 %v1243
    %1259 = vmatpush.xpose.msra.mxu0 %v1240
    %1260 = vmatpush.xpose.msra.mxu0 %v1237
    %1261 = vmatmul.f32.gmra.mxu0 %v1228
    %v1262 = vpop.f32.mrf.mxu0
    %v1263 = vadd.f32 %v251, %v1262
    %1264 = vmatmul.f32.gmra.mxu0 %v1231
    %v1265 = vpop.f32.mrf.mxu0
    %v1266 = vadd.f32 %v251, %v1265
    %1267 = vmatmul.f32.gmra.mxu0 %v1234
    %v1268 = vpop.f32.mrf.mxu0
    %v1269 = vadd.f32 %v251, %v1268
    %1270 = vdwg.mxu0
    %v1271 = vsel %vm973, %v1263, -inf
    %1272 = vmax.xlane.f32.xlu0 %v1271
    %v1273 = vpop.xlane.xlu0 %1272
    %v1274 = vsel %vm973, %v1266, -inf
    %1275 = vmax.xlane.f32.xlu0 %v1274
    %v1276 = vpop.xlane.xlu0 %1275
    %v1277 = vsel %vm973, %v1269, -inf
    %1278 = vmax.xlane.f32.xlu0 %v1277
    %v1279 = vpop.xlane.xlu0 %1278
    %v1280 = vsub.f32 %v1263, %v1273
    %v1281 = vsub.f32 %v1266, %v1276
    %v1282 = vsub.f32 %v1269, %v1279
    %v1283 = vmul.f32 %v1280, 1.442695
    %v1284 = vpow.pop %v1283
    %v1285 = vmul.f32 %v1281, 1.442695
    %v1286 = vpow.pop %v1285
    %v1287 = vmul.f32 %v1282, 1.442695
    %v1288 = vpow.pop %v1287
    %v1289 = vsel %vm973, %v1284, 0.0
    %1290 = vadd.xlane.f32.xlu0 %v1289
    %v1291 = vpop.xlane.xlu0 %1290
    %v1292 = vsel %vm973, %v1286, 0.0
    %1293 = vadd.xlane.f32.xlu0 %v1292
    %v1294 = vpop.xlane.xlu0 %1293
    %v1295 = vsel %vm973, %v1288, 0.0
    %1296 = vadd.xlane.f32.xlu0 %v1295
    %v1297 = vpop.xlane.xlu0 %1296
    %v1298 = vrcp.pop %v1291
    %v1299 = vrcp.pop %v1294
    %v1300 = vrcp.pop %v1297
    %v1301 = vmul.f32 %v1284, %v1298
    %v1302 = vmul.f32 %v1286, %v1299
    %v1303 = vmul.f32 %v1288, %v1300
    %v1305 = vsel %vm973, %v1301, 0
    %v1308 = vsel %vm973, %v1302, 0
    %v1311 = vsel %vm973, %v1303, 0
    %1313 = vmatpush.msra.mxu0 0.0
    %1314 = vmatpush.msra.mxu0 0.0
    %1315 = vmatpush.msra.mxu0 0.0
    %1316 = vmatpush.msra.mxu0 0.0
    %1317 = vmatpush.msra.mxu0 0.0
    %1318 = vmatpush.msra.mxu0 0.0
    %1319 = vmatpush.msra.mxu0 0.0
    %1320 = vmatpush.msra.mxu0 0.0
    %1321 = vmatpush.msra.mxu0 0.0
    %1322 = vmatpush.msra.mxu0 0.0
    %1323 = vmatpush.msra.mxu0 0.0
    %1324 = vmatpush.msra.mxu0 0.0
    %1325 = vmatpush.msra.mxu0 0.0
    %1326 = vmatpush.msra.mxu0 %v782
    %1327 = vmatpush.msra.mxu0 %v779
    %1328 = vmatpush.msra.mxu0 %v776
    %1329 = vmatmul.f32.gmra.mxu0 %v1305
    %v1330 = vpop.f32.mrf.mxu0
    %v1331 = vadd.f32 0.0, %v1330
    %1332 = vmatmul.f32.gmra.mxu0 %v1308
    %v1333 = vpop.f32.mrf.mxu0
    %v1334 = vadd.f32 0.0, %v1333
    %1335 = vmatmul.f32.gmra.mxu0 %v1311
    %v1336 = vpop.f32.mrf.mxu0
    %v1337 = vadd.f32 0.0, %v1336
    %1338 = vdwg.mxu0
    %s1339 = scalar_lea.vmem %s8, 16
    %v1340 = vld [vmem:[%s1339] sm:$0xff]
    %v1342 = vsel %vm928, %v1331, 0
    %v1345 = vsel %vm928, %v1334, 0
    %v1348 = vsel %vm928, %v1337, 0
    %1350 = vmatpush.msra.mxu0 0.0
    %1351 = vmatpush.msra.mxu0 0.0
    %1352 = vmatpush.msra.mxu0 0.0
    %1353 = vmatpush.msra.mxu0 0.0
    %1354 = vmatpush.msra.mxu0 0.0
    %1355 = vmatpush.msra.mxu0 0.0
    %1356 = vmatpush.msra.mxu0 0.0
    %1357 = vmatpush.msra.mxu0 0.0
    %1358 = vmatpush.msra.mxu0 0.0
    %1359 = vmatpush.msra.mxu0 0.0
    %1360 = vmatpush.msra.mxu0 0.0
    %1361 = vmatpush.msra.mxu0 0.0
    %1362 = vmatpush.msra.mxu0 0.0
    %1363 = vmatpush.msra.mxu0 0.0
    %1364 = vmatpush.msra.mxu0 0.0
    %1365 = vmatpush.msra.mxu0 %v1340
    %1366 = vmatmul.f32.gmra.mxu0 %v1342
    %v1367 = vpop.f32.mrf.mxu0
    %v1368 = vadd.f32 0.0, %v1367
    %1369 = vmatmul.f32.gmra.mxu0 %v1345
    %v1370 = vpop.f32.mrf.mxu0
    %v1371 = vadd.f32 0.0, %v1370
    %1372 = vmatmul.f32.gmra.mxu0 %v1348
    %v1373 = vpop.f32.mrf.mxu0
    %v1374 = vadd.f32 0.0, %v1373
    %1375 = vdwg.mxu0
    %v1376 = vadd.f32 %v1219, %v1368
    %v1377 = vadd.f32 %v1222, %v1371
    %v1378 = vadd.f32 %v1225, %v1374
    %v1380 = vsel %vm928, %v821, 0
    %v1383 = vsel %vm928, %v824, 0
    %v1386 = vsel %vm928, %v827, 0
    %v1389 = vsel %vm928, %v866, 0
    %v1392 = vsel %vm928, %v869, 0
    %v1395 = vsel %vm928, %v872, 0
    %1397 = vmatpush.xpose.msra.mxu0 0.0
    %1398 = vmatpush.xpose.msra.mxu0 0.0
    %1399 = vmatpush.xpose.msra.mxu0 0.0
    %1400 = vmatpush.xpose.msra.mxu0 0.0
    %1401 = vmatpush.xpose.msra.mxu0 0.0
    %1402 = vmatpush.xpose.msra.mxu0 0.0
    %1403 = vmatpush.xpose.msra.mxu0 0.0
    %1404 = vmatpush.xpose.msra.mxu0 0.0
    %1405 = vmatpush.xpose.msra.mxu0 0.0
    %1406 = vmatpush.xpose.msra.mxu0 0.0
    %1407 = vmatpush.xpose.msra.mxu0 0.0
    %1408 = vmatpush.xpose.msra.mxu0 0.0
    %1409 = vmatpush.xpose.msra.mxu0 0.0
    %1410 = vmatpush.xpose.msra.mxu0 %v1395
    %1411 = vmatpush.xpose.msra.mxu0 %v1392
    %1412 = vmatpush.xpose.msra.mxu0 %v1389
    %1413 = vmatmul.f32.gmra.mxu0 %v1380
    %v1414 = vpop.f32.mrf.mxu0
    %v1415 = vadd.f32 %v251, %v1414
    %1416 = vmatmul.f32.gmra.mxu0 %v1383
    %v1417 = vpop.f32.mrf.mxu0
    %v1418 = vadd.f32 %v251, %v1417
    %1419 = vmatmul.f32.gmra.mxu0 %v1386
    %v1420 = vpop.f32.mrf.mxu0
    %v1421 = vadd.f32 %v251, %v1420
    %1422 = vdwg.mxu0
    %v1423 = vsel %vm973, %v1415, -inf
    %1424 = vmax.xlane.f32.xlu0 %v1423
    %v1425 = vpop.xlane.xlu0 %1424
    %v1426 = vsel %vm973, %v1418, -inf
    %1427 = vmax.xlane.f32.xlu0 %v1426
    %v1428 = vpop.xlane.xlu0 %1427
    %v1429 = vsel %vm973, %v1421, -inf
    %1430 = vmax.xlane.f32.xlu0 %v1429
    %v1431 = vpop.xlane.xlu0 %1430
    %v1432 = vsub.f32 %v1415, %v1425
    %v1433 = vsub.f32 %v1418, %v1428
    %v1434 = vsub.f32 %v1421, %v1431
    %v1435 = vmul.f32 %v1432, 1.442695
    %v1436 = vpow.pop %v1435
    %v1437 = vmul.f32 %v1433, 1.442695
    %v1438 = vpow.pop %v1437
    %v1439 = vmul.f32 %v1434, 1.442695
    %v1440 = vpow.pop %v1439
    %v1441 = vsel %vm973, %v1436, 0.0
    %1442 = vadd.xlane.f32.xlu0 %v1441
    %v1443 = vpop.xlane.xlu0 %1442
    %v1444 = vsel %vm973, %v1438, 0.0
    %1445 = vadd.xlane.f32.xlu0 %v1444
    %v1446 = vpop.xlane.xlu0 %1445
    %v1447 = vsel %vm973, %v1440, 0.0
    %1448 = vadd.xlane.f32.xlu0 %v1447
    %v1449 = vpop.xlane.xlu0 %1448
    %v1450 = vrcp.pop %v1443
    %v1451 = vrcp.pop %v1446
    %v1452 = vrcp.pop %v1449
    %v1453 = vmul.f32 %v1436, %v1450
    %v1454 = vmul.f32 %v1438, %v1451
    %v1455 = vmul.f32 %v1440, %v1452
    %v1457 = vsel %vm973, %v1453, 0
    %v1460 = vsel %vm973, %v1454, 0
    %v1463 = vsel %vm973, %v1455, 0
    %1465 = vmatpush.msra.mxu0 0.0
    %1466 = vmatpush.msra.mxu0 0.0
    %1467 = vmatpush.msra.mxu0 0.0
    %1468 = vmatpush.msra.mxu0 0.0
    %1469 = vmatpush.msra.mxu0 0.0
    %1470 = vmatpush.msra.mxu0 0.0
    %1471 = vmatpush.msra.mxu0 0.0
    %1472 = vmatpush.msra.mxu0 0.0
    %1473 = vmatpush.msra.mxu0 0.0
    %1474 = vmatpush.msra.mxu0 0.0
    %1475 = vmatpush.msra.mxu0 0.0
    %1476 = vmatpush.msra.mxu0 0.0
    %1477 = vmatpush.msra.mxu0 0.0
    %1478 = vmatpush.msra.mxu0 %v917
    %1479 = vmatpush.msra.mxu0 %v914
    %1480 = vmatpush.msra.mxu0 %v911
    %1481 = vmatmul.f32.gmra.mxu0 %v1457
    %v1482 = vpop.f32.mrf.mxu0
    %v1483 = vadd.f32 0.0, %v1482
    %1484 = vmatmul.f32.gmra.mxu0 %v1460
    %v1485 = vpop.f32.mrf.mxu0
    %v1486 = vadd.f32 0.0, %v1485
    %1487 = vmatmul.f32.gmra.mxu0 %v1463
    %v1488 = vpop.f32.mrf.mxu0
    %v1489 = vadd.f32 0.0, %v1488
    %1490 = vdwg.mxu0
    %s1491 = scalar_lea.vmem %s8, 24
    %v1492 = vld [vmem:[%s1491] sm:$0xff]
    %v1494 = vsel %vm928, %v1483, 0
    %v1497 = vsel %vm928, %v1486, 0
    %v1500 = vsel %vm928, %v1489, 0
    %1502 = vmatpush.msra.mxu0 0.0
    %1503 = vmatpush.msra.mxu0 0.0
    %1504 = vmatpush.msra.mxu0 0.0
    %1505 = vmatpush.msra.mxu0 0.0
    %1506 = vmatpush.msra.mxu0 0.0
    %1507 = vmatpush.msra.mxu0 0.0
    %1508 = vmatpush.msra.mxu0 0.0
    %1509 = vmatpush.msra.mxu0 0.0
    %1510 = vmatpush.msra.mxu0 0.0
    %1511 = vmatpush.msra.mxu0 0.0
    %1512 = vmatpush.msra.mxu0 0.0
    %1513 = vmatpush.msra.mxu0 0.0
    %1514 = vmatpush.msra.mxu0 0.0
    %1515 = vmatpush.msra.mxu0 0.0
    %1516 = vmatpush.msra.mxu0 0.0
    %1517 = vmatpush.msra.mxu0 %v1492
    %1518 = vmatmul.f32.gmra.mxu0 %v1494
    %v1519 = vpop.f32.mrf.mxu0
    %v1520 = vadd.f32 0.0, %v1519
    %1521 = vmatmul.f32.gmra.mxu0 %v1497
    %v1522 = vpop.f32.mrf.mxu0
    %v1523 = vadd.f32 0.0, %v1522
    %1524 = vmatmul.f32.gmra.mxu0 %v1500
    %v1525 = vpop.f32.mrf.mxu0
    %v1526 = vadd.f32 0.0, %v1525
    %1527 = vdwg.mxu0
    %v1528 = vadd.f32 %v1376, %v1520
    %v1529 = vadd.f32 %v1377, %v1523
    %v1530 = vadd.f32 %v1378, %v1526
    %v1532 = vsel %vm928, %v425, 0
    %v1535 = vsel %vm928, %v428, 0
    %v1538 = vsel %vm928, %v431, 0
    %v1541 = vsel %vm928, %v470, 0
    %v1544 = vsel %vm928, %v473, 0
    %v1547 = vsel %vm928, %v476, 0
    %1549 = vmatpush.xpose.msra.mxu0 0.0
    %1550 = vmatpush.xpose.msra.mxu0 0.0
    %1551 = vmatpush.xpose.msra.mxu0 0.0
    %1552 = vmatpush.xpose.msra.mxu0 0.0
    %1553 = vmatpush.xpose.msra.mxu0 0.0
    %1554 = vmatpush.xpose.msra.mxu0 0.0
    %1555 = vmatpush.xpose.msra.mxu0 0.0
    %1556 = vmatpush.xpose.msra.mxu0 0.0
    %1557 = vmatpush.xpose.msra.mxu0 0.0
    %1558 = vmatpush.xpose.msra.mxu0 0.0
    %1559 = vmatpush.xpose.msra.mxu0 0.0
    %1560 = vmatpush.xpose.msra.mxu0 0.0
    %1561 = vmatpush.xpose.msra.mxu0 0.0
    %1562 = vmatpush.xpose.msra.mxu0 %v1547
    %1563 = vmatpush.xpose.msra.mxu0 %v1544
    %1564 = vmatpush.xpose.msra.mxu0 %v1541
    %1565 = vmatmul.f32.gmra.mxu0 %v1532
    %v1566 = vpop.f32.mrf.mxu0
    %v1567 = vadd.f32 %v251, %v1566
    %1568 = vmatmul.f32.gmra.mxu0 %v1535
    %v1569 = vpop.f32.mrf.mxu0
    %v1570 = vadd.f32 %v251, %v1569
    %1571 = vmatmul.f32.gmra.mxu0 %v1538
    %v1572 = vpop.f32.mrf.mxu0
    %v1573 = vadd.f32 %v251, %v1572
    %1574 = vdwg.mxu0
    %v1575 = vsel %vm973, %v1567, -inf
    %1576 = vmax.xlane.f32.xlu0 %v1575
    %v1577 = vpop.xlane.xlu0 %1576
    %v1578 = vsel %vm973, %v1570, -inf
    %1579 = vmax.xlane.f32.xlu0 %v1578
    %v1580 = vpop.xlane.xlu0 %1579
    %v1581 = vsel %vm973, %v1573, -inf
    %1582 = vmax.xlane.f32.xlu0 %v1581
    %v1583 = vpop.xlane.xlu0 %1582
    %v1584 = vsub.f32 %v1567, %v1577
    %v1585 = vsub.f32 %v1570, %v1580
    %v1586 = vsub.f32 %v1573, %v1583
    %v1587 = vmul.f32 %v1584, 1.442695
    %v1588 = vpow.pop %v1587
    %v1589 = vmul.f32 %v1585, 1.442695
    %v1590 = vpow.pop %v1589
    %v1591 = vmul.f32 %v1586, 1.442695
    %v1592 = vpow.pop %v1591
    %v1593 = vsel %vm973, %v1588, 0.0
    %1594 = vadd.xlane.f32.xlu0 %v1593
    %v1595 = vpop.xlane.xlu0 %1594
    %v1596 = vsel %vm973, %v1590, 0.0
    %1597 = vadd.xlane.f32.xlu0 %v1596
    %v1598 = vpop.xlane.xlu0 %1597
    %v1599 = vsel %vm973, %v1592, 0.0
    %1600 = vadd.xlane.f32.xlu0 %v1599
    %v1601 = vpop.xlane.xlu0 %1600
    %v1602 = vrcp.pop %v1595
    %v1603 = vrcp.pop %v1598
    %v1604 = vrcp.pop %v1601
    %v1605 = vmul.f32 %v1588, %v1602
    %v1606 = vmul.f32 %v1590, %v1603
    %v1607 = vmul.f32 %v1592, %v1604
    %v1609 = vsel %vm973, %v1605, 0
    %v1612 = vsel %vm973, %v1606, 0
    %v1615 = vsel %vm973, %v1607, 0
    %1617 = vmatpush.msra.mxu0 0.0
    %1618 = vmatpush.msra.mxu0 0.0
    %1619 = vmatpush.msra.mxu0 0.0
    %1620 = vmatpush.msra.mxu0 0.0
    %1621 = vmatpush.msra.mxu0 0.0
    %1622 = vmatpush.msra.mxu0 0.0
    %1623 = vmatpush.msra.mxu0 0.0
    %1624 = vmatpush.msra.mxu0 0.0
    %1625 = vmatpush.msra.mxu0 0.0
    %1626 = vmatpush.msra.mxu0 0.0
    %1627 = vmatpush.msra.mxu0 0.0
    %1628 = vmatpush.msra.mxu0 0.0
    %1629 = vmatpush.msra.mxu0 0.0
    %1630 = vmatpush.msra.mxu0 %v521
    %1631 = vmatpush.msra.mxu0 %v518
    %1632 = vmatpush.msra.mxu0 %v515
    %1633 = vmatmul.f32.gmra.mxu0 %v1609
    %v1634 = vpop.f32.mrf.mxu0
    %v1635 = vadd.f32 0.0, %v1634
    %1636 = vmatmul.f32.gmra.mxu0 %v1612
    %v1637 = vpop.f32.mrf.mxu0
    %v1638 = vadd.f32 0.0, %v1637
    %1639 = vmatmul.f32.gmra.mxu0 %v1615
    %v1640 = vpop.f32.mrf.mxu0
    %v1641 = vadd.f32 0.0, %v1640
    %1642 = vdwg.mxu0
    %v1644 = vsel %vm928, %v560, 0
    %v1647 = vsel %vm928, %v563, 0
    %v1650 = vsel %vm928, %v566, 0
    %v1653 = vsel %vm928, %v605, 0
    %v1656 = vsel %vm928, %v608, 0
    %v1659 = vsel %vm928, %v611, 0
    %1661 = vmatpush.xpose.msra.mxu0 0.0
    %1662 = vmatpush.xpose.msra.mxu0 0.0
    %1663 = vmatpush.xpose.msra.mxu0 0.0
    %1664 = vmatpush.xpose.msra.mxu0 0.0
    %1665 = vmatpush.xpose.msra.mxu0 0.0
    %1666 = vmatpush.xpose.msra.mxu0 0.0
    %1667 = vmatpush.xpose.msra.mxu0 0.0
    %1668 = vmatpush.xpose.msra.mxu0 0.0
    %1669 = vmatpush.xpose.msra.mxu0 0.0
    %1670 = vmatpush.xpose.msra.mxu0 0.0
    %1671 = vmatpush.xpose.msra.mxu0 0.0
    %1672 = vmatpush.xpose.msra.mxu0 0.0
    %1673 = vmatpush.xpose.msra.mxu0 0.0
    %1674 = vmatpush.xpose.msra.mxu0 %v1659
    %1675 = vmatpush.xpose.msra.mxu0 %v1656
    %1676 = vmatpush.xpose.msra.mxu0 %v1653
    %1677 = vmatmul.f32.gmra.mxu0 %v1644
    %v1678 = vpop.f32.mrf.mxu0
    %v1679 = vadd.f32 %v251, %v1678
    %1680 = vmatmul.f32.gmra.mxu0 %v1647
    %v1681 = vpop.f32.mrf.mxu0
    %v1682 = vadd.f32 %v251, %v1681
    %1683 = vmatmul.f32.gmra.mxu0 %v1650
    %v1684 = vpop.f32.mrf.mxu0
    %v1685 = vadd.f32 %v251, %v1684
    %1686 = vdwg.mxu0
    %v1687 = vsel %vm973, %v1679, -inf
    %1688 = vmax.xlane.f32.xlu0 %v1687
    %v1689 = vpop.xlane.xlu0 %1688
    %v1690 = vsel %vm973, %v1682, -inf
    %1691 = vmax.xlane.f32.xlu0 %v1690
    %v1692 = vpop.xlane.xlu0 %1691
    %v1693 = vsel %vm973, %v1685, -inf
    %1694 = vmax.xlane.f32.xlu0 %v1693
    %v1695 = vpop.xlane.xlu0 %1694
    %v1696 = vsub.f32 %v1679, %v1689
    %v1697 = vsub.f32 %v1682, %v1692
    %v1698 = vsub.f32 %v1685, %v1695
    %v1699 = vmul.f32 %v1696, 1.442695
    %v1700 = vpow.pop %v1699
    %v1701 = vmul.f32 %v1697, 1.442695
    %v1702 = vpow.pop %v1701
    %v1703 = vmul.f32 %v1698, 1.442695
    %v1704 = vpow.pop %v1703
    %v1705 = vsel %vm973, %v1700, 0.0
    %1706 = vadd.xlane.f32.xlu0 %v1705
    %v1707 = vpop.xlane.xlu0 %1706
    %v1708 = vsel %vm973, %v1702, 0.0
    %1709 = vadd.xlane.f32.xlu0 %v1708
    %v1710 = vpop.xlane.xlu0 %1709
    %v1711 = vsel %vm973, %v1704, 0.0
    %1712 = vadd.xlane.f32.xlu0 %v1711
    %v1713 = vpop.xlane.xlu0 %1712
    %v1714 = vrcp.pop %v1707
    %v1715 = vrcp.pop %v1710
    %v1716 = vrcp.pop %v1713
    %v1717 = vmul.f32 %v1700, %v1714
    %v1718 = vmul.f32 %v1702, %v1715
    %v1719 = vmul.f32 %v1704, %v1716
    %v1721 = vsel %vm973, %v1717, 0
    %v1724 = vsel %vm973, %v1718, 0
    %v1727 = vsel %vm973, %v1719, 0
    %1729 = vmatpush.msra.mxu0 0.0
    %1730 = vmatpush.msra.mxu0 0.0
    %1731 = vmatpush.msra.mxu0 0.0
    %1732 = vmatpush.msra.mxu0 0.0
    %1733 = vmatpush.msra.mxu0 0.0
    %1734 = vmatpush.msra.mxu0 0.0
    %1735 = vmatpush.msra.mxu0 0.0
    %1736 = vmatpush.msra.mxu0 0.0
    %1737 = vmatpush.msra.mxu0 0.0
    %1738 = vmatpush.msra.mxu0 0.0
    %1739 = vmatpush.msra.mxu0 0.0
    %1740 = vmatpush.msra.mxu0 0.0
    %1741 = vmatpush.msra.mxu0 0.0
    %1742 = vmatpush.msra.mxu0 %v656
    %1743 = vmatpush.msra.mxu0 %v653
    %1744 = vmatpush.msra.mxu0 %v650
    %1745 = vmatmul.f32.gmra.mxu0 %v1721
    %v1746 = vpop.f32.mrf.mxu0
    %v1747 = vadd.f32 0.0, %v1746
    %1748 = vmatmul.f32.gmra.mxu0 %v1724
    %v1749 = vpop.f32.mrf.mxu0
    %v1750 = vadd.f32 0.0, %v1749
    %1751 = vmatmul.f32.gmra.mxu0 %v1727
    %v1752 = vpop.f32.mrf.mxu0
    %v1753 = vadd.f32 0.0, %v1752
    %1754 = vdwg.mxu0
    %v1756 = vsel %vm928, %v1747, 0
    %v1759 = vsel %vm928, %v1750, 0
    %v1762 = vsel %vm928, %v1753, 0
    %1764 = vmatpush.msra.mxu0 0.0
    %1765 = vmatpush.msra.mxu0 0.0
    %1766 = vmatpush.msra.mxu0 0.0
    %1767 = vmatpush.msra.mxu0 0.0
    %1768 = vmatpush.msra.mxu0 0.0
    %1769 = vmatpush.msra.mxu0 0.0
    %1770 = vmatpush.msra.mxu0 0.0
    %1771 = vmatpush.msra.mxu0 0.0
    %1772 = vmatpush.msra.mxu0 0.0
    %1773 = vmatpush.msra.mxu0 0.0
    %1774 = vmatpush.msra.mxu0 0.0
    %1775 = vmatpush.msra.mxu0 0.0
    %1776 = vmatpush.msra.mxu0 0.0
    %1777 = vmatpush.msra.mxu0 0.0
    %1778 = vmatpush.msra.mxu0 0.0
    %1779 = vmatpush.msra.mxu0 %v1156
    %1780 = vmatmul.f32.gmra.mxu0 %v1756
    %v1781 = vpop.f32.mrf.mxu0
    %v1782 = vadd.f32 0.0, %v1781
    %1783 = vmatmul.f32.gmra.mxu0 %v1759
    %v1784 = vpop.f32.mrf.mxu0
    %v1785 = vadd.f32 0.0, %v1784
    %1786 = vmatmul.f32.gmra.mxu0 %v1762
    %v1787 = vpop.f32.mrf.mxu0
    %v1788 = vadd.f32 0.0, %v1787
    %1789 = vdwg.mxu0
    %v1791 = vsel %vm928, %v1635, 0
    %v1794 = vsel %vm928, %v1638, 0
    %v1797 = vsel %vm928, %v1641, 0
    %1799 = vmatpush.msra.mxu0 0.0
    %1800 = vmatpush.msra.mxu0 0.0
    %1801 = vmatpush.msra.mxu0 0.0
    %1802 = vmatpush.msra.mxu0 0.0
    %1803 = vmatpush.msra.mxu0 0.0
    %1804 = vmatpush.msra.mxu0 0.0
    %1805 = vmatpush.msra.mxu0 0.0
    %1806 = vmatpush.msra.mxu0 0.0
    %1807 = vmatpush.msra.mxu0 0.0
    %1808 = vmatpush.msra.mxu0 0.0
    %1809 = vmatpush.msra.mxu0 0.0
    %1810 = vmatpush.msra.mxu0 0.0
    %1811 = vmatpush.msra.mxu0 0.0
    %1812 = vmatpush.msra.mxu0 0.0
    %1813 = vmatpush.msra.mxu0 0.0
    %1814 = vmatpush.msra.mxu0 %v1042
    %1815 = vmatmul.f32.gmra.mxu0 %v1791
    %v1816 = vpop.f32.mrf.mxu0
    %v1817 = vadd.f32 %v1782, %v1816
    %1818 = vmatmul.f32.gmra.mxu0 %v1794
    %v1819 = vpop.f32.mrf.mxu0
    %v1820 = vadd.f32 %v1785, %v1819
    %1821 = vmatmul.f32.gmra.mxu0 %v1797
    %v1822 = vpop.f32.mrf.mxu0
    %v1823 = vadd.f32 %v1788, %v1822
    %1824 = vdwg.mxu0
    %v1826 = vsel %vm928, %v695, 0
    %v1829 = vsel %vm928, %v698, 0
    %v1832 = vsel %vm928, %v701, 0
    %v1835 = vsel %vm928, %v740, 0
    %v1838 = vsel %vm928, %v743, 0
    %v1841 = vsel %vm928, %v746, 0
    %1843 = vmatpush.xpose.msra.mxu0 0.0
    %1844 = vmatpush.xpose.msra.mxu0 0.0
    %1845 = vmatpush.xpose.msra.mxu0 0.0
    %1846 = vmatpush.xpose.msra.mxu0 0.0
    %1847 = vmatpush.xpose.msra.mxu0 0.0
    %1848 = vmatpush.xpose.msra.mxu0 0.0
    %1849 = vmatpush.xpose.msra.mxu0 0.0
    %1850 = vmatpush.xpose.msra.mxu0 0.0
    %1851 = vmatpush.xpose.msra.mxu0 0.0
    %1852 = vmatpush.xpose.msra.mxu0 0.0
    %1853 = vmatpush.xpose.msra.mxu0 0.0
    %1854 = vmatpush.xpose.msra.mxu0 0.0
    %1855 = vmatpush.xpose.msra.mxu0 0.0
    %1856 = vmatpush.xpose.msra.mxu0 %v1841
    %1857 = vmatpush.xpose.msra.mxu0 %v1838
    %1858 = vmatpush.xpose.msra.mxu0 %v1835
    %1859 = vmatmul.f32.gmra.mxu0 %v1826
    %v1860 = vpop.f32.mrf.mxu0
    %v1861 = vadd.f32 %v251, %v1860
    %1862 = vmatmul.f32.gmra.mxu0 %v1829
    %v1863 = vpop.f32.mrf.mxu0
    %v1864 = vadd.f32 %v251, %v1863
    %1865 = vmatmul.f32.gmra.mxu0 %v1832
    %v1866 = vpop.f32.mrf.mxu0
    %v1867 = vadd.f32 %v251, %v1866
    %1868 = vdwg.mxu0
    %v1869 = vsel %vm973, %v1861, -inf
    %1870 = vmax.xlane.f32.xlu0 %v1869
    %v1871 = vpop.xlane.xlu0 %1870
    %v1872 = vsel %vm973, %v1864, -inf
    %1873 = vmax.xlane.f32.xlu0 %v1872
    %v1874 = vpop.xlane.xlu0 %1873
    %v1875 = vsel %vm973, %v1867, -inf
    %1876 = vmax.xlane.f32.xlu0 %v1875
    %v1877 = vpop.xlane.xlu0 %1876
    %v1878 = vsub.f32 %v1861, %v1871
    %v1879 = vsub.f32 %v1864, %v1874
    %v1880 = vsub.f32 %v1867, %v1877
    %v1881 = vmul.f32 %v1878, 1.442695
    %v1882 = vpow.pop %v1881
    %v1883 = vmul.f32 %v1879, 1.442695
    %v1884 = vpow.pop %v1883
    %v1885 = vmul.f32 %v1880, 1.442695
    %v1886 = vpow.pop %v1885
    %v1887 = vsel %vm973, %v1882, 0.0
    %1888 = vadd.xlane.f32.xlu0 %v1887
    %v1889 = vpop.xlane.xlu0 %1888
    %v1890 = vsel %vm973, %v1884, 0.0
    %1891 = vadd.xlane.f32.xlu0 %v1890
    %v1892 = vpop.xlane.xlu0 %1891
    %v1893 = vsel %vm973, %v1886, 0.0
    %1894 = vadd.xlane.f32.xlu0 %v1893
    %v1895 = vpop.xlane.xlu0 %1894
    %v1896 = vrcp.pop %v1889
    %v1897 = vrcp.pop %v1892
    %v1898 = vrcp.pop %v1895
    %v1899 = vmul.f32 %v1882, %v1896
    %v1900 = vmul.f32 %v1884, %v1897
    %v1901 = vmul.f32 %v1886, %v1898
    %v1903 = vsel %vm973, %v1899, 0
    %v1906 = vsel %vm973, %v1900, 0
    %v1909 = vsel %vm973, %v1901, 0
    %1911 = vmatpush.msra.mxu0 0.0
    %1912 = vmatpush.msra.mxu0 0.0
    %1913 = vmatpush.msra.mxu0 0.0
    %1914 = vmatpush.msra.mxu0 0.0
    %1915 = vmatpush.msra.mxu0 0.0
    %1916 = vmatpush.msra.mxu0 0.0
    %1917 = vmatpush.msra.mxu0 0.0
    %1918 = vmatpush.msra.mxu0 0.0
    %1919 = vmatpush.msra.mxu0 0.0
    %1920 = vmatpush.msra.mxu0 0.0
    %1921 = vmatpush.msra.mxu0 0.0
    %1922 = vmatpush.msra.mxu0 0.0
    %1923 = vmatpush.msra.mxu0 0.0
    %1924 = vmatpush.msra.mxu0 %v791
    %1925 = vmatpush.msra.mxu0 %v788
    %1926 = vmatpush.msra.mxu0 %v785
    %1927 = vmatmul.f32.gmra.mxu0 %v1903
    %v1928 = vpop.f32.mrf.mxu0
    %v1929 = vadd.f32 0.0, %v1928
    %1930 = vmatmul.f32.gmra.mxu0 %v1906
    %v1931 = vpop.f32.mrf.mxu0
    %v1932 = vadd.f32 0.0, %v1931
    %1933 = vmatmul.f32.gmra.mxu0 %v1909
    %v1934 = vpop.f32.mrf.mxu0
    %v1935 = vadd.f32 0.0, %v1934
    %1936 = vdwg.mxu0
    %v1938 = vsel %vm928, %v1929, 0
    %v1941 = vsel %vm928, %v1932, 0
    %v1944 = vsel %vm928, %v1935, 0
    %1946 = vmatpush.msra.mxu0 0.0
    %1947 = vmatpush.msra.mxu0 0.0
    %1948 = vmatpush.msra.mxu0 0.0
    %1949 = vmatpush.msra.mxu0 0.0
    %1950 = vmatpush.msra.mxu0 0.0
    %1951 = vmatpush.msra.mxu0 0.0
    %1952 = vmatpush.msra.mxu0 0.0
    %1953 = vmatpush.msra.mxu0 0.0
    %1954 = vmatpush.msra.mxu0 0.0
    %1955 = vmatpush.msra.mxu0 0.0
    %1956 = vmatpush.msra.mxu0 0.0
    %1957 = vmatpush.msra.mxu0 0.0
    %1958 = vmatpush.msra.mxu0 0.0
    %1959 = vmatpush.msra.mxu0 0.0
    %1960 = vmatpush.msra.mxu0 0.0
    %1961 = vmatpush.msra.mxu0 %v1340
    %1962 = vmatmul.f32.gmra.mxu0 %v1938
    %v1963 = vpop.f32.mrf.mxu0
    %v1964 = vadd.f32 0.0, %v1963
    %1965 = vmatmul.f32.gmra.mxu0 %v1941
    %v1966 = vpop.f32.mrf.mxu0
    %v1967 = vadd.f32 0.0, %v1966
    %1968 = vmatmul.f32.gmra.mxu0 %v1944
    %v1969 = vpop.f32.mrf.mxu0
    %v1970 = vadd.f32 0.0, %v1969
    %1971 = vdwg.mxu0
    %v1972 = vadd.f32 %v1817, %v1964
    %v1973 = vadd.f32 %v1820, %v1967
    %v1974 = vadd.f32 %v1823, %v1970
    %v1976 = vsel %vm928, %v830, 0
    %v1979 = vsel %vm928, %v833, 0
    %v1982 = vsel %vm928, %v836, 0
    %v1985 = vsel %vm928, %v875, 0
    %v1988 = vsel %vm928, %v878, 0
    %v1991 = vsel %vm928, %v881, 0
    %1993 = vmatpush.xpose.msra.mxu0 0.0
    %1994 = vmatpush.xpose.msra.mxu0 0.0
    %1995 = vmatpush.xpose.msra.mxu0 0.0
    %1996 = vmatpush.xpose.msra.mxu0 0.0
    %1997 = vmatpush.xpose.msra.mxu0 0.0
    %1998 = vmatpush.xpose.msra.mxu0 0.0
    %1999 = vmatpush.xpose.msra.mxu0 0.0
    %2000 = vmatpush.xpose.msra.mxu0 0.0
    %2001 = vmatpush.xpose.msra.mxu0 0.0
    %2002 = vmatpush.xpose.msra.mxu0 0.0
    %2003 = vmatpush.xpose.msra.mxu0 0.0
    %2004 = vmatpush.xpose.msra.mxu0 0.0
    %2005 = vmatpush.xpose.msra.mxu0 0.0
    %2006 = vmatpush.xpose.msra.mxu0 %v1991
    %2007 = vmatpush.xpose.msra.mxu0 %v1988
    %2008 = vmatpush.xpose.msra.mxu0 %v1985
    %2009 = vmatmul.f32.gmra.mxu0 %v1976
    %v2010 = vpop.f32.mrf.mxu0
    %v2011 = vadd.f32 %v251, %v2010
    %2012 = vmatmul.f32.gmra.mxu0 %v1979
    %v2013 = vpop.f32.mrf.mxu0
    %v2014 = vadd.f32 %v251, %v2013
    %2015 = vmatmul.f32.gmra.mxu0 %v1982
    %v2016 = vpop.f32.mrf.mxu0
    %v2017 = vadd.f32 %v251, %v2016
    %2018 = vdwg.mxu0
    %v2019 = vsel %vm973, %v2011, -inf
    %2020 = vmax.xlane.f32.xlu0 %v2019
    %v2021 = vpop.xlane.xlu0 %2020
    %v2022 = vsel %vm973, %v2014, -inf
    %2023 = vmax.xlane.f32.xlu0 %v2022
    %v2024 = vpop.xlane.xlu0 %2023
    %v2025 = vsel %vm973, %v2017, -inf
    %2026 = vmax.xlane.f32.xlu0 %v2025
    %v2027 = vpop.xlane.xlu0 %2026
    %v2028 = vsub.f32 %v2011, %v2021
    %v2029 = vsub.f32 %v2014, %v2024
    %v2030 = vsub.f32 %v2017, %v2027
    %v2031 = vmul.f32 %v2028, 1.442695
    %v2032 = vpow.pop %v2031
    %v2033 = vmul.f32 %v2029, 1.442695
    %v2034 = vpow.pop %v2033
    %v2035 = vmul.f32 %v2030, 1.442695
    %v2036 = vpow.pop %v2035
    %v2037 = vsel %vm973, %v2032, 0.0
    %2038 = vadd.xlane.f32.xlu0 %v2037
    %v2039 = vpop.xlane.xlu0 %2038
    %v2040 = vsel %vm973, %v2034, 0.0
    %2041 = vadd.xlane.f32.xlu0 %v2040
    %v2042 = vpop.xlane.xlu0 %2041
    %v2043 = vsel %vm973, %v2036, 0.0
    %2044 = vadd.xlane.f32.xlu0 %v2043
    %v2045 = vpop.xlane.xlu0 %2044
    %v2046 = vrcp.pop %v2039
    %v2047 = vrcp.pop %v2042
    %v2048 = vrcp.pop %v2045
    %v2049 = vmul.f32 %v2032, %v2046
    %v2050 = vmul.f32 %v2034, %v2047
    %v2051 = vmul.f32 %v2036, %v2048
    %v2053 = vsel %vm973, %v2049, 0
    %v2056 = vsel %vm973, %v2050, 0
    %v2059 = vsel %vm973, %v2051, 0
    %2061 = vmatpush.msra.mxu0 0.0
    %2062 = vmatpush.msra.mxu0 0.0
    %2063 = vmatpush.msra.mxu0 0.0
    %2064 = vmatpush.msra.mxu0 0.0
    %2065 = vmatpush.msra.mxu0 0.0
    %2066 = vmatpush.msra.mxu0 0.0
    %2067 = vmatpush.msra.mxu0 0.0
    %2068 = vmatpush.msra.mxu0 0.0
    %2069 = vmatpush.msra.mxu0 0.0
    %2070 = vmatpush.msra.mxu0 0.0
    %2071 = vmatpush.msra.mxu0 0.0
    %2072 = vmatpush.msra.mxu0 0.0
    %2073 = vmatpush.msra.mxu0 0.0
    %2074 = vmatpush.msra.mxu0 %v926
    %2075 = vmatpush.msra.mxu0 %v923
    %2076 = vmatpush.msra.mxu0 %v920
    %2077 = vmatmul.f32.gmra.mxu0 %v2053
    %v2078 = vpop.f32.mrf.mxu0
    %v2079 = vadd.f32 0.0, %v2078
    %2080 = vmatmul.f32.gmra.mxu0 %v2056
    %v2081 = vpop.f32.mrf.mxu0
    %v2082 = vadd.f32 0.0, %v2081
    %2083 = vmatmul.f32.gmra.mxu0 %v2059
    %v2084 = vpop.f32.mrf.mxu0
    %v2085 = vadd.f32 0.0, %v2084
    %2086 = vdwg.mxu0
    %v2088 = vsel %vm928, %v2079, 0
    %v2091 = vsel %vm928, %v2082, 0
    %v2094 = vsel %vm928, %v2085, 0
    %2096 = vmatpush.msra.mxu0 0.0
    %2097 = vmatpush.msra.mxu0 0.0
    %2098 = vmatpush.msra.mxu0 0.0
    %2099 = vmatpush.msra.mxu0 0.0
    %2100 = vmatpush.msra.mxu0 0.0
    %2101 = vmatpush.msra.mxu0 0.0
    %2102 = vmatpush.msra.mxu0 0.0
    %2103 = vmatpush.msra.mxu0 0.0
    %2104 = vmatpush.msra.mxu0 0.0
    %2105 = vmatpush.msra.mxu0 0.0
    %2106 = vmatpush.msra.mxu0 0.0
    %2107 = vmatpush.msra.mxu0 0.0
    %2108 = vmatpush.msra.mxu0 0.0
    %2109 = vmatpush.msra.mxu0 0.0
    %2110 = vmatpush.msra.mxu0 0.0
    %2111 = vmatpush.msra.mxu0 %v1492
    %2112 = vmatmul.f32.gmra.mxu0 %v2088
    %v2113 = vpop.f32.mrf.mxu0
    %v2114 = vadd.f32 0.0, %v2113
    %2115 = vmatmul.f32.gmra.mxu0 %v2091
    %v2116 = vpop.f32.mrf.mxu0
    %v2117 = vadd.f32 0.0, %v2116
    %2118 = vmatmul.f32.gmra.mxu0 %v2094
    %v2119 = vpop.f32.mrf.mxu0
    %v2120 = vadd.f32 0.0, %v2119
    %2121 = vdwg.mxu0
    %v2122 = vadd.f32 %v1972, %v2114
    %v2123 = vadd.f32 %v1973, %v2117
    %v2124 = vadd.f32 %v1974, %v2120
    %v2125 = vadd.f32 %v243, %v1528
    %v2126 = vadd.f32 %v244, %v1529
    %v2127 = vadd.f32 %v245, %v1530
    %v2128 = vadd.f32 %v246, %v2122
    %v2129 = vadd.f32 %v247, %v2123
    %v2130 = vadd.f32 %v245, %v2124
    %v2131 = vld [vmem:[%s9] sm:$0x1]
    %v2133 = vperm.slane %v2131, 0
    %v2135 = vadd.f32 %v2125, %v2133
    %v2136 = vadd.f32 %v2126, %v2133
    %v2137 = vadd.f32 %v2127, %v2133
    %v2138 = vadd.f32 %v2128, %v2133
    %v2139 = vadd.f32 %v2129, %v2133
    %v2140 = vadd.f32 %v2130, %v2133
    %v2141 = vld [vmem:[%s10] sm:$0x3]
    %v2142 = vsel %vm118, %v2135, 0.0
    %2143 = vadd.xlane.f32.xlu0 %v2142
    %v2144 = vpop.xlane.xlu0 %2143
    %v2145 = vsel %vm118, %v2136, 0.0
    %2146 = vadd.xlane.f32.xlu0 %v2145
    %v2147 = vpop.xlane.xlu0 %2146
    %v2148 = vsel %vm118, %v2137, 0.0
    %2149 = vadd.xlane.f32.xlu0 %v2148
    %v2150 = vpop.xlane.xlu0 %2149
    %v2151 = vsel %vm118, %v2138, 0.0
    %2152 = vadd.xlane.f32.xlu0 %v2151
    %v2153 = vpop.xlane.xlu0 %2152
    %v2154 = vsel %vm118, %v2139, 0.0
    %2155 = vadd.xlane.f32.xlu0 %v2154
    %v2156 = vpop.xlane.xlu0 %2155
    %v2157 = vsel %vm118, %v2140, 0.0
    %2158 = vadd.xlane.f32.xlu0 %v2157
    %v2159 = vpop.xlane.xlu0 %2158
    %v2160 = vmul.f32 %v2144, %v140
    %v2161 = vmul.f32 %v2147, %v140
    %v2162 = vmul.f32 %v2150, %v140
    %v2163 = vmul.f32 %v2153, %v140
    %v2164 = vmul.f32 %v2156, %v140
    %v2165 = vmul.f32 %v2159, %v140
    %v2166 = vsub.f32 %v2135, %v2160
    %v2167 = vsub.f32 %v2136, %v2161
    %v2168 = vsub.f32 %v2137, %v2162
    %v2169 = vsub.f32 %v2138, %v2163
    %v2170 = vsub.f32 %v2139, %v2164
    %v2171 = vsub.f32 %v2140, %v2165
    %v2172 = vmul.f32 %v2166, %v2166
    %v2173 = vmul.f32 %v2167, %v2167
    %v2174 = vmul.f32 %v2168, %v2168
    %v2175 = vmul.f32 %v2169, %v2169
    %v2176 = vmul.f32 %v2170, %v2170
    %v2177 = vmul.f32 %v2171, %v2171
    %v2178 = vsel %vm118, %v2172, 0.0
    %2179 = vadd.xlane.f32.xlu0 %v2178
    %v2180 = vpop.xlane.xlu0 %2179
    %v2181 = vsel %vm118, %v2173, 0.0
    %2182 = vadd.xlane.f32.xlu0 %v2181
    %v2183 = vpop.xlane.xlu0 %2182
    %v2184 = vsel %vm118, %v2174, 0.0
    %2185 = vadd.xlane.f32.xlu0 %v2184
    %v2186 = vpop.xlane.xlu0 %2185
    %v2187 = vsel %vm118, %v2175, 0.0
    %2188 = vadd.xlane.f32.xlu0 %v2187
    %v2189 = vpop.xlane.xlu0 %2188
    %v2190 = vsel %vm118, %v2176, 0.0
    %2191 = vadd.xlane.f32.xlu0 %v2190
    %v2192 = vpop.xlane.xlu0 %2191
    %v2193 = vsel %vm118, %v2177, 0.0
    %2194 = vadd.xlane.f32.xlu0 %v2193
    %v2195 = vpop.xlane.xlu0 %2194
    %v2196 = vmul.f32 %v2180, %v140
    %v2197 = vmul.f32 %v2183, %v140
    %v2198 = vmul.f32 %v2186, %v140
    %v2199 = vmul.f32 %v2189, %v140
    %v2200 = vmul.f32 %v2192, %v140
    %v2201 = vmul.f32 %v2195, %v140
    %v2202 = vadd.f32 %v2196, 1e-05
    %v2203 = vadd.f32 %v2197, 1e-05
    %v2204 = vadd.f32 %v2198, 1e-05
    %v2205 = vadd.f32 %v2199, 1e-05
    %v2206 = vadd.f32 %v2200, 1e-05
    %v2207 = vadd.f32 %v2201, 1e-05
    %v2208 = vrsqrt.pop %v2202
    %v2209 = vmul.f32 %v2208, %v2202
    %v2210 = vmul.f32 %v2209, %v2208
    %v2211 = vmul.f32 0.5, %v2210
    %v2212 = vsub.f32 1.5, %v2211
    %v2213 = vmul.f32 %v2208, %v2212
    %vm2214 = vweird.f32 %v2202
    %vm2215 = vweird.f32 %v2208
    %vm2216 = vmor %vm2214, %vm2215
    %v2217 = vsel %vm2216, %v2208, %v2213
    %v2218 = vrsqrt.pop %v2203
    %v2219 = vmul.f32 %v2218, %v2203
    %v2220 = vmul.f32 %v2219, %v2218
    %v2221 = vmul.f32 0.5, %v2220
    %v2222 = vsub.f32 1.5, %v2221
    %v2223 = vmul.f32 %v2218, %v2222
    %vm2224 = vweird.f32 %v2203
    %vm2225 = vweird.f32 %v2218
    %vm2226 = vmor %vm2224, %vm2225
    %v2227 = vsel %vm2226, %v2218, %v2223
    %v2228 = vrsqrt.pop %v2204
    %v2229 = vmul.f32 %v2228, %v2204
    %v2230 = vmul.f32 %v2229, %v2228
    %v2231 = vmul.f32 0.5, %v2230
    %v2232 = vsub.f32 1.5, %v2231
    %v2233 = vmul.f32 %v2228, %v2232
    %vm2234 = vweird.f32 %v2204
    %vm2235 = vweird.f32 %v2228
    %vm2236 = vmor %vm2234, %vm2235
    %v2237 = vsel %vm2236, %v2228, %v2233
    %v2238 = vrsqrt.pop %v2205
    %v2239 = vmul.f32 %v2238, %v2205
    %v2240 = vmul.f32 %v2239, %v2238
    %v2241 = vmul.f32 0.5, %v2240
    %v2242 = vsub.f32 1.5, %v2241
    %v2243 = vmul.f32 %v2238, %v2242
    %vm2244 = vweird.f32 %v2205
    %vm2245 = vweird.f32 %v2238
    %vm2246 = vmor %vm2244, %vm2245
    %v2247 = vsel %vm2246, %v2238, %v2243
    %v2248 = vrsqrt.pop %v2206
    %v2249 = vmul.f32 %v2248, %v2206
    %v2250 = vmul.f32 %v2249, %v2248
    %v2251 = vmul.f32 0.5, %v2250
    %v2252 = vsub.f32 1.5, %v2251
    %v2253 = vmul.f32 %v2248, %v2252
    %vm2254 = vweird.f32 %v2206
    %vm2255 = vweird.f32 %v2248
    %vm2256 = vmor %vm2254, %vm2255
    %v2257 = vsel %vm2256, %v2248, %v2253
    %v2258 = vrsqrt.pop %v2207
    %v2259 = vmul.f32 %v2258, %v2207
    %v2260 = vmul.f32 %v2259, %v2258
    %v2261 = vmul.f32 0.5, %v2260
    %v2262 = vsub.f32 1.5, %v2261
    %v2263 = vmul.f32 %v2258, %v2262
    %vm2264 = vweird.f32 %v2207
    %vm2265 = vweird.f32 %v2258
    %vm2266 = vmor %vm2264, %vm2265
    %v2267 = vsel %vm2266, %v2258, %v2263
    %v2268 = vmul.f32 %v2166, %v2217
    %v2269 = vmul.f32 %v2167, %v2227
    %v2270 = vmul.f32 %v2168, %v2237
    %v2271 = vmul.f32 %v2169, %v2247
    %v2272 = vmul.f32 %v2170, %v2257
    %v2273 = vmul.f32 %v2171, %v2267
    %v2274 = vperm.slane %v2141, 0
    %v2275 = vmul.f32 %v2268, %v2274
    %v2276 = vmul.f32 %v2269, %v2274
    %v2277 = vmul.f32 %v2270, %v2274
    %v2278 = vmul.f32 %v2271, %v2274
    %v2279 = vmul.f32 %v2272, %v2274
    %v2280 = vmul.f32 %v2273, %v2274
    %v2281 = vperm.slane %v2141, 1
    %v2282 = vadd.f32 %v2275, %v2281
    %v2283 = vadd.f32 %v2276, %v2281
    %v2284 = vadd.f32 %v2277, %v2281
    %v2285 = vadd.f32 %v2278, %v2281
    %v2286 = vadd.f32 %v2279, %v2281
    %v2287 = vadd.f32 %v2280, %v2281
    %v2288 = vld [vmem:[%s11] sm:$0xff]
    %v2289 = vld [vmem:[%s11 + $0x8] sm:$0xff]
    %v2290 = vld [vmem:[%s11 + $0x10] sm:$0xff]
    %v2291 = vld [vmem:[%s11 + $0x18] sm:$0xff]
    %v2292 = vld [vmem:[%s12] sm:$0x1]
    %v2294 = vperm.slane %v2292, 0
    %v2297 = vsel %vm118, %v2282, 0
    %v2300 = vsel %vm118, %v2283, 0
    %v2303 = vsel %vm118, %v2284, 0
    %v2306 = vsel %vm118, %v2285, 0
    %v2309 = vsel %vm118, %v2286, 0
    %v2312 = vsel %vm118, %v2287, 0
    %2314 = vmatpush.msra.mxu0 0.0
    %2315 = vmatpush.msra.mxu0 0.0
    %2316 = vmatpush.msra.mxu0 0.0
    %2317 = vmatpush.msra.mxu0 0.0
    %2318 = vmatpush.msra.mxu0 0.0
    %2319 = vmatpush.msra.mxu0 0.0
    %2320 = vmatpush.msra.mxu0 0.0
    %2321 = vmatpush.msra.mxu0 0.0
    %2322 = vmatpush.msra.mxu0 0.0
    %2323 = vmatpush.msra.mxu0 0.0
    %2324 = vmatpush.msra.mxu0 0.0
    %2325 = vmatpush.msra.mxu0 0.0
    %2326 = vmatpush.msra.mxu0 %v2291
    %2327 = vmatpush.msra.mxu0 %v2290
    %2328 = vmatpush.msra.mxu0 %v2289
    %2329 = vmatpush.msra.mxu0 %v2288
    %2330 = vmatmul.f32.gmra.mxu0 %v2297
    %v2331 = vpop.f32.mrf.mxu0
    %v2332 = vadd.f32 %v2294, %v2331
    %2333 = vmatmul.f32.gmra.mxu0 %v2300
    %v2334 = vpop.f32.mrf.mxu0
    %v2335 = vadd.f32 %v2294, %v2334
    %2336 = vmatmul.f32.gmra.mxu0 %v2303
    %v2337 = vpop.f32.mrf.mxu0
    %v2338 = vadd.f32 %v2294, %v2337
    %2339 = vmatmul.f32.gmra.mxu0 %v2306
    %v2340 = vpop.f32.mrf.mxu0
    %v2341 = vadd.f32 %v2294, %v2340
    %2342 = vmatmul.f32.gmra.mxu0 %v2309
    %v2343 = vpop.f32.mrf.mxu0
    %v2344 = vadd.f32 %v2294, %v2343
    %2345 = vmatmul.f32.gmra.mxu0 %v2312
    %v2346 = vpop.f32.mrf.mxu0
    %v2347 = vadd.f32 %v2294, %v2346
    %2348 = vdwg.mxu0
    %v2349 = vmul.f32 %v2332, 1.702
    %v2350 = vmul.f32 %v2335, 1.702
    %v2351 = vmul.f32 %v2338, 1.702
    %v2352 = vmul.f32 %v2341, 1.702
    %v2353 = vmul.f32 %v2344, 1.702
    %v2354 = vmul.f32 %v2347, 1.702
    %v2355 = vxor.u32 %v2349, 2147483648
    %v2356 = vxor.u32 %v2350, 2147483648
    %v2357 = vxor.u32 %v2351, 2147483648
    %v2358 = vxor.u32 %v2352, 2147483648
    %v2359 = vxor.u32 %v2353, 2147483648
    %v2360 = vxor.u32 %v2354, 2147483648
    %v2361 = vmul.f32 %v2355, 1.442695
    %v2362 = vpow.pop %v2361
    %v2363 = vmul.f32 %v2356, 1.442695
    %v2364 = vpow.pop %v2363
    %v2365 = vmul.f32 %v2357, 1.442695
    %v2366 = vpow.pop %v2365
    %v2367 = vmul.f32 %v2358, 1.442695
    %v2368 = vpow.pop %v2367
    %v2369 = vmul.f32 %v2359, 1.442695
    %v2370 = vpow.pop %v2369
    %v2371 = vmul.f32 %v2360, 1.442695
    %v2372 = vpow.pop %v2371
    %v2373 = vadd.f32 %v2362, 1.0
    %v2374 = vadd.f32 %v2364, 1.0
    %v2375 = vadd.f32 %v2366, 1.0
    %v2376 = vadd.f32 %v2368, 1.0
    %v2377 = vadd.f32 %v2370, 1.0
    %v2378 = vadd.f32 %v2372, 1.0
    %v2379 = vrcp.pop %v2373
    %v2380 = vmul.f32 %v2373, %v2379
    %v2381 = vsub.f32 1.0, %v2380
    %v2382 = vmul.f32 %v2379, %v2381
    %v2383 = vadd.f32 %v2379, %v2382
    %vm2384 = vweird.f32 %v2373
    %vm2385 = vweird.f32 %v2379
    %vm2386 = vmor %vm2384, %vm2385
    %v2387 = vsel %vm2386, %v2379, %v2383
    %v2388 = vand.u32 2147483647, %v2373
    %vm2389 = vcmp.eq.f32.partialorder %v2388, 8.507059e+37
    %v2390 = vand.u32 %v2373, 2147483648
    %v2391 = vor.u32 1.1754944e-38, %v2390
    %v2392 = vsel %vm2389, %v2391, %v2387
    %v2393 = vmul.f32 1.0, %v2392
    %v2394 = vrcp.pop %v2374
    %v2395 = vmul.f32 %v2374, %v2394
    %v2396 = vsub.f32 1.0, %v2395
    %v2397 = vmul.f32 %v2394, %v2396
    %v2398 = vadd.f32 %v2394, %v2397
    %vm2399 = vweird.f32 %v2374
    %vm2400 = vweird.f32 %v2394
    %vm2401 = vmor %vm2399, %vm2400
    %v2402 = vsel %vm2401, %v2394, %v2398
    %v2403 = vand.u32 2147483647, %v2374
    %vm2404 = vcmp.eq.f32.partialorder %v2403, 8.507059e+37
    %v2405 = vand.u32 %v2374, 2147483648
    %v2406 = vor.u32 1.1754944e-38, %v2405
    %v2407 = vsel %vm2404, %v2406, %v2402
    %v2408 = vmul.f32 1.0, %v2407
    %v2409 = vrcp.pop %v2375
    %v2410 = vmul.f32 %v2375, %v2409
    %v2411 = vsub.f32 1.0, %v2410
    %v2412 = vmul.f32 %v2409, %v2411
    %v2413 = vadd.f32 %v2409, %v2412
    %vm2414 = vweird.f32 %v2375
    %vm2415 = vweird.f32 %v2409
    %vm2416 = vmor %vm2414, %vm2415
    %v2417 = vsel %vm2416, %v2409, %v2413
    %v2418 = vand.u32 2147483647, %v2375
    %vm2419 = vcmp.eq.f32.partialorder %v2418, 8.507059e+37
    %v2420 = vand.u32 %v2375, 2147483648
    %v2421 = vor.u32 1.1754944e-38, %v2420
    %v2422 = vsel %vm2419, %v2421, %v2417
    %v2423 = vmul.f32 1.0, %v2422
    %v2424 = vrcp.pop %v2376
    %v2425 = vmul.f32 %v2376, %v2424
    %v2426 = vsub.f32 1.0, %v2425
    %v2427 = vmul.f32 %v2424, %v2426
    %v2428 = vadd.f32 %v2424, %v2427
    %vm2429 = vweird.f32 %v2376
    %vm2430 = vweird.f32 %v2424
    %vm2431 = vmor %vm2429, %vm2430
    %v2432 = vsel %vm2431, %v2424, %v2428
    %v2433 = vand.u32 2147483647, %v2376
    %vm2434 = vcmp.eq.f32.partialorder %v2433, 8.507059e+37
    %v2435 = vand.u32 %v2376, 2147483648
    %v2436 = vor.u32 1.1754944e-38, %v2435
    %v2437 = vsel %vm2434, %v2436, %v2432
    %v2438 = vmul.f32 1.0, %v2437
    %v2439 = vrcp.pop %v2377
    %v2440 = vmul.f32 %v2377, %v2439
    %v2441 = vsub.f32 1.0, %v2440
    %v2442 = vmul.f32 %v2439, %v2441
    %v2443 = vadd.f32 %v2439, %v2442
    %vm2444 = vweird.f32 %v2377
    %vm2445 = vweird.f32 %v2439
    %vm2446 = vmor %vm2444, %vm2445
    %v2447 = vsel %vm2446, %v2439, %v2443
    %v2448 = vand.u32 2147483647, %v2377
    %vm2449 = vcmp.eq.f32.partialorder %v2448, 8.507059e+37
    %v2450 = vand.u32 %v2377, 2147483648
    %v2451 = vor.u32 1.1754944e-38, %v2450
    %v2452 = vsel %vm2449, %v2451, %v2447
    %v2453 = vmul.f32 1.0, %v2452
    %v2454 = vrcp.pop %v2378
    %v2455 = vmul.f32 %v2378, %v2454
    %v2456 = vsub.f32 1.0, %v2455
    %v2457 = vmul.f32 %v2454, %v2456
    %v2458 = vadd.f32 %v2454, %v2457
    %vm2459 = vweird.f32 %v2378
    %vm2460 = vweird.f32 %v2454
    %vm2461 = vmor %vm2459, %vm2460
    %v2462 = vsel %vm2461, %v2454, %v2458
    %v2463 = vand.u32 2147483647, %v2378
    %vm2464 = vcmp.eq.f32.partialorder %v2463, 8.507059e+37
    %v2465 = vand.u32 %v2378, 2147483648
    %v2466 = vor.u32 1.1754944e-38, %v2465
    %v2467 = vsel %vm2464, %v2466, %v2462
    %v2468 = vmul.f32 1.0, %v2467
    %v2469 = vmul.f32 %v2332, %v2393
    %v2470 = vmul.f32 %v2335, %v2408
    %v2471 = vmul.f32 %v2338, %v2423
    %v2472 = vmul.f32 %v2341, %v2438
    %v2473 = vmul.f32 %v2344, %v2453
    %v2474 = vmul.f32 %v2347, %v2468
    %v2475 = vld [vmem:[%s13] sm:$0xff]
    %v2476 = vld [vmem:[%s13 + $0x8] sm:$0xff]
    %v2477 = vld [vmem:[%s13 + $0x10] sm:$0xff]
    %v2478 = vld [vmem:[%s13 + $0x18] sm:$0xff]
    %v2479 = vld [vmem:[%s13 + $0x20] sm:$0xff]
    %v2480 = vld [vmem:[%s13 + $0x28] sm:$0xff]
    %v2481 = vld [vmem:[%s13 + $0x30] sm:$0xff]
    %v2482 = vld [vmem:[%s13 + $0x38] sm:$0xff]
    %v2483 = vld [vmem:[%s13 + $0x40] sm:$0xff]
    %v2484 = vld [vmem:[%s13 + $0x48] sm:$0xff]
    %v2485 = vld [vmem:[%s13 + $0x50] sm:$0xff]
    %v2486 = vld [vmem:[%s13 + $0x58] sm:$0xff]
    %v2487 = vld [vmem:[%s13 + $0x60] sm:$0xff]
    %v2488 = vld [vmem:[%s13 + $0x68] sm:$0xff]
    %v2489 = vld [vmem:[%s13 + $0x70] sm:$0xff]
    %v2490 = vld [vmem:[%s13 + $0x78] sm:$0xff]
    %v2491 = vld [vmem:[%s14] sm:$0x1]
    %v2493 = vperm.slane %v2491, 0
    %2495 = vmatpush.msra.mxu0 %v2490
    %2496 = vmatpush.msra.mxu0 %v2489
    %2497 = vmatpush.msra.mxu0 %v2488
    %2498 = vmatpush.msra.mxu0 %v2487
    %2499 = vmatpush.msra.mxu0 %v2486
    %2500 = vmatpush.msra.mxu0 %v2485
    %2501 = vmatpush.msra.mxu0 %v2484
    %2502 = vmatpush.msra.mxu0 %v2483
    %2503 = vmatpush.msra.mxu0 %v2482
    %2504 = vmatpush.msra.mxu0 %v2481
    %2505 = vmatpush.msra.mxu0 %v2480
    %2506 = vmatpush.msra.mxu0 %v2479
    %2507 = vmatpush.msra.mxu0 %v2478
    %2508 = vmatpush.msra.mxu0 %v2477
    %2509 = vmatpush.msra.mxu0 %v2476
    %2510 = vmatpush.msra.mxu0 %v2475
    %2511 = vmatmul.f32.gmra.mxu0 %v2469
    %v2512 = vpop.f32.mrf.mxu0
    %v2513 = vadd.f32 %v2493, %v2512
    %2514 = vmatmul.f32.gmra.mxu0 %v2470
    %v2515 = vpop.f32.mrf.mxu0
    %v2516 = vadd.f32 %v2493, %v2515
    %2517 = vmatmul.f32.gmra.mxu0 %v2471
    %v2518 = vpop.f32.mrf.mxu0
    %v2519 = vadd.f32 %v2493, %v2518
    %2520 = vmatmul.f32.gmra.mxu0 %v2472
    %v2521 = vpop.f32.mrf.mxu0
    %v2522 = vadd.f32 %v2493, %v2521
    %2523 = vmatmul.f32.gmra.mxu0 %v2473
    %v2524 = vpop.f32.mrf.mxu0
    %v2525 = vadd.f32 %v2493, %v2524
    %2526 = vmatmul.f32.gmra.mxu0 %v2474
    %v2527 = vpop.f32.mrf.mxu0
    %v2528 = vadd.f32 %v2493, %v2527
    %2529 = vdwg.mxu0
    %v2530 = vadd.f32 %v2135, %v2513
    %v2531 = vadd.f32 %v2136, %v2516
    %v2532 = vadd.f32 %v2137, %v2519
    %v2533 = vadd.f32 %v2138, %v2522
    %v2534 = vadd.f32 %v2139, %v2525
    %v2535 = vadd.f32 %v2140, %v2528
    %s2536 = scalar_lea.vmem %s5, 2
    %v2537 = vld [vmem:[%s2536] sm:$0x3]
    %v2538 = vsel %vm118, %v2530, 0.0
    %2539 = vadd.xlane.f32.xlu0 %v2538
    %v2540 = vpop.xlane.xlu0 %2539
    %v2541 = vsel %vm118, %v2531, 0.0
    %2542 = vadd.xlane.f32.xlu0 %v2541
    %v2543 = vpop.xlane.xlu0 %2542
    %v2544 = vsel %vm118, %v2532, 0.0
    %2545 = vadd.xlane.f32.xlu0 %v2544
    %v2546 = vpop.xlane.xlu0 %2545
    %v2547 = vsel %vm118, %v2533, 0.0
    %2548 = vadd.xlane.f32.xlu0 %v2547
    %v2549 = vpop.xlane.xlu0 %2548
    %v2550 = vsel %vm118, %v2534, 0.0
    %2551 = vadd.xlane.f32.xlu0 %v2550
    %v2552 = vpop.xlane.xlu0 %2551
    %v2553 = vsel %vm118, %v2535, 0.0
    %2554 = vadd.xlane.f32.xlu0 %v2553
    %v2555 = vpop.xlane.xlu0 %2554
    %v2556 = vmul.f32 %v2540, %v140
    %v2557 = vmul.f32 %v2543, %v140
    %v2558 = vmul.f32 %v2546, %v140
    %v2559 = vmul.f32 %v2549, %v140
    %v2560 = vmul.f32 %v2552, %v140
    %v2561 = vmul.f32 %v2555, %v140
    %v2562 = vsub.f32 %v2530, %v2556
    %v2563 = vsub.f32 %v2531, %v2557
    %v2564 = vsub.f32 %v2532, %v2558
    %v2565 = vsub.f32 %v2533, %v2559
    %v2566 = vsub.f32 %v2534, %v2560
    %v2567 = vsub.f32 %v2535, %v2561
    %v2568 = vmul.f32 %v2562, %v2562
    %v2569 = vmul.f32 %v2563, %v2563
    %v2570 = vmul.f32 %v2564, %v2564
    %v2571 = vmul.f32 %v2565, %v2565
    %v2572 = vmul.f32 %v2566, %v2566
    %v2573 = vmul.f32 %v2567, %v2567
    %v2574 = vsel %vm118, %v2568, 0.0
    %2575 = vadd.xlane.f32.xlu0 %v2574
    %v2576 = vpop.xlane.xlu0 %2575
    %v2577 = vsel %vm118, %v2569, 0.0
    %2578 = vadd.xlane.f32.xlu0 %v2577
    %v2579 = vpop.xlane.xlu0 %2578
    %v2580 = vsel %vm118, %v2570, 0.0
    %2581 = vadd.xlane.f32.xlu0 %v2580
    %v2582 = vpop.xlane.xlu0 %2581
    %v2583 = vsel %vm118, %v2571, 0.0
    %2584 = vadd.xlane.f32.xlu0 %v2583
    %v2585 = vpop.xlane.xlu0 %2584
    %v2586 = vsel %vm118, %v2572, 0.0
    %2587 = vadd.xlane.f32.xlu0 %v2586
    %v2588 = vpop.xlane.xlu0 %2587
    %v2589 = vsel %vm118, %v2573, 0.0
    %2590 = vadd.xlane.f32.xlu0 %v2589
    %v2591 = vpop.xlane.xlu0 %2590
    %v2592 = vmul.f32 %v2576, %v140
    %v2593 = vmul.f32 %v2579, %v140
    %v2594 = vmul.f32 %v2582, %v140
    %v2595 = vmul.f32 %v2585, %v140
    %v2596 = vmul.f32 %v2588, %v140
    %v2597 = vmul.f32 %v2591, %v140
    %v2598 = vadd.f32 %v2592, 1e-05
    %v2599 = vadd.f32 %v2593, 1e-05
    %v2600 = vadd.f32 %v2594, 1e-05
    %v2601 = vadd.f32 %v2595, 1e-05
    %v2602 = vadd.f32 %v2596, 1e-05
    %v2603 = vadd.f32 %v2597, 1e-05
    %v2604 = vrsqrt.pop %v2598
    %v2605 = vmul.f32 %v2604, %v2598
    %v2606 = vmul.f32 %v2605, %v2604
    %v2607 = vmul.f32 0.5, %v2606
    %v2608 = vsub.f32 1.5, %v2607
    %v2609 = vmul.f32 %v2604, %v2608
    %vm2610 = vweird.f32 %v2598
    %vm2611 = vweird.f32 %v2604
    %vm2612 = vmor %vm2610, %vm2611
    %v2613 = vsel %vm2612, %v2604, %v2609
    %v2614 = vrsqrt.pop %v2599
    %v2615 = vmul.f32 %v2614, %v2599
    %v2616 = vmul.f32 %v2615, %v2614
    %v2617 = vmul.f32 0.5, %v2616
    %v2618 = vsub.f32 1.5, %v2617
    %v2619 = vmul.f32 %v2614, %v2618
    %vm2620 = vweird.f32 %v2599
    %vm2621 = vweird.f32 %v2614
    %vm2622 = vmor %vm2620, %vm2621
    %v2623 = vsel %vm2622, %v2614, %v2619
    %v2624 = vrsqrt.pop %v2600
    %v2625 = vmul.f32 %v2624, %v2600
    %v2626 = vmul.f32 %v2625, %v2624
    %v2627 = vmul.f32 0.5, %v2626
    %v2628 = vsub.f32 1.5, %v2627
    %v2629 = vmul.f32 %v2624, %v2628
    %vm2630 = vweird.f32 %v2600
    %vm2631 = vweird.f32 %v2624
    %vm2632 = vmor %vm2630, %vm2631
    %v2633 = vsel %vm2632, %v2624, %v2629
    %v2634 = vrsqrt.pop %v2601
    %v2635 = vmul.f32 %v2634, %v2601
    %v2636 = vmul.f32 %v2635, %v2634
    %v2637 = vmul.f32 0.5, %v2636
    %v2638 = vsub.f32 1.5, %v2637
    %v2639 = vmul.f32 %v2634, %v2638
    %vm2640 = vweird.f32 %v2601
    %vm2641 = vweird.f32 %v2634
    %vm2642 = vmor %vm2640, %vm2641
    %v2643 = vsel %vm2642, %v2634, %v2639
    %v2644 = vrsqrt.pop %v2602
    %v2645 = vmul.f32 %v2644, %v2602
    %v2646 = vmul.f32 %v2645, %v2644
    %v2647 = vmul.f32 0.5, %v2646
    %v2648 = vsub.f32 1.5, %v2647
    %v2649 = vmul.f32 %v2644, %v2648
    %vm2650 = vweird.f32 %v2602
    %vm2651 = vweird.f32 %v2644
    %vm2652 = vmor %vm2650, %vm2651
    %v2653 = vsel %vm2652, %v2644, %v2649
    %v2654 = vrsqrt.pop %v2603
    %v2655 = vmul.f32 %v2654, %v2603
    %v2656 = vmul.f32 %v2655, %v2654
    %v2657 = vmul.f32 0.5, %v2656
    %v2658 = vsub.f32 1.5, %v2657
    %v2659 = vmul.f32 %v2654, %v2658
    %vm2660 = vweird.f32 %v2603
    %vm2661 = vweird.f32 %v2654
    %vm2662 = vmor %vm2660, %vm2661
    %v2663 = vsel %vm2662, %v2654, %v2659
    %v2664 = vmul.f32 %v2562, %v2613
    %v2665 = vmul.f32 %v2563, %v2623
    %v2666 = vmul.f32 %v2564, %v2633
    %v2667 = vmul.f32 %v2565, %v2643
    %v2668 = vmul.f32 %v2566, %v2653
    %v2669 = vmul.f32 %v2567, %v2663
    %v2670 = vperm.slane %v2537, 0
    %v2671 = vmul.f32 %v2664, %v2670
    %v2672 = vmul.f32 %v2665, %v2670
    %v2673 = vmul.f32 %v2666, %v2670
    %v2674 = vmul.f32 %v2667, %v2670
    %v2675 = vmul.f32 %v2668, %v2670
    %v2676 = vmul.f32 %v2669, %v2670
    %v2677 = vperm.slane %v2537, 1
    %v2678 = vadd.f32 %v2671, %v2677
    %v2679 = vadd.f32 %v2672, %v2677
    %v2680 = vadd.f32 %v2673, %v2677
    %v2681 = vadd.f32 %v2674, %v2677
    %v2682 = vadd.f32 %v2675, %v2677
    %v2683 = vadd.f32 %v2676, %v2677
    %s2684 = scalar_lea.vmem %s6, 384
    %v2685 = vld [vmem:[%s2684] sm:$0xff]
    %v2686 = vld [vmem:[%s2684 + $0x8] sm:$0xff]
    %v2687 = vld [vmem:[%s2684 + $0x10] sm:$0xff]
    %v2688 = vld [vmem:[%s2684 + $0x18] sm:$0xff]
    %s2689 = scalar_lea.vmem %s7, 12
    %v2690 = vld [vmem:[%s2689] sm:$0x1]
    %v2692 = vperm.slane %v2690, 0
    %v2695 = vsel %vm118, %v2678, 0
    %v2698 = vsel %vm118, %v2679, 0
    %v2701 = vsel %vm118, %v2680, 0
    %v2704 = vsel %vm118, %v2681, 0
    %v2707 = vsel %vm118, %v2682, 0
    %v2710 = vsel %vm118, %v2683, 0
    %2712 = vmatpush.msra.mxu0 0.0
    %2713 = vmatpush.msra.mxu0 0.0
    %2714 = vmatpush.msra.mxu0 0.0
    %2715 = vmatpush.msra.mxu0 0.0
    %2716 = vmatpush.msra.mxu0 0.0
    %2717 = vmatpush.msra.mxu0 0.0
    %2718 = vmatpush.msra.mxu0 0.0
    %2719 = vmatpush.msra.mxu0 0.0
    %2720 = vmatpush.msra.mxu0 0.0
    %2721 = vmatpush.msra.mxu0 0.0
    %2722 = vmatpush.msra.mxu0 0.0
    %2723 = vmatpush.msra.mxu0 0.0
    %2724 = vmatpush.msra.mxu0 %v2688
    %2725 = vmatpush.msra.mxu0 %v2687
    %2726 = vmatpush.msra.mxu0 %v2686
    %2727 = vmatpush.msra.mxu0 %v2685
    %2728 = vmatmul.f32.gmra.mxu0 %v2695
    %v2729 = vpop.f32.mrf.mxu0
    %v2730 = vadd.f32 %v2692, %v2729
    %2731 = vmatmul.f32.gmra.mxu0 %v2698
    %v2732 = vpop.f32.mrf.mxu0
    %v2733 = vadd.f32 %v2692, %v2732
    %2734 = vmatmul.f32.gmra.mxu0 %v2701
    %v2735 = vpop.f32.mrf.mxu0
    %v2736 = vadd.f32 %v2692, %v2735
    %2737 = vmatmul.f32.gmra.mxu0 %v2704
    %v2738 = vpop.f32.mrf.mxu0
    %v2739 = vadd.f32 %v2692, %v2738
    %2740 = vmatmul.f32.gmra.mxu0 %v2707
    %v2741 = vpop.f32.mrf.mxu0
    %v2742 = vadd.f32 %v2692, %v2741
    %2743 = vmatmul.f32.gmra.mxu0 %v2710
    %v2744 = vpop.f32.mrf.mxu0
    %v2745 = vadd.f32 %v2692, %v2744
    %2746 = vdwg.mxu0
    %s2747 = scalar_lea.vmem %s6, 512
    %v2748 = vld [vmem:[%s2747] sm:$0xff]
    %v2749 = vld [vmem:[%s2747 + $0x8] sm:$0xff]
    %v2750 = vld [vmem:[%s2747 + $0x10] sm:$0xff]
    %v2751 = vld [vmem:[%s2747 + $0x18] sm:$0xff]
    %s2752 = scalar_lea.vmem %s7, 16
    %v2753 = vld [vmem:[%s2752] sm:$0x1]
    %v2755 = vperm.slane %v2753, 0
    %2757 = vmatpush.msra.mxu0 0.0
    %2758 = vmatpush.msra.mxu0 0.0
    %2759 = vmatpush.msra.mxu0 0.0
    %2760 = vmatpush.msra.mxu0 0.0
    %2761 = vmatpush.msra.mxu0 0.0
    %2762 = vmatpush.msra.mxu0 0.0
    %2763 = vmatpush.msra.mxu0 0.0
    %2764 = vmatpush.msra.mxu0 0.0
    %2765 = vmatpush.msra.mxu0 0.0
    %2766 = vmatpush.msra.mxu0 0.0
    %2767 = vmatpush.msra.mxu0 0.0
    %2768 = vmatpush.msra.mxu0 0.0
    %2769 = vmatpush.msra.mxu0 %v2751
    %2770 = vmatpush.msra.mxu0 %v2750
    %2771 = vmatpush.msra.mxu0 %v2749
    %2772 = vmatpush.msra.mxu0 %v2748
    %2773 = vmatmul.f32.gmra.mxu0 %v2695
    %v2774 = vpop.f32.mrf.mxu0
    %v2775 = vadd.f32 %v2755, %v2774
    %2776 = vmatmul.f32.gmra.mxu0 %v2698
    %v2777 = vpop.f32.mrf.mxu0
    %v2778 = vadd.f32 %v2755, %v2777
    %2779 = vmatmul.f32.gmra.mxu0 %v2701
    %v2780 = vpop.f32.mrf.mxu0
    %v2781 = vadd.f32 %v2755, %v2780
    %2782 = vmatmul.f32.gmra.mxu0 %v2704
    %v2783 = vpop.f32.mrf.mxu0
    %v2784 = vadd.f32 %v2755, %v2783
    %2785 = vmatmul.f32.gmra.mxu0 %v2707
    %v2786 = vpop.f32.mrf.mxu0
    %v2787 = vadd.f32 %v2755, %v2786
    %2788 = vmatmul.f32.gmra.mxu0 %v2710
    %v2789 = vpop.f32.mrf.mxu0
    %v2790 = vadd.f32 %v2755, %v2789
    %2791 = vdwg.mxu0
    %s2792 = scalar_lea.vmem %s6, 640
    %v2793 = vld [vmem:[%s2792] sm:$0xff]
    %v2794 = vld [vmem:[%s2792 + $0x8] sm:$0xff]
    %v2795 = vld [vmem:[%s2792 + $0x10] sm:$0xff]
    %v2796 = vld [vmem:[%s2792 + $0x18] sm:$0xff]
    %s2797 = scalar_lea.vmem %s7, 20
    %v2798 = vld [vmem:[%s2797] sm:$0x1]
    %v2800 = vperm.slane %v2798, 0
    %2802 = vmatpush.msra.mxu0 0.0
    %2803 = vmatpush.msra.mxu0 0.0
    %2804 = vmatpush.msra.mxu0 0.0
    %2805 = vmatpush.msra.mxu0 0.0
    %2806 = vmatpush.msra.mxu0 0.0
    %2807 = vmatpush.msra.mxu0 0.0
    %2808 = vmatpush.msra.mxu0 0.0
    %2809 = vmatpush.msra.mxu0 0.0
    %2810 = vmatpush.msra.mxu0 0.0
    %2811 = vmatpush.msra.mxu0 0.0
    %2812 = vmatpush.msra.mxu0 0.0
    %2813 = vmatpush.msra.mxu0 0.0
    %2814 = vmatpush.msra.mxu0 %v2796
    %2815 = vmatpush.msra.mxu0 %v2795
    %2816 = vmatpush.msra.mxu0 %v2794
    %2817 = vmatpush.msra.mxu0 %v2793
    %2818 = vmatmul.f32.gmra.mxu0 %v2695
    %v2819 = vpop.f32.mrf.mxu0
    %v2820 = vadd.f32 %v2800, %v2819
    %2821 = vmatmul.f32.gmra.mxu0 %v2698
    %v2822 = vpop.f32.mrf.mxu0
    %v2823 = vadd.f32 %v2800, %v2822
    %2824 = vmatmul.f32.gmra.mxu0 %v2701
    %v2825 = vpop.f32.mrf.mxu0
    %v2826 = vadd.f32 %v2800, %v2825
    %2827 = vmatmul.f32.gmra.mxu0 %v2704
    %v2828 = vpop.f32.mrf.mxu0
    %v2829 = vadd.f32 %v2800, %v2828
    %2830 = vmatmul.f32.gmra.mxu0 %v2707
    %v2831 = vpop.f32.mrf.mxu0
    %v2832 = vadd.f32 %v2800, %v2831
    %2833 = vmatmul.f32.gmra.mxu0 %v2710
    %v2834 = vpop.f32.mrf.mxu0
    %v2835 = vadd.f32 %v2800, %v2834
    %2836 = vdwg.mxu0
    %s2837 = scalar_lea.vmem %s6, 416
    %v2838 = vld [vmem:[%s2837] sm:$0xff]
    %v2839 = vld [vmem:[%s2837 + $0x8] sm:$0xff]
    %v2840 = vld [vmem:[%s2837 + $0x10] sm:$0xff]
    %v2841 = vld [vmem:[%s2837 + $0x18] sm:$0xff]
    %s2842 = scalar_lea.vmem %s7, 13
    %v2843 = vld [vmem:[%s2842] sm:$0x1]
    %v2845 = vperm.slane %v2843, 0
    %2847 = vmatpush.msra.mxu0 0.0
    %2848 = vmatpush.msra.mxu0 0.0
    %2849 = vmatpush.msra.mxu0 0.0
    %2850 = vmatpush.msra.mxu0 0.0
    %2851 = vmatpush.msra.mxu0 0.0
    %2852 = vmatpush.msra.mxu0 0.0
    %2853 = vmatpush.msra.mxu0 0.0
    %2854 = vmatpush.msra.mxu0 0.0
    %2855 = vmatpush.msra.mxu0 0.0
    %2856 = vmatpush.msra.mxu0 0.0
    %2857 = vmatpush.msra.mxu0 0.0
    %2858 = vmatpush.msra.mxu0 0.0
    %2859 = vmatpush.msra.mxu0 %v2841
    %2860 = vmatpush.msra.mxu0 %v2840
    %2861 = vmatpush.msra.mxu0 %v2839
    %2862 = vmatpush.msra.mxu0 %v2838
    %2863 = vmatmul.f32.gmra.mxu0 %v2695
    %v2864 = vpop.f32.mrf.mxu0
    %v2865 = vadd.f32 %v2845, %v2864
    %2866 = vmatmul.f32.gmra.mxu0 %v2698
    %v2867 = vpop.f32.mrf.mxu0
    %v2868 = vadd.f32 %v2845, %v2867
    %2869 = vmatmul.f32.gmra.mxu0 %v2701
    %v2870 = vpop.f32.mrf.mxu0
    %v2871 = vadd.f32 %v2845, %v2870
    %2872 = vmatmul.f32.gmra.mxu0 %v2704
    %v2873 = vpop.f32.mrf.mxu0
    %v2874 = vadd.f32 %v2845, %v2873
    %2875 = vmatmul.f32.gmra.mxu0 %v2707
    %v2876 = vpop.f32.mrf.mxu0
    %v2877 = vadd.f32 %v2845, %v2876
    %2878 = vmatmul.f32.gmra.mxu0 %v2710
    %v2879 = vpop.f32.mrf.mxu0
    %v2880 = vadd.f32 %v2845, %v2879
    %2881 = vdwg.mxu0
    %s2882 = scalar_lea.vmem %s6, 544
    %v2883 = vld [vmem:[%s2882] sm:$0xff]
    %v2884 = vld [vmem:[%s2882 + $0x8] sm:$0xff]
    %v2885 = vld [vmem:[%s2882 + $0x10] sm:$0xff]
    %v2886 = vld [vmem:[%s2882 + $0x18] sm:$0xff]
    %s2887 = scalar_lea.vmem %s7, 17
    %v2888 = vld [vmem:[%s2887] sm:$0x1]
    %v2890 = vperm.slane %v2888, 0
    %2892 = vmatpush.msra.mxu0 0.0
    %2893 = vmatpush.msra.mxu0 0.0
    %2894 = vmatpush.msra.mxu0 0.0
    %2895 = vmatpush.msra.mxu0 0.0
    %2896 = vmatpush.msra.mxu0 0.0
    %2897 = vmatpush.msra.mxu0 0.0
    %2898 = vmatpush.msra.mxu0 0.0
    %2899 = vmatpush.msra.mxu0 0.0
    %2900 = vmatpush.msra.mxu0 0.0
    %2901 = vmatpush.msra.mxu0 0.0
    %2902 = vmatpush.msra.mxu0 0.0
    %2903 = vmatpush.msra.mxu0 0.0
    %2904 = vmatpush.msra.mxu0 %v2886
    %2905 = vmatpush.msra.mxu0 %v2885
    %2906 = vmatpush.msra.mxu0 %v2884
    %2907 = vmatpush.msra.mxu0 %v2883
    %2908 = vmatmul.f32.gmra.mxu0 %v2695
    %v2909 = vpop.f32.mrf.mxu0
    %v2910 = vadd.f32 %v2890, %v2909
    %2911 = vmatmul.f32.gmra.mxu0 %v2698
    %v2912 = vpop.f32.mrf.mxu0
    %v2913 = vadd.f32 %v2890, %v2912
    %2914 = vmatmul.f32.gmra.mxu0 %v2701
    %v2915 = vpop.f32.mrf.mxu0
    %v2916 = vadd.f32 %v2890, %v2915
    %2917 = vmatmul.f32.gmra.mxu0 %v2704
    %v2918 = vpop.f32.mrf.mxu0
    %v2919 = vadd.f32 %v2890, %v2918
    %2920 = vmatmul.f32.gmra.mxu0 %v2707
    %v2921 = vpop.f32.mrf.mxu0
    %v2922 = vadd.f32 %v2890, %v2921
    %2923 = vmatmul.f32.gmra.mxu0 %v2710
    %v2924 = vpop.f32.mrf.mxu0
    %v2925 = vadd.f32 %v2890, %v2924
    %2926 = vdwg.mxu0
    %s2927 = scalar_lea.vmem %s6, 672
    %v2928 = vld [vmem:[%s2927] sm:$0xff]
    %v2929 = vld [vmem:[%s2927 + $0x8] sm:$0xff]
    %v2930 = vld [vmem:[%s2927 + $0x10] sm:$0xff]
    %v2931 = vld [vmem:[%s2927 + $0x18] sm:$0xff]
    %s2932 = scalar_lea.vmem %s7, 21
    %v2933 = vld [vmem:[%s2932] sm:$0x1]
    %v2935 = vperm.slane %v2933, 0
    %2937 = vmatpush.msra.mxu0 0.0
    %2938 = vmatpush.msra.mxu0 0.0
    %2939 = vmatpush.msra.mxu0 0.0
    %2940 = vmatpush.msra.mxu0 0.0
    %2941 = vmatpush.msra.mxu0 0.0
    %2942 = vmatpush.msra.mxu0 0.0
    %2943 = vmatpush.msra.mxu0 0.0
    %2944 = vmatpush.msra.mxu0 0.0
    %2945 = vmatpush.msra.mxu0 0.0
    %2946 = vmatpush.msra.mxu0 0.0
    %2947 = vmatpush.msra.mxu0 0.0
    %2948 = vmatpush.msra.mxu0 0.0
    %2949 = vmatpush.msra.mxu0 %v2931
    %2950 = vmatpush.msra.mxu0 %v2930
    %2951 = vmatpush.msra.mxu0 %v2929
    %2952 = vmatpush.msra.mxu0 %v2928
    %2953 = vmatmul.f32.gmra.mxu0 %v2695
    %v2954 = vpop.f32.mrf.mxu0
    %v2955 = vadd.f32 %v2935, %v2954
    %2956 = vmatmul.f32.gmra.mxu0 %v2698
    %v2957 = vpop.f32.mrf.mxu0
    %v2958 = vadd.f32 %v2935, %v2957
    %2959 = vmatmul.f32.gmra.mxu0 %v2701
    %v2960 = vpop.f32.mrf.mxu0
    %v2961 = vadd.f32 %v2935, %v2960
    %2962 = vmatmul.f32.gmra.mxu0 %v2704
    %v2963 = vpop.f32.mrf.mxu0
    %v2964 = vadd.f32 %v2935, %v2963
    %2965 = vmatmul.f32.gmra.mxu0 %v2707
    %v2966 = vpop.f32.mrf.mxu0
    %v2967 = vadd.f32 %v2935, %v2966
    %2968 = vmatmul.f32.gmra.mxu0 %v2710
    %v2969 = vpop.f32.mrf.mxu0
    %v2970 = vadd.f32 %v2935, %v2969
    %2971 = vdwg.mxu0
    %s2972 = scalar_lea.vmem %s6, 448
    %v2973 = vld [vmem:[%s2972] sm:$0xff]
    %v2974 = vld [vmem:[%s2972 + $0x8] sm:$0xff]
    %v2975 = vld [vmem:[%s2972 + $0x10] sm:$0xff]
    %v2976 = vld [vmem:[%s2972 + $0x18] sm:$0xff]
    %s2977 = scalar_lea.vmem %s7, 14
    %v2978 = vld [vmem:[%s2977] sm:$0x1]
    %v2980 = vperm.slane %v2978, 0
    %2982 = vmatpush.msra.mxu0 0.0
    %2983 = vmatpush.msra.mxu0 0.0
    %2984 = vmatpush.msra.mxu0 0.0
    %2985 = vmatpush.msra.mxu0 0.0
    %2986 = vmatpush.msra.mxu0 0.0
    %2987 = vmatpush.msra.mxu0 0.0
    %2988 = vmatpush.msra.mxu0 0.0
    %2989 = vmatpush.msra.mxu0 0.0
    %2990 = vmatpush.msra.mxu0 0.0
    %2991 = vmatpush.msra.mxu0 0.0
    %2992 = vmatpush.msra.mxu0 0.0
    %2993 = vmatpush.msra.mxu0 0.0
    %2994 = vmatpush.msra.mxu0 %v2976
    %2995 = vmatpush.msra.mxu0 %v2975
    %2996 = vmatpush.msra.mxu0 %v2974
    %2997 = vmatpush.msra.mxu0 %v2973
    %2998 = vmatmul.f32.gmra.mxu0 %v2695
    %v2999 = vpop.f32.mrf.mxu0
    %v3000 = vadd.f32 %v2980, %v2999
    %3001 = vmatmul.f32.gmra.mxu0 %v2698
    %v3002 = vpop.f32.mrf.mxu0
    %v3003 = vadd.f32 %v2980, %v3002
    %3004 = vmatmul.f32.gmra.mxu0 %v2701
    %v3005 = vpop.f32.mrf.mxu0
    %v3006 = vadd.f32 %v2980, %v3005
    %3007 = vmatmul.f32.gmra.mxu0 %v2704
    %v3008 = vpop.f32.mrf.mxu0
    %v3009 = vadd.f32 %v2980, %v3008
    %3010 = vmatmul.f32.gmra.mxu0 %v2707
    %v3011 = vpop.f32.mrf.mxu0
    %v3012 = vadd.f32 %v2980, %v3011
    %3013 = vmatmul.f32.gmra.mxu0 %v2710
    %v3014 = vpop.f32.mrf.mxu0
    %v3015 = vadd.f32 %v2980, %v3014
    %3016 = vdwg.mxu0
    %s3017 = scalar_lea.vmem %s6, 576
    %v3018 = vld [vmem:[%s3017] sm:$0xff]
    %v3019 = vld [vmem:[%s3017 + $0x8] sm:$0xff]
    %v3020 = vld [vmem:[%s3017 + $0x10] sm:$0xff]
    %v3021 = vld [vmem:[%s3017 + $0x18] sm:$0xff]
    %s3022 = scalar_lea.vmem %s7, 18
    %v3023 = vld [vmem:[%s3022] sm:$0x1]
    %v3025 = vperm.slane %v3023, 0
    %3027 = vmatpush.msra.mxu0 0.0
    %3028 = vmatpush.msra.mxu0 0.0
    %3029 = vmatpush.msra.mxu0 0.0
    %3030 = vmatpush.msra.mxu0 0.0
    %3031 = vmatpush.msra.mxu0 0.0
    %3032 = vmatpush.msra.mxu0 0.0
    %3033 = vmatpush.msra.mxu0 0.0
    %3034 = vmatpush.msra.mxu0 0.0
    %3035 = vmatpush.msra.mxu0 0.0
    %3036 = vmatpush.msra.mxu0 0.0
    %3037 = vmatpush.msra.mxu0 0.0
    %3038 = vmatpush.msra.mxu0 0.0
    %3039 = vmatpush.msra.mxu0 %v3021
    %3040 = vmatpush.msra.mxu0 %v3020
    %3041 = vmatpush.msra.mxu0 %v3019
    %3042 = vmatpush.msra.mxu0 %v3018
    %3043 = vmatmul.f32.gmra.mxu0 %v2695
    %v3044 = vpop.f32.mrf.mxu0
    %v3045 = vadd.f32 %v3025, %v3044
    %3046 = vmatmul.f32.gmra.mxu0 %v2698
    %v3047 = vpop.f32.mrf.mxu0
    %v3048 = vadd.f32 %v3025, %v3047
    %3049 = vmatmul.f32.gmra.mxu0 %v2701
    %v3050 = vpop.f32.mrf.mxu0
    %v3051 = vadd.f32 %v3025, %v3050
    %3052 = vmatmul.f32.gmra.mxu0 %v2704
    %v3053 = vpop.f32.mrf.mxu0
    %v3054 = vadd.f32 %v3025, %v3053
    %3055 = vmatmul.f32.gmra.mxu0 %v2707
    %v3056 = vpop.f32.mrf.mxu0
    %v3057 = vadd.f32 %v3025, %v3056
    %3058 = vmatmul.f32.gmra.mxu0 %v2710
    %v3059 = vpop.f32.mrf.mxu0
    %v3060 = vadd.f32 %v3025, %v3059
    %3061 = vdwg.mxu0
    %s3062 = scalar_lea.vmem %s6, 704
    %v3063 = vld [vmem:[%s3062] sm:$0xff]
    %v3064 = vld [vmem:[%s3062 + $0x8] sm:$0xff]
    %v3065 = vld [vmem:[%s3062 + $0x10] sm:$0xff]
    %v3066 = vld [vmem:[%s3062 + $0x18] sm:$0xff]
    %s3067 = scalar_lea.vmem %s7, 22
    %v3068 = vld [vmem:[%s3067] sm:$0x1]
    %v3070 = vperm.slane %v3068, 0
    %3072 = vmatpush.msra.mxu0 0.0
    %3073 = vmatpush.msra.mxu0 0.0
    %3074 = vmatpush.msra.mxu0 0.0
    %3075 = vmatpush.msra.mxu0 0.0
    %3076 = vmatpush.msra.mxu0 0.0
    %3077 = vmatpush.msra.mxu0 0.0
    %3078 = vmatpush.msra.mxu0 0.0
    %3079 = vmatpush.msra.mxu0 0.0
    %3080 = vmatpush.msra.mxu0 0.0
    %3081 = vmatpush.msra.mxu0 0.0
    %3082 = vmatpush.msra.mxu0 0.0
    %3083 = vmatpush.msra.mxu0 0.0
    %3084 = vmatpush.msra.mxu0 %v3066
    %3085 = vmatpush.msra.mxu0 %v3065
    %3086 = vmatpush.msra.mxu0 %v3064
    %3087 = vmatpush.msra.mxu0 %v3063
    %3088 = vmatmul.f32.gmra.mxu0 %v2695
    %v3089 = vpop.f32.mrf.mxu0
    %v3090 = vadd.f32 %v3070, %v3089
    %3091 = vmatmul.f32.gmra.mxu0 %v2698
    %v3092 = vpop.f32.mrf.mxu0
    %v3093 = vadd.f32 %v3070, %v3092
    %3094 = vmatmul.f32.gmra.mxu0 %v2701
    %v3095 = vpop.f32.mrf.mxu0
    %v3096 = vadd.f32 %v3070, %v3095
    %3097 = vmatmul.f32.gmra.mxu0 %v2704
    %v3098 = vpop.f32.mrf.mxu0
    %v3099 = vadd.f32 %v3070, %v3098
    %3100 = vmatmul.f32.gmra.mxu0 %v2707
    %v3101 = vpop.f32.mrf.mxu0
    %v3102 = vadd.f32 %v3070, %v3101
    %3103 = vmatmul.f32.gmra.mxu0 %v2710
    %v3104 = vpop.f32.mrf.mxu0
    %v3105 = vadd.f32 %v3070, %v3104
    %3106 = vdwg.mxu0
    %s3107 = scalar_lea.vmem %s6, 480
    %v3108 = vld [vmem:[%s3107] sm:$0xff]
    %v3109 = vld [vmem:[%s3107 + $0x8] sm:$0xff]
    %v3110 = vld [vmem:[%s3107 + $0x10] sm:$0xff]
    %v3111 = vld [vmem:[%s3107 + $0x18] sm:$0xff]
    %s3112 = scalar_lea.vmem %s7, 15
    %v3113 = vld [vmem:[%s3112] sm:$0x1]
    %v3115 = vperm.slane %v3113, 0
    %3117 = vmatpush.msra.mxu0 0.0
    %3118 = vmatpush.msra.mxu0 0.0
    %3119 = vmatpush.msra.mxu0 0.0
    %3120 = vmatpush.msra.mxu0 0.0
    %3121 = vmatpush.msra.mxu0 0.0
    %3122 = vmatpush.msra.mxu0 0.0
    %3123 = vmatpush.msra.mxu0 0.0
    %3124 = vmatpush.msra.mxu0 0.0
    %3125 = vmatpush.msra.mxu0 0.0
    %3126 = vmatpush.msra.mxu0 0.0
    %3127 = vmatpush.msra.mxu0 0.0
    %3128 = vmatpush.msra.mxu0 0.0
    %3129 = vmatpush.msra.mxu0 %v3111
    %3130 = vmatpush.msra.mxu0 %v3110
    %3131 = vmatpush.msra.mxu0 %v3109
    %3132 = vmatpush.msra.mxu0 %v3108
    %3133 = vmatmul.f32.gmra.mxu0 %v2695
    %v3134 = vpop.f32.mrf.mxu0
    %v3135 = vadd.f32 %v3115, %v3134
    %3136 = vmatmul.f32.gmra.mxu0 %v2698
    %v3137 = vpop.f32.mrf.mxu0
    %v3138 = vadd.f32 %v3115, %v3137
    %3139 = vmatmul.f32.gmra.mxu0 %v2701
    %v3140 = vpop.f32.mrf.mxu0
    %v3141 = vadd.f32 %v3115, %v3140
    %3142 = vmatmul.f32.gmra.mxu0 %v2704
    %v3143 = vpop.f32.mrf.mxu0
    %v3144 = vadd.f32 %v3115, %v3143
    %3145 = vmatmul.f32.gmra.mxu0 %v2707
    %v3146 = vpop.f32.mrf.mxu0
    %v3147 = vadd.f32 %v3115, %v3146
    %3148 = vmatmul.f32.gmra.mxu0 %v2710
    %v3149 = vpop.f32.mrf.mxu0
    %v3150 = vadd.f32 %v3115, %v3149
    %3151 = vdwg.mxu0
    %s3152 = scalar_lea.vmem %s6, 608
    %v3153 = vld [vmem:[%s3152] sm:$0xff]
    %v3154 = vld [vmem:[%s3152 + $0x8] sm:$0xff]
    %v3155 = vld [vmem:[%s3152 + $0x10] sm:$0xff]
    %v3156 = vld [vmem:[%s3152 + $0x18] sm:$0xff]
    %s3157 = scalar_lea.vmem %s7, 19
    %v3158 = vld [vmem:[%s3157] sm:$0x1]
    %v3160 = vperm.slane %v3158, 0
    %3162 = vmatpush.msra.mxu0 0.0
    %3163 = vmatpush.msra.mxu0 0.0
    %3164 = vmatpush.msra.mxu0 0.0
    %3165 = vmatpush.msra.mxu0 0.0
    %3166 = vmatpush.msra.mxu0 0.0
    %3167 = vmatpush.msra.mxu0 0.0
    %3168 = vmatpush.msra.mxu0 0.0
    %3169 = vmatpush.msra.mxu0 0.0
    %3170 = vmatpush.msra.mxu0 0.0
    %3171 = vmatpush.msra.mxu0 0.0
    %3172 = vmatpush.msra.mxu0 0.0
    %3173 = vmatpush.msra.mxu0 0.0
    %3174 = vmatpush.msra.mxu0 %v3156
    %3175 = vmatpush.msra.mxu0 %v3155
    %3176 = vmatpush.msra.mxu0 %v3154
    %3177 = vmatpush.msra.mxu0 %v3153
    %3178 = vmatmul.f32.gmra.mxu0 %v2695
    %v3179 = vpop.f32.mrf.mxu0
    %v3180 = vadd.f32 %v3160, %v3179
    %3181 = vmatmul.f32.gmra.mxu0 %v2698
    %v3182 = vpop.f32.mrf.mxu0
    %v3183 = vadd.f32 %v3160, %v3182
    %3184 = vmatmul.f32.gmra.mxu0 %v2701
    %v3185 = vpop.f32.mrf.mxu0
    %v3186 = vadd.f32 %v3160, %v3185
    %3187 = vmatmul.f32.gmra.mxu0 %v2704
    %v3188 = vpop.f32.mrf.mxu0
    %v3189 = vadd.f32 %v3160, %v3188
    %3190 = vmatmul.f32.gmra.mxu0 %v2707
    %v3191 = vpop.f32.mrf.mxu0
    %v3192 = vadd.f32 %v3160, %v3191
    %3193 = vmatmul.f32.gmra.mxu0 %v2710
    %v3194 = vpop.f32.mrf.mxu0
    %v3195 = vadd.f32 %v3160, %v3194
    %3196 = vdwg.mxu0
    %s3197 = scalar_lea.vmem %s6, 736
    %v3198 = vld [vmem:[%s3197] sm:$0xff]
    %v3199 = vld [vmem:[%s3197 + $0x8] sm:$0xff]
    %v3200 = vld [vmem:[%s3197 + $0x10] sm:$0xff]
    %v3201 = vld [vmem:[%s3197 + $0x18] sm:$0xff]
    %s3202 = scalar_lea.vmem %s7, 23
    %v3203 = vld [vmem:[%s3202] sm:$0x1]
    %v3205 = vperm.slane %v3203, 0
    %3207 = vmatpush.msra.mxu0 0.0
    %3208 = vmatpush.msra.mxu0 0.0
    %3209 = vmatpush.msra.mxu0 0.0
    %3210 = vmatpush.msra.mxu0 0.0
    %3211 = vmatpush.msra.mxu0 0.0
    %3212 = vmatpush.msra.mxu0 0.0
    %3213 = vmatpush.msra.mxu0 0.0
    %3214 = vmatpush.msra.mxu0 0.0
    %3215 = vmatpush.msra.mxu0 0.0
    %3216 = vmatpush.msra.mxu0 0.0
    %3217 = vmatpush.msra.mxu0 0.0
    %3218 = vmatpush.msra.mxu0 0.0
    %3219 = vmatpush.msra.mxu0 %v3201
    %3220 = vmatpush.msra.mxu0 %v3200
    %3221 = vmatpush.msra.mxu0 %v3199
    %3222 = vmatpush.msra.mxu0 %v3198
    %3223 = vmatmul.f32.gmra.mxu0 %v2695
    %v3224 = vpop.f32.mrf.mxu0
    %v3225 = vadd.f32 %v3205, %v3224
    %3226 = vmatmul.f32.gmra.mxu0 %v2698
    %v3227 = vpop.f32.mrf.mxu0
    %v3228 = vadd.f32 %v3205, %v3227
    %3229 = vmatmul.f32.gmra.mxu0 %v2701
    %v3230 = vpop.f32.mrf.mxu0
    %v3231 = vadd.f32 %v3205, %v3230
    %3232 = vmatmul.f32.gmra.mxu0 %v2704
    %v3233 = vpop.f32.mrf.mxu0
    %v3234 = vadd.f32 %v3205, %v3233
    %3235 = vmatmul.f32.gmra.mxu0 %v2707
    %v3236 = vpop.f32.mrf.mxu0
    %v3237 = vadd.f32 %v3205, %v3236
    %3238 = vmatmul.f32.gmra.mxu0 %v2710
    %v3239 = vpop.f32.mrf.mxu0
    %v3240 = vadd.f32 %v3205, %v3239
    %3241 = vdwg.mxu0
    %v3243 = vsel %vm928, %v2730, 0
    %v3246 = vsel %vm928, %v2733, 0
    %v3249 = vsel %vm928, %v2736, 0
    %v3252 = vsel %vm928, %v2775, 0
    %v3255 = vsel %vm928, %v2778, 0
    %v3258 = vsel %vm928, %v2781, 0
    %3260 = vmatpush.xpose.msra.mxu0 0.0
    %3261 = vmatpush.xpose.msra.mxu0 0.0
    %3262 = vmatpush.xpose.msra.mxu0 0.0
    %3263 = vmatpush.xpose.msra.mxu0 0.0
    %3264 = vmatpush.xpose.msra.mxu0 0.0
    %3265 = vmatpush.xpose.msra.mxu0 0.0
    %3266 = vmatpush.xpose.msra.mxu0 0.0
    %3267 = vmatpush.xpose.msra.mxu0 0.0
    %3268 = vmatpush.xpose.msra.mxu0 0.0
    %3269 = vmatpush.xpose.msra.mxu0 0.0
    %3270 = vmatpush.xpose.msra.mxu0 0.0
    %3271 = vmatpush.xpose.msra.mxu0 0.0
    %3272 = vmatpush.xpose.msra.mxu0 0.0
    %3273 = vmatpush.xpose.msra.mxu0 %v3258
    %3274 = vmatpush.xpose.msra.mxu0 %v3255
    %3275 = vmatpush.xpose.msra.mxu0 %v3252
    %3276 = vmatmul.f32.gmra.mxu0 %v3243
    %v3277 = vpop.f32.mrf.mxu0
    %v3278 = vadd.f32 %v251, %v3277
    %3279 = vmatmul.f32.gmra.mxu0 %v3246
    %v3280 = vpop.f32.mrf.mxu0
    %v3281 = vadd.f32 %v251, %v3280
    %3282 = vmatmul.f32.gmra.mxu0 %v3249
    %v3283 = vpop.f32.mrf.mxu0
    %v3284 = vadd.f32 %v251, %v3283
    %3285 = vdwg.mxu0
    %v3286 = vsel %vm973, %v3278, -inf
    %3287 = vmax.xlane.f32.xlu0 %v3286
    %v3288 = vpop.xlane.xlu0 %3287
    %v3289 = vsel %vm973, %v3281, -inf
    %3290 = vmax.xlane.f32.xlu0 %v3289
    %v3291 = vpop.xlane.xlu0 %3290
    %v3292 = vsel %vm973, %v3284, -inf
    %3293 = vmax.xlane.f32.xlu0 %v3292
    %v3294 = vpop.xlane.xlu0 %3293
    %v3295 = vsub.f32 %v3278, %v3288
    %v3296 = vsub.f32 %v3281, %v3291
    %v3297 = vsub.f32 %v3284, %v3294
    %v3298 = vmul.f32 %v3295, 1.442695
    %v3299 = vpow.pop %v3298
    %v3300 = vmul.f32 %v3296, 1.442695
    %v3301 = vpow.pop %v3300
    %v3302 = vmul.f32 %v3297, 1.442695
    %v3303 = vpow.pop %v3302
    %v3304 = vsel %vm973, %v3299, 0.0
    %3305 = vadd.xlane.f32.xlu0 %v3304
    %v3306 = vpop.xlane.xlu0 %3305
    %v3307 = vsel %vm973, %v3301, 0.0
    %3308 = vadd.xlane.f32.xlu0 %v3307
    %v3309 = vpop.xlane.xlu0 %3308
    %v3310 = vsel %vm973, %v3303, 0.0
    %3311 = vadd.xlane.f32.xlu0 %v3310
    %v3312 = vpop.xlane.xlu0 %3311
    %v3313 = vrcp.pop %v3306
    %v3314 = vrcp.pop %v3309
    %v3315 = vrcp.pop %v3312
    %v3316 = vmul.f32 %v3299, %v3313
    %v3317 = vmul.f32 %v3301, %v3314
    %v3318 = vmul.f32 %v3303, %v3315
    %v3320 = vsel %vm973, %v3316, 0
    %v3323 = vsel %vm973, %v3317, 0
    %v3326 = vsel %vm973, %v3318, 0
    %3328 = vmatpush.msra.mxu0 0.0
    %3329 = vmatpush.msra.mxu0 0.0
    %3330 = vmatpush.msra.mxu0 0.0
    %3331 = vmatpush.msra.mxu0 0.0
    %3332 = vmatpush.msra.mxu0 0.0
    %3333 = vmatpush.msra.mxu0 0.0
    %3334 = vmatpush.msra.mxu0 0.0
    %3335 = vmatpush.msra.mxu0 0.0
    %3336 = vmatpush.msra.mxu0 0.0
    %3337 = vmatpush.msra.mxu0 0.0
    %3338 = vmatpush.msra.mxu0 0.0
    %3339 = vmatpush.msra.mxu0 0.0
    %3340 = vmatpush.msra.mxu0 0.0
    %3341 = vmatpush.msra.mxu0 %v2826
    %3342 = vmatpush.msra.mxu0 %v2823
    %3343 = vmatpush.msra.mxu0 %v2820
    %3344 = vmatmul.f32.gmra.mxu0 %v3320
    %v3345 = vpop.f32.mrf.mxu0
    %v3346 = vadd.f32 0.0, %v3345
    %3347 = vmatmul.f32.gmra.mxu0 %v3323
    %v3348 = vpop.f32.mrf.mxu0
    %v3349 = vadd.f32 0.0, %v3348
    %3350 = vmatmul.f32.gmra.mxu0 %v3326
    %v3351 = vpop.f32.mrf.mxu0
    %v3352 = vadd.f32 0.0, %v3351
    %3353 = vdwg.mxu0
    %s3354 = scalar_lea.vmem %s8, 32
    %v3355 = vld [vmem:[%s3354] sm:$0xff]
    %v3357 = vsel %vm928, %v2865, 0
    %v3360 = vsel %vm928, %v2868, 0
    %v3363 = vsel %vm928, %v2871, 0
    %v3366 = vsel %vm928, %v2910, 0
    %v3369 = vsel %vm928, %v2913, 0
    %v3372 = vsel %vm928, %v2916, 0
    %3374 = vmatpush.xpose.msra.mxu0 0.0
    %3375 = vmatpush.xpose.msra.mxu0 0.0
    %3376 = vmatpush.xpose.msra.mxu0 0.0
    %3377 = vmatpush.xpose.msra.mxu0 0.0
    %3378 = vmatpush.xpose.msra.mxu0 0.0
    %3379 = vmatpush.xpose.msra.mxu0 0.0
    %3380 = vmatpush.xpose.msra.mxu0 0.0
    %3381 = vmatpush.xpose.msra.mxu0 0.0
    %3382 = vmatpush.xpose.msra.mxu0 0.0
    %3383 = vmatpush.xpose.msra.mxu0 0.0
    %3384 = vmatpush.xpose.msra.mxu0 0.0
    %3385 = vmatpush.xpose.msra.mxu0 0.0
    %3386 = vmatpush.xpose.msra.mxu0 0.0
    %3387 = vmatpush.xpose.msra.mxu0 %v3372
    %3388 = vmatpush.xpose.msra.mxu0 %v3369
    %3389 = vmatpush.xpose.msra.mxu0 %v3366
    %3390 = vmatmul.f32.gmra.mxu0 %v3357
    %v3391 = vpop.f32.mrf.mxu0
    %v3392 = vadd.f32 %v251, %v3391
    %3393 = vmatmul.f32.gmra.mxu0 %v3360
    %v3394 = vpop.f32.mrf.mxu0
    %v3395 = vadd.f32 %v251, %v3394
    %3396 = vmatmul.f32.gmra.mxu0 %v3363
    %v3397 = vpop.f32.mrf.mxu0
    %v3398 = vadd.f32 %v251, %v3397
    %3399 = vdwg.mxu0
    %v3400 = vsel %vm973, %v3392, -inf
    %3401 = vmax.xlane.f32.xlu0 %v3400
    %v3402 = vpop.xlane.xlu0 %3401
    %v3403 = vsel %vm973, %v3395, -inf
    %3404 = vmax.xlane.f32.xlu0 %v3403
    %v3405 = vpop.xlane.xlu0 %3404
    %v3406 = vsel %vm973, %v3398, -inf
    %3407 = vmax.xlane.f32.xlu0 %v3406
    %v3408 = vpop.xlane.xlu0 %3407
    %v3409 = vsub.f32 %v3392, %v3402
    %v3410 = vsub.f32 %v3395, %v3405
    %v3411 = vsub.f32 %v3398, %v3408
    %v3412 = vmul.f32 %v3409, 1.442695
    %v3413 = vpow.pop %v3412
    %v3414 = vmul.f32 %v3410, 1.442695
    %v3415 = vpow.pop %v3414
    %v3416 = vmul.f32 %v3411, 1.442695
    %v3417 = vpow.pop %v3416
    %v3418 = vsel %vm973, %v3413, 0.0
    %3419 = vadd.xlane.f32.xlu0 %v3418
    %v3420 = vpop.xlane.xlu0 %3419
    %v3421 = vsel %vm973, %v3415, 0.0
    %3422 = vadd.xlane.f32.xlu0 %v3421
    %v3423 = vpop.xlane.xlu0 %3422
    %v3424 = vsel %vm973, %v3417, 0.0
    %3425 = vadd.xlane.f32.xlu0 %v3424
    %v3426 = vpop.xlane.xlu0 %3425
    %v3427 = vrcp.pop %v3420
    %v3428 = vrcp.pop %v3423
    %v3429 = vrcp.pop %v3426
    %v3430 = vmul.f32 %v3413, %v3427
    %v3431 = vmul.f32 %v3415, %v3428
    %v3432 = vmul.f32 %v3417, %v3429
    %v3434 = vsel %vm973, %v3430, 0
    %v3437 = vsel %vm973, %v3431, 0
    %v3440 = vsel %vm973, %v3432, 0
    %3442 = vmatpush.msra.mxu0 0.0
    %3443 = vmatpush.msra.mxu0 0.0
    %3444 = vmatpush.msra.mxu0 0.0
    %3445 = vmatpush.msra.mxu0 0.0
    %3446 = vmatpush.msra.mxu0 0.0
    %3447 = vmatpush.msra.mxu0 0.0
    %3448 = vmatpush.msra.mxu0 0.0
    %3449 = vmatpush.msra.mxu0 0.0
    %3450 = vmatpush.msra.mxu0 0.0
    %3451 = vmatpush.msra.mxu0 0.0
    %3452 = vmatpush.msra.mxu0 0.0
    %3453 = vmatpush.msra.mxu0 0.0
    %3454 = vmatpush.msra.mxu0 0.0
    %3455 = vmatpush.msra.mxu0 %v2961
    %3456 = vmatpush.msra.mxu0 %v2958
    %3457 = vmatpush.msra.mxu0 %v2955
    %3458 = vmatmul.f32.gmra.mxu0 %v3434
    %v3459 = vpop.f32.mrf.mxu0
    %v3460 = vadd.f32 0.0, %v3459
    %3461 = vmatmul.f32.gmra.mxu0 %v3437
    %v3462 = vpop.f32.mrf.mxu0
    %v3463 = vadd.f32 0.0, %v3462
    %3464 = vmatmul.f32.gmra.mxu0 %v3440
    %v3465 = vpop.f32.mrf.mxu0
    %v3466 = vadd.f32 0.0, %v3465
    %3467 = vdwg.mxu0
    %s3468 = scalar_lea.vmem %s8, 40
    %v3469 = vld [vmem:[%s3468] sm:$0xff]
    %v3471 = vsel %vm928, %v3460, 0
    %v3474 = vsel %vm928, %v3463, 0
    %v3477 = vsel %vm928, %v3466, 0
    %3479 = vmatpush.msra.mxu0 0.0
    %3480 = vmatpush.msra.mxu0 0.0
    %3481 = vmatpush.msra.mxu0 0.0
    %3482 = vmatpush.msra.mxu0 0.0
    %3483 = vmatpush.msra.mxu0 0.0
    %3484 = vmatpush.msra.mxu0 0.0
    %3485 = vmatpush.msra.mxu0 0.0
    %3486 = vmatpush.msra.mxu0 0.0
    %3487 = vmatpush.msra.mxu0 0.0
    %3488 = vmatpush.msra.mxu0 0.0
    %3489 = vmatpush.msra.mxu0 0.0
    %3490 = vmatpush.msra.mxu0 0.0
    %3491 = vmatpush.msra.mxu0 0.0
    %3492 = vmatpush.msra.mxu0 0.0
    %3493 = vmatpush.msra.mxu0 0.0
    %3494 = vmatpush.msra.mxu0 %v3469
    %3495 = vmatmul.f32.gmra.mxu0 %v3471
    %v3496 = vpop.f32.mrf.mxu0
    %v3497 = vadd.f32 0.0, %v3496
    %3498 = vmatmul.f32.gmra.mxu0 %v3474
    %v3499 = vpop.f32.mrf.mxu0
    %v3500 = vadd.f32 0.0, %v3499
    %3501 = vmatmul.f32.gmra.mxu0 %v3477
    %v3502 = vpop.f32.mrf.mxu0
    %v3503 = vadd.f32 0.0, %v3502
    %3504 = vdwg.mxu0
    %v3506 = vsel %vm928, %v3346, 0
    %v3509 = vsel %vm928, %v3349, 0
    %v3512 = vsel %vm928, %v3352, 0
    %3514 = vmatpush.msra.mxu0 0.0
    %3515 = vmatpush.msra.mxu0 0.0
    %3516 = vmatpush.msra.mxu0 0.0
    %3517 = vmatpush.msra.mxu0 0.0
    %3518 = vmatpush.msra.mxu0 0.0
    %3519 = vmatpush.msra.mxu0 0.0
    %3520 = vmatpush.msra.mxu0 0.0
    %3521 = vmatpush.msra.mxu0 0.0
    %3522 = vmatpush.msra.mxu0 0.0
    %3523 = vmatpush.msra.mxu0 0.0
    %3524 = vmatpush.msra.mxu0 0.0
    %3525 = vmatpush.msra.mxu0 0.0
    %3526 = vmatpush.msra.mxu0 0.0
    %3527 = vmatpush.msra.mxu0 0.0
    %3528 = vmatpush.msra.mxu0 0.0
    %3529 = vmatpush.msra.mxu0 %v3355
    %3530 = vmatmul.f32.gmra.mxu0 %v3506
    %v3531 = vpop.f32.mrf.mxu0
    %v3532 = vadd.f32 %v3497, %v3531
    %3533 = vmatmul.f32.gmra.mxu0 %v3509
    %v3534 = vpop.f32.mrf.mxu0
    %v3535 = vadd.f32 %v3500, %v3534
    %3536 = vmatmul.f32.gmra.mxu0 %v3512
    %v3537 = vpop.f32.mrf.mxu0
    %v3538 = vadd.f32 %v3503, %v3537
    %3539 = vdwg.mxu0
    %v3541 = vsel %vm928, %v3000, 0
    %v3544 = vsel %vm928, %v3003, 0
    %v3547 = vsel %vm928, %v3006, 0
    %v3550 = vsel %vm928, %v3045, 0
    %v3553 = vsel %vm928, %v3048, 0
    %v3556 = vsel %vm928, %v3051, 0
    %3558 = vmatpush.xpose.msra.mxu0 0.0
    %3559 = vmatpush.xpose.msra.mxu0 0.0
    %3560 = vmatpush.xpose.msra.mxu0 0.0
    %3561 = vmatpush.xpose.msra.mxu0 0.0
    %3562 = vmatpush.xpose.msra.mxu0 0.0
    %3563 = vmatpush.xpose.msra.mxu0 0.0
    %3564 = vmatpush.xpose.msra.mxu0 0.0
    %3565 = vmatpush.xpose.msra.mxu0 0.0
    %3566 = vmatpush.xpose.msra.mxu0 0.0
    %3567 = vmatpush.xpose.msra.mxu0 0.0
    %3568 = vmatpush.xpose.msra.mxu0 0.0
    %3569 = vmatpush.xpose.msra.mxu0 0.0
    %3570 = vmatpush.xpose.msra.mxu0 0.0
    %3571 = vmatpush.xpose.msra.mxu0 %v3556
    %3572 = vmatpush.xpose.msra.mxu0 %v3553
    %3573 = vmatpush.xpose.msra.mxu0 %v3550
    %3574 = vmatmul.f32.gmra.mxu0 %v3541
    %v3575 = vpop.f32.mrf.mxu0
    %v3576 = vadd.f32 %v251, %v3575
    %3577 = vmatmul.f32.gmra.mxu0 %v3544
    %v3578 = vpop.f32.mrf.mxu0
    %v3579 = vadd.f32 %v251, %v3578
    %3580 = vmatmul.f32.gmra.mxu0 %v3547
    %v3581 = vpop.f32.mrf.mxu0
    %v3582 = vadd.f32 %v251, %v3581
    %3583 = vdwg.mxu0
    %v3584 = vsel %vm973, %v3576, -inf
    %3585 = vmax.xlane.f32.xlu0 %v3584
    %v3586 = vpop.xlane.xlu0 %3585
    %v3587 = vsel %vm973, %v3579, -inf
    %3588 = vmax.xlane.f32.xlu0 %v3587
    %v3589 = vpop.xlane.xlu0 %3588
    %v3590 = vsel %vm973, %v3582, -inf
    %3591 = vmax.xlane.f32.xlu0 %v3590
    %v3592 = vpop.xlane.xlu0 %3591
    %v3593 = vsub.f32 %v3576, %v3586
    %v3594 = vsub.f32 %v3579, %v3589
    %v3595 = vsub.f32 %v3582, %v3592
    %v3596 = vmul.f32 %v3593, 1.442695
    %v3597 = vpow.pop %v3596
    %v3598 = vmul.f32 %v3594, 1.442695
    %v3599 = vpow.pop %v3598
    %v3600 = vmul.f32 %v3595, 1.442695
    %v3601 = vpow.pop %v3600
    %v3602 = vsel %vm973, %v3597, 0.0
    %3603 = vadd.xlane.f32.xlu0 %v3602
    %v3604 = vpop.xlane.xlu0 %3603
    %v3605 = vsel %vm973, %v3599, 0.0
    %3606 = vadd.xlane.f32.xlu0 %v3605
    %v3607 = vpop.xlane.xlu0 %3606
    %v3608 = vsel %vm973, %v3601, 0.0
    %3609 = vadd.xlane.f32.xlu0 %v3608
    %v3610 = vpop.xlane.xlu0 %3609
    %v3611 = vrcp.pop %v3604
    %v3612 = vrcp.pop %v3607
    %v3613 = vrcp.pop %v3610
    %v3614 = vmul.f32 %v3597, %v3611
    %v3615 = vmul.f32 %v3599, %v3612
    %v3616 = vmul.f32 %v3601, %v3613
    %v3618 = vsel %vm973, %v3614, 0
    %v3621 = vsel %vm973, %v3615, 0
    %v3624 = vsel %vm973, %v3616, 0
    %3626 = vmatpush.msra.mxu0 0.0
    %3627 = vmatpush.msra.mxu0 0.0
    %3628 = vmatpush.msra.mxu0 0.0
    %3629 = vmatpush.msra.mxu0 0.0
    %3630 = vmatpush.msra.mxu0 0.0
    %3631 = vmatpush.msra.mxu0 0.0
    %3632 = vmatpush.msra.mxu0 0.0
    %3633 = vmatpush.msra.mxu0 0.0
    %3634 = vmatpush.msra.mxu0 0.0
    %3635 = vmatpush.msra.mxu0 0.0
    %3636 = vmatpush.msra.mxu0 0.0
    %3637 = vmatpush.msra.mxu0 0.0
    %3638 = vmatpush.msra.mxu0 0.0
    %3639 = vmatpush.msra.mxu0 %v3096
    %3640 = vmatpush.msra.mxu0 %v3093
    %3641 = vmatpush.msra.mxu0 %v3090
    %3642 = vmatmul.f32.gmra.mxu0 %v3618
    %v3643 = vpop.f32.mrf.mxu0
    %v3644 = vadd.f32 0.0, %v3643
    %3645 = vmatmul.f32.gmra.mxu0 %v3621
    %v3646 = vpop.f32.mrf.mxu0
    %v3647 = vadd.f32 0.0, %v3646
    %3648 = vmatmul.f32.gmra.mxu0 %v3624
    %v3649 = vpop.f32.mrf.mxu0
    %v3650 = vadd.f32 0.0, %v3649
    %3651 = vdwg.mxu0
    %s3652 = scalar_lea.vmem %s8, 48
    %v3653 = vld [vmem:[%s3652] sm:$0xff]
    %v3655 = vsel %vm928, %v3644, 0
    %v3658 = vsel %vm928, %v3647, 0
    %v3661 = vsel %vm928, %v3650, 0
    %3663 = vmatpush.msra.mxu0 0.0
    %3664 = vmatpush.msra.mxu0 0.0
    %3665 = vmatpush.msra.mxu0 0.0
    %3666 = vmatpush.msra.mxu0 0.0
    %3667 = vmatpush.msra.mxu0 0.0
    %3668 = vmatpush.msra.mxu0 0.0
    %3669 = vmatpush.msra.mxu0 0.0
    %3670 = vmatpush.msra.mxu0 0.0
    %3671 = vmatpush.msra.mxu0 0.0
    %3672 = vmatpush.msra.mxu0 0.0
    %3673 = vmatpush.msra.mxu0 0.0
    %3674 = vmatpush.msra.mxu0 0.0
    %3675 = vmatpush.msra.mxu0 0.0
    %3676 = vmatpush.msra.mxu0 0.0
    %3677 = vmatpush.msra.mxu0 0.0
    %3678 = vmatpush.msra.mxu0 %v3653
    %3679 = vmatmul.f32.gmra.mxu0 %v3655
    %v3680 = vpop.f32.mrf.mxu0
    %v3681 = vadd.f32 0.0, %v3680
    %3682 = vmatmul.f32.gmra.mxu0 %v3658
    %v3683 = vpop.f32.mrf.mxu0
    %v3684 = vadd.f32 0.0, %v3683
    %3685 = vmatmul.f32.gmra.mxu0 %v3661
    %v3686 = vpop.f32.mrf.mxu0
    %v3687 = vadd.f32 0.0, %v3686
    %3688 = vdwg.mxu0
    %v3689 = vadd.f32 %v3532, %v3681
    %v3690 = vadd.f32 %v3535, %v3684
    %v3691 = vadd.f32 %v3538, %v3687
    %v3693 = vsel %vm928, %v3135, 0
    %v3696 = vsel %vm928, %v3138, 0
    %v3699 = vsel %vm928, %v3141, 0
    %v3702 = vsel %vm928, %v3180, 0
    %v3705 = vsel %vm928, %v3183, 0
    %v3708 = vsel %vm928, %v3186, 0
    %3710 = vmatpush.xpose.msra.mxu0 0.0
    %3711 = vmatpush.xpose.msra.mxu0 0.0
    %3712 = vmatpush.xpose.msra.mxu0 0.0
    %3713 = vmatpush.xpose.msra.mxu0 0.0
    %3714 = vmatpush.xpose.msra.mxu0 0.0
    %3715 = vmatpush.xpose.msra.mxu0 0.0
    %3716 = vmatpush.xpose.msra.mxu0 0.0
    %3717 = vmatpush.xpose.msra.mxu0 0.0
    %3718 = vmatpush.xpose.msra.mxu0 0.0
    %3719 = vmatpush.xpose.msra.mxu0 0.0
    %3720 = vmatpush.xpose.msra.mxu0 0.0
    %3721 = vmatpush.xpose.msra.mxu0 0.0
    %3722 = vmatpush.xpose.msra.mxu0 0.0
    %3723 = vmatpush.xpose.msra.mxu0 %v3708
    %3724 = vmatpush.xpose.msra.mxu0 %v3705
    %3725 = vmatpush.xpose.msra.mxu0 %v3702
    %3726 = vmatmul.f32.gmra.mxu0 %v3693
    %v3727 = vpop.f32.mrf.mxu0
    %v3728 = vadd.f32 %v251, %v3727
    %3729 = vmatmul.f32.gmra.mxu0 %v3696
    %v3730 = vpop.f32.mrf.mxu0
    %v3731 = vadd.f32 %v251, %v3730
    %3732 = vmatmul.f32.gmra.mxu0 %v3699
    %v3733 = vpop.f32.mrf.mxu0
    %v3734 = vadd.f32 %v251, %v3733
    %3735 = vdwg.mxu0
    %v3736 = vsel %vm973, %v3728, -inf
    %3737 = vmax.xlane.f32.xlu0 %v3736
    %v3738 = vpop.xlane.xlu0 %3737
    %v3739 = vsel %vm973, %v3731, -inf
    %3740 = vmax.xlane.f32.xlu0 %v3739
    %v3741 = vpop.xlane.xlu0 %3740
    %v3742 = vsel %vm973, %v3734, -inf
    %3743 = vmax.xlane.f32.xlu0 %v3742
    %v3744 = vpop.xlane.xlu0 %3743
    %v3745 = vsub.f32 %v3728, %v3738
    %v3746 = vsub.f32 %v3731, %v3741
    %v3747 = vsub.f32 %v3734, %v3744
    %v3748 = vmul.f32 %v3745, 1.442695
    %v3749 = vpow.pop %v3748
    %v3750 = vmul.f32 %v3746, 1.442695
    %v3751 = vpow.pop %v3750
    %v3752 = vmul.f32 %v3747, 1.442695
    %v3753 = vpow.pop %v3752
    %v3754 = vsel %vm973, %v3749, 0.0
    %3755 = vadd.xlane.f32.xlu0 %v3754
    %v3756 = vpop.xlane.xlu0 %3755
    %v3757 = vsel %vm973, %v3751, 0.0
    %3758 = vadd.xlane.f32.xlu0 %v3757
    %v3759 = vpop.xlane.xlu0 %3758
    %v3760 = vsel %vm973, %v3753, 0.0
    %3761 = vadd.xlane.f32.xlu0 %v3760
    %v3762 = vpop.xlane.xlu0 %3761
    %v3763 = vrcp.pop %v3756
    %v3764 = vrcp.pop %v3759
    %v3765 = vrcp.pop %v3762
    %v3766 = vmul.f32 %v3749, %v3763
    %v3767 = vmul.f32 %v3751, %v3764
    %v3768 = vmul.f32 %v3753, %v3765
    %v3770 = vsel %vm973, %v3766, 0
    %v3773 = vsel %vm973, %v3767, 0
    %v3776 = vsel %vm973, %v3768, 0
    %3778 = vmatpush.msra.mxu0 0.0
    %3779 = vmatpush.msra.mxu0 0.0
    %3780 = vmatpush.msra.mxu0 0.0
    %3781 = vmatpush.msra.mxu0 0.0
    %3782 = vmatpush.msra.mxu0 0.0
    %3783 = vmatpush.msra.mxu0 0.0
    %3784 = vmatpush.msra.mxu0 0.0
    %3785 = vmatpush.msra.mxu0 0.0
    %3786 = vmatpush.msra.mxu0 0.0
    %3787 = vmatpush.msra.mxu0 0.0
    %3788 = vmatpush.msra.mxu0 0.0
    %3789 = vmatpush.msra.mxu0 0.0
    %3790 = vmatpush.msra.mxu0 0.0
    %3791 = vmatpush.msra.mxu0 %v3231
    %3792 = vmatpush.msra.mxu0 %v3228
    %3793 = vmatpush.msra.mxu0 %v3225
    %3794 = vmatmul.f32.gmra.mxu0 %v3770
    %v3795 = vpop.f32.mrf.mxu0
    %v3796 = vadd.f32 0.0, %v3795
    %3797 = vmatmul.f32.gmra.mxu0 %v3773
    %v3798 = vpop.f32.mrf.mxu0
    %v3799 = vadd.f32 0.0, %v3798
    %3800 = vmatmul.f32.gmra.mxu0 %v3776
    %v3801 = vpop.f32.mrf.mxu0
    %v3802 = vadd.f32 0.0, %v3801
    %3803 = vdwg.mxu0
    %s3804 = scalar_lea.vmem %s8, 56
    %v3805 = vld [vmem:[%s3804] sm:$0xff]
    %v3807 = vsel %vm928, %v3796, 0
    %v3810 = vsel %vm928, %v3799, 0
    %v3813 = vsel %vm928, %v3802, 0
    %3815 = vmatpush.msra.mxu0 0.0
    %3816 = vmatpush.msra.mxu0 0.0
    %3817 = vmatpush.msra.mxu0 0.0
    %3818 = vmatpush.msra.mxu0 0.0
    %3819 = vmatpush.msra.mxu0 0.0
    %3820 = vmatpush.msra.mxu0 0.0
    %3821 = vmatpush.msra.mxu0 0.0
    %3822 = vmatpush.msra.mxu0 0.0
    %3823 = vmatpush.msra.mxu0 0.0
    %3824 = vmatpush.msra.mxu0 0.0
    %3825 = vmatpush.msra.mxu0 0.0
    %3826 = vmatpush.msra.mxu0 0.0
    %3827 = vmatpush.msra.mxu0 0.0
    %3828 = vmatpush.msra.mxu0 0.0
    %3829 = vmatpush.msra.mxu0 0.0
    %3830 = vmatpush.msra.mxu0 %v3805
    %3831 = vmatmul.f32.gmra.mxu0 %v3807
    %v3832 = vpop.f32.mrf.mxu0
    %v3833 = vadd.f32 0.0, %v3832
    %3834 = vmatmul.f32.gmra.mxu0 %v3810
    %v3835 = vpop.f32.mrf.mxu0
    %v3836 = vadd.f32 0.0, %v3835
    %3837 = vmatmul.f32.gmra.mxu0 %v3813
    %v3838 = vpop.f32.mrf.mxu0
    %v3839 = vadd.f32 0.0, %v3838
    %3840 = vdwg.mxu0
    %v3841 = vadd.f32 %v3689, %v3833
    %v3842 = vadd.f32 %v3690, %v3836
    %v3843 = vadd.f32 %v3691, %v3839
    %v3845 = vsel %vm928, %v2739, 0
    %v3848 = vsel %vm928, %v2742, 0
    %v3851 = vsel %vm928, %v2745, 0
    %v3854 = vsel %vm928, %v2784, 0
    %v3857 = vsel %vm928, %v2787, 0
    %v3860 = vsel %vm928, %v2790, 0
    %3862 = vmatpush.xpose.msra.mxu0 0.0
    %3863 = vmatpush.xpose.msra.mxu0 0.0
    %3864 = vmatpush.xpose.msra.mxu0 0.0
    %3865 = vmatpush.xpose.msra.mxu0 0.0
    %3866 = vmatpush.xpose.msra.mxu0 0.0
    %3867 = vmatpush.xpose.msra.mxu0 0.0
    %3868 = vmatpush.xpose.msra.mxu0 0.0
    %3869 = vmatpush.xpose.msra.mxu0 0.0
    %3870 = vmatpush.xpose.msra.mxu0 0.0
    %3871 = vmatpush.xpose.msra.mxu0 0.0
    %3872 = vmatpush.xpose.msra.mxu0 0.0
    %3873 = vmatpush.xpose.msra.mxu0 0.0
    %3874 = vmatpush.xpose.msra.mxu0 0.0
    %3875 = vmatpush.xpose.msra.mxu0 %v3860
    %3876 = vmatpush.xpose.msra.mxu0 %v3857
    %3877 = vmatpush.xpose.msra.mxu0 %v3854
    %3878 = vmatmul.f32.gmra.mxu0 %v3845
    %v3879 = vpop.f32.mrf.mxu0
    %v3880 = vadd.f32 %v251, %v3879
    %3881 = vmatmul.f32.gmra.mxu0 %v3848
    %v3882 = vpop.f32.mrf.mxu0
    %v3883 = vadd.f32 %v251, %v3882
    %3884 = vmatmul.f32.gmra.mxu0 %v3851
    %v3885 = vpop.f32.mrf.mxu0
    %v3886 = vadd.f32 %v251, %v3885
    %3887 = vdwg.mxu0
    %v3888 = vsel %vm973, %v3880, -inf
    %3889 = vmax.xlane.f32.xlu0 %v3888
    %v3890 = vpop.xlane.xlu0 %3889
    %v3891 = vsel %vm973, %v3883, -inf
    %3892 = vmax.xlane.f32.xlu0 %v3891
    %v3893 = vpop.xlane.xlu0 %3892
    %v3894 = vsel %vm973, %v3886, -inf
    %3895 = vmax.xlane.f32.xlu0 %v3894
    %v3896 = vpop.xlane.xlu0 %3895
    %v3897 = vsub.f32 %v3880, %v3890
    %v3898 = vsub.f32 %v3883, %v3893
    %v3899 = vsub.f32 %v3886, %v3896
    %v3900 = vmul.f32 %v3897, 1.442695
    %v3901 = vpow.pop %v3900
    %v3902 = vmul.f32 %v3898, 1.442695
    %v3903 = vpow.pop %v3902
    %v3904 = vmul.f32 %v3899, 1.442695
    %v3905 = vpow.pop %v3904
    %v3906 = vsel %vm973, %v3901, 0.0
    %3907 = vadd.xlane.f32.xlu0 %v3906
    %v3908 = vpop.xlane.xlu0 %3907
    %v3909 = vsel %vm973, %v3903, 0.0
    %3910 = vadd.xlane.f32.xlu0 %v3909
    %v3911 = vpop.xlane.xlu0 %3910
    %v3912 = vsel %vm973, %v3905, 0.0
    %3913 = vadd.xlane.f32.xlu0 %v3912
    %v3914 = vpop.xlane.xlu0 %3913
    %v3915 = vrcp.pop %v3908
    %v3916 = vrcp.pop %v3911
    %v3917 = vrcp.pop %v3914
    %v3918 = vmul.f32 %v3901, %v3915
    %v3919 = vmul.f32 %v3903, %v3916
    %v3920 = vmul.f32 %v3905, %v3917
    %v3922 = vsel %vm973, %v3918, 0
    %v3925 = vsel %vm973, %v3919, 0
    %v3928 = vsel %vm973, %v3920, 0
    %3930 = vmatpush.msra.mxu0 0.0
    %3931 = vmatpush.msra.mxu0 0.0
    %3932 = vmatpush.msra.mxu0 0.0
    %3933 = vmatpush.msra.mxu0 0.0
    %3934 = vmatpush.msra.mxu0 0.0
    %3935 = vmatpush.msra.mxu0 0.0
    %3936 = vmatpush.msra.mxu0 0.0
    %3937 = vmatpush.msra.mxu0 0.0
    %3938 = vmatpush.msra.mxu0 0.0
    %3939 = vmatpush.msra.mxu0 0.0
    %3940 = vmatpush.msra.mxu0 0.0
    %3941 = vmatpush.msra.mxu0 0.0
    %3942 = vmatpush.msra.mxu0 0.0
    %3943 = vmatpush.msra.mxu0 %v2835
    %3944 = vmatpush.msra.mxu0 %v2832
    %3945 = vmatpush.msra.mxu0 %v2829
    %3946 = vmatmul.f32.gmra.mxu0 %v3922
    %v3947 = vpop.f32.mrf.mxu0
    %v3948 = vadd.f32 0.0, %v3947
    %3949 = vmatmul.f32.gmra.mxu0 %v3925
    %v3950 = vpop.f32.mrf.mxu0
    %v3951 = vadd.f32 0.0, %v3950
    %3952 = vmatmul.f32.gmra.mxu0 %v3928
    %v3953 = vpop.f32.mrf.mxu0
    %v3954 = vadd.f32 0.0, %v3953
    %3955 = vdwg.mxu0
    %v3957 = vsel %vm928, %v2874, 0
    %v3960 = vsel %vm928, %v2877, 0
    %v3963 = vsel %vm928, %v2880, 0
    %v3966 = vsel %vm928, %v2919, 0
    %v3969 = vsel %vm928, %v2922, 0
    %v3972 = vsel %vm928, %v2925, 0
    %3974 = vmatpush.xpose.msra.mxu0 0.0
    %3975 = vmatpush.xpose.msra.mxu0 0.0
    %3976 = vmatpush.xpose.msra.mxu0 0.0
    %3977 = vmatpush.xpose.msra.mxu0 0.0
    %3978 = vmatpush.xpose.msra.mxu0 0.0
    %3979 = vmatpush.xpose.msra.mxu0 0.0
    %3980 = vmatpush.xpose.msra.mxu0 0.0
    %3981 = vmatpush.xpose.msra.mxu0 0.0
    %3982 = vmatpush.xpose.msra.mxu0 0.0
    %3983 = vmatpush.xpose.msra.mxu0 0.0
    %3984 = vmatpush.xpose.msra.mxu0 0.0
    %3985 = vmatpush.xpose.msra.mxu0 0.0
    %3986 = vmatpush.xpose.msra.mxu0 0.0
    %3987 = vmatpush.xpose.msra.mxu0 %v3972
    %3988 = vmatpush.xpose.msra.mxu0 %v3969
    %3989 = vmatpush.xpose.msra.mxu0 %v3966
    %3990 = vmatmul.f32.gmra.mxu0 %v3957
    %v3991 = vpop.f32.mrf.mxu0
    %v3992 = vadd.f32 %v251, %v3991
    %3993 = vmatmul.f32.gmra.mxu0 %v3960
    %v3994 = vpop.f32.mrf.mxu0
    %v3995 = vadd.f32 %v251, %v3994
    %3996 = vmatmul.f32.gmra.mxu0 %v3963
    %v3997 = vpop.f32.mrf.mxu0
    %v3998 = vadd.f32 %v251, %v3997
    %3999 = vdwg.mxu0
    %v4000 = vsel %vm973, %v3992, -inf
    %4001 = vmax.xlane.f32.xlu0 %v4000
    %v4002 = vpop.xlane.xlu0 %4001
    %v4003 = vsel %vm973, %v3995, -inf
    %4004 = vmax.xlane.f32.xlu0 %v4003
    %v4005 = vpop.xlane.xlu0 %4004
    %v4006 = vsel %vm973, %v3998, -inf
    %4007 = vmax.xlane.f32.xlu0 %v4006
    %v4008 = vpop.xlane.xlu0 %4007
    %v4009 = vsub.f32 %v3992, %v4002
    %v4010 = vsub.f32 %v3995, %v4005
    %v4011 = vsub.f32 %v3998, %v4008
    %v4012 = vmul.f32 %v4009, 1.442695
    %v4013 = vpow.pop %v4012
    %v4014 = vmul.f32 %v4010, 1.442695
    %v4015 = vpow.pop %v4014
    %v4016 = vmul.f32 %v4011, 1.442695
    %v4017 = vpow.pop %v4016
    %v4018 = vsel %vm973, %v4013, 0.0
    %4019 = vadd.xlane.f32.xlu0 %v4018
    %v4020 = vpop.xlane.xlu0 %4019
    %v4021 = vsel %vm973, %v4015, 0.0
    %4022 = vadd.xlane.f32.xlu0 %v4021
    %v4023 = vpop.xlane.xlu0 %4022
    %v4024 = vsel %vm973, %v4017, 0.0
    %4025 = vadd.xlane.f32.xlu0 %v4024
    %v4026 = vpop.xlane.xlu0 %4025
    %v4027 = vrcp.pop %v4020
    %v4028 = vrcp.pop %v4023
    %v4029 = vrcp.pop %v4026
    %v4030 = vmul.f32 %v4013, %v4027
    %v4031 = vmul.f32 %v4015, %v4028
    %v4032 = vmul.f32 %v4017, %v4029
    %v4034 = vsel %vm973, %v4030, 0
    %v4037 = vsel %vm973, %v4031, 0
    %v4040 = vsel %vm973, %v4032, 0
    %4042 = vmatpush.msra.mxu0 0.0
    %4043 = vmatpush.msra.mxu0 0.0
    %4044 = vmatpush.msra.mxu0 0.0
    %4045 = vmatpush.msra.mxu0 0.0
    %4046 = vmatpush.msra.mxu0 0.0
    %4047 = vmatpush.msra.mxu0 0.0
    %4048 = vmatpush.msra.mxu0 0.0
    %4049 = vmatpush.msra.mxu0 0.0
    %4050 = vmatpush.msra.mxu0 0.0
    %4051 = vmatpush.msra.mxu0 0.0
    %4052 = vmatpush.msra.mxu0 0.0
    %4053 = vmatpush.msra.mxu0 0.0
    %4054 = vmatpush.msra.mxu0 0.0
    %4055 = vmatpush.msra.mxu0 %v2970
    %4056 = vmatpush.msra.mxu0 %v2967
    %4057 = vmatpush.msra.mxu0 %v2964
    %4058 = vmatmul.f32.gmra.mxu0 %v4034
    %v4059 = vpop.f32.mrf.mxu0
    %v4060 = vadd.f32 0.0, %v4059
    %4061 = vmatmul.f32.gmra.mxu0 %v4037
    %v4062 = vpop.f32.mrf.mxu0
    %v4063 = vadd.f32 0.0, %v4062
    %4064 = vmatmul.f32.gmra.mxu0 %v4040
    %v4065 = vpop.f32.mrf.mxu0
    %v4066 = vadd.f32 0.0, %v4065
    %4067 = vdwg.mxu0
    %v4069 = vsel %vm928, %v4060, 0
    %v4072 = vsel %vm928, %v4063, 0
    %v4075 = vsel %vm928, %v4066, 0
    %4077 = vmatpush.msra.mxu0 0.0
    %4078 = vmatpush.msra.mxu0 0.0
    %4079 = vmatpush.msra.mxu0 0.0
    %4080 = vmatpush.msra.mxu0 0.0
    %4081 = vmatpush.msra.mxu0 0.0
    %4082 = vmatpush.msra.mxu0 0.0
    %4083 = vmatpush.msra.mxu0 0.0
    %4084 = vmatpush.msra.mxu0 0.0
    %4085 = vmatpush.msra.mxu0 0.0
    %4086 = vmatpush.msra.mxu0 0.0
    %4087 = vmatpush.msra.mxu0 0.0
    %4088 = vmatpush.msra.mxu0 0.0
    %4089 = vmatpush.msra.mxu0 0.0
    %4090 = vmatpush.msra.mxu0 0.0
    %4091 = vmatpush.msra.mxu0 0.0
    %4092 = vmatpush.msra.mxu0 %v3469
    %4093 = vmatmul.f32.gmra.mxu0 %v4069
    %v4094 = vpop.f32.mrf.mxu0
    %v4095 = vadd.f32 0.0, %v4094
    %4096 = vmatmul.f32.gmra.mxu0 %v4072
    %v4097 = vpop.f32.mrf.mxu0
    %v4098 = vadd.f32 0.0, %v4097
    %4099 = vmatmul.f32.gmra.mxu0 %v4075
    %v4100 = vpop.f32.mrf.mxu0
    %v4101 = vadd.f32 0.0, %v4100
    %4102 = vdwg.mxu0
    %v4104 = vsel %vm928, %v3948, 0
    %v4107 = vsel %vm928, %v3951, 0
    %v4110 = vsel %vm928, %v3954, 0
    %4112 = vmatpush.msra.mxu0 0.0
    %4113 = vmatpush.msra.mxu0 0.0
    %4114 = vmatpush.msra.mxu0 0.0
    %4115 = vmatpush.msra.mxu0 0.0
    %4116 = vmatpush.msra.mxu0 0.0
    %4117 = vmatpush.msra.mxu0 0.0
    %4118 = vmatpush.msra.mxu0 0.0
    %4119 = vmatpush.msra.mxu0 0.0
    %4120 = vmatpush.msra.mxu0 0.0
    %4121 = vmatpush.msra.mxu0 0.0
    %4122 = vmatpush.msra.mxu0 0.0
    %4123 = vmatpush.msra.mxu0 0.0
    %4124 = vmatpush.msra.mxu0 0.0
    %4125 = vmatpush.msra.mxu0 0.0
    %4126 = vmatpush.msra.mxu0 0.0
    %4127 = vmatpush.msra.mxu0 %v3355
    %4128 = vmatmul.f32.gmra.mxu0 %v4104
    %v4129 = vpop.f32.mrf.mxu0
    %v4130 = vadd.f32 %v4095, %v4129
    %4131 = vmatmul.f32.gmra.mxu0 %v4107
    %v4132 = vpop.f32.mrf.mxu0
    %v4133 = vadd.f32 %v4098, %v4132
    %4134 = vmatmul.f32.gmra.mxu0 %v4110
    %v4135 = vpop.f32.mrf.mxu0
    %v4136 = vadd.f32 %v4101, %v4135
    %4137 = vdwg.mxu0
    %v4139 = vsel %vm928, %v3009, 0
    %v4142 = vsel %vm928, %v3012, 0
    %v4145 = vsel %vm928, %v3015, 0
    %v4148 = vsel %vm928, %v3054, 0
    %v4151 = vsel %vm928, %v3057, 0
    %v4154 = vsel %vm928, %v3060, 0
    %4156 = vmatpush.xpose.msra.mxu0 0.0
    %4157 = vmatpush.xpose.msra.mxu0 0.0
    %4158 = vmatpush.xpose.msra.mxu0 0.0
    %4159 = vmatpush.xpose.msra.mxu0 0.0
    %4160 = vmatpush.xpose.msra.mxu0 0.0
    %4161 = vmatpush.xpose.msra.mxu0 0.0
    %4162 = vmatpush.xpose.msra.mxu0 0.0
    %4163 = vmatpush.xpose.msra.mxu0 0.0
    %4164 = vmatpush.xpose.msra.mxu0 0.0
    %4165 = vmatpush.xpose.msra.mxu0 0.0
    %4166 = vmatpush.xpose.msra.mxu0 0.0
    %4167 = vmatpush.xpose.msra.mxu0 0.0
    %4168 = vmatpush.xpose.msra.mxu0 0.0
    %4169 = vmatpush.xpose.msra.mxu0 %v4154
    %4170 = vmatpush.xpose.msra.mxu0 %v4151
    %4171 = vmatpush.xpose.msra.mxu0 %v4148
    %4172 = vmatmul.f32.gmra.mxu0 %v4139
    %v4173 = vpop.f32.mrf.mxu0
    %v4174 = vadd.f32 %v251, %v4173
    %4175 = vmatmul.f32.gmra.mxu0 %v4142
    %v4176 = vpop.f32.mrf.mxu0
    %v4177 = vadd.f32 %v251, %v4176
    %4178 = vmatmul.f32.gmra.mxu0 %v4145
    %v4179 = vpop.f32.mrf.mxu0
    %v4180 = vadd.f32 %v251, %v4179
    %4181 = vdwg.mxu0
    %v4182 = vsel %vm973, %v4174, -inf
    %4183 = vmax.xlane.f32.xlu0 %v4182
    %v4184 = vpop.xlane.xlu0 %4183
    %v4185 = vsel %vm973, %v4177, -inf
    %4186 = vmax.xlane.f32.xlu0 %v4185
    %v4187 = vpop.xlane.xlu0 %4186
    %v4188 = vsel %vm973, %v4180, -inf
    %4189 = vmax.xlane.f32.xlu0 %v4188
    %v4190 = vpop.xlane.xlu0 %4189
    %v4191 = vsub.f32 %v4174, %v4184
    %v4192 = vsub.f32 %v4177, %v4187
    %v4193 = vsub.f32 %v4180, %v4190
    %v4194 = vmul.f32 %v4191, 1.442695
    %v4195 = vpow.pop %v4194
    %v4196 = vmul.f32 %v4192, 1.442695
    %v4197 = vpow.pop %v4196
    %v4198 = vmul.f32 %v4193, 1.442695
    %v4199 = vpow.pop %v4198
    %v4200 = vsel %vm973, %v4195, 0.0
    %4201 = vadd.xlane.f32.xlu0 %v4200
    %v4202 = vpop.xlane.xlu0 %4201
    %v4203 = vsel %vm973, %v4197, 0.0
    %4204 = vadd.xlane.f32.xlu0 %v4203
    %v4205 = vpop.xlane.xlu0 %4204
    %v4206 = vsel %vm973, %v4199, 0.0
    %4207 = vadd.xlane.f32.xlu0 %v4206
    %v4208 = vpop.xlane.xlu0 %4207
    %v4209 = vrcp.pop %v4202
    %v4210 = vrcp.pop %v4205
    %v4211 = vrcp.pop %v4208
    %v4212 = vmul.f32 %v4195, %v4209
    %v4213 = vmul.f32 %v4197, %v4210
    %v4214 = vmul.f32 %v4199, %v4211
    %v4216 = vsel %vm973, %v4212, 0
    %v4219 = vsel %vm973, %v4213, 0
    %v4222 = vsel %vm973, %v4214, 0
    %4224 = vmatpush.msra.mxu0 0.0
    %4225 = vmatpush.msra.mxu0 0.0
    %4226 = vmatpush.msra.mxu0 0.0
    %4227 = vmatpush.msra.mxu0 0.0
    %4228 = vmatpush.msra.mxu0 0.0
    %4229 = vmatpush.msra.mxu0 0.0
    %4230 = vmatpush.msra.mxu0 0.0
    %4231 = vmatpush.msra.mxu0 0.0
    %4232 = vmatpush.msra.mxu0 0.0
    %4233 = vmatpush.msra.mxu0 0.0
    %4234 = vmatpush.msra.mxu0 0.0
    %4235 = vmatpush.msra.mxu0 0.0
    %4236 = vmatpush.msra.mxu0 0.0
    %4237 = vmatpush.msra.mxu0 %v3105
    %4238 = vmatpush.msra.mxu0 %v3102
    %4239 = vmatpush.msra.mxu0 %v3099
    %4240 = vmatmul.f32.gmra.mxu0 %v4216
    %v4241 = vpop.f32.mrf.mxu0
    %v4242 = vadd.f32 0.0, %v4241
    %4243 = vmatmul.f32.gmra.mxu0 %v4219
    %v4244 = vpop.f32.mrf.mxu0
    %v4245 = vadd.f32 0.0, %v4244
    %4246 = vmatmul.f32.gmra.mxu0 %v4222
    %v4247 = vpop.f32.mrf.mxu0
    %v4248 = vadd.f32 0.0, %v4247
    %4249 = vdwg.mxu0
    %v4251 = vsel %vm928, %v4242, 0
    %v4254 = vsel %vm928, %v4245, 0
    %v4257 = vsel %vm928, %v4248, 0
    %4259 = vmatpush.msra.mxu0 0.0
    %4260 = vmatpush.msra.mxu0 0.0
    %4261 = vmatpush.msra.mxu0 0.0
    %4262 = vmatpush.msra.mxu0 0.0
    %4263 = vmatpush.msra.mxu0 0.0
    %4264 = vmatpush.msra.mxu0 0.0
    %4265 = vmatpush.msra.mxu0 0.0
    %4266 = vmatpush.msra.mxu0 0.0
    %4267 = vmatpush.msra.mxu0 0.0
    %4268 = vmatpush.msra.mxu0 0.0
    %4269 = vmatpush.msra.mxu0 0.0
    %4270 = vmatpush.msra.mxu0 0.0
    %4271 = vmatpush.msra.mxu0 0.0
    %4272 = vmatpush.msra.mxu0 0.0
    %4273 = vmatpush.msra.mxu0 0.0
    %4274 = vmatpush.msra.mxu0 %v3653
    %4275 = vmatmul.f32.gmra.mxu0 %v4251
    %v4276 = vpop.f32.mrf.mxu0
    %v4277 = vadd.f32 0.0, %v4276
    %4278 = vmatmul.f32.gmra.mxu0 %v4254
    %v4279 = vpop.f32.mrf.mxu0
    %v4280 = vadd.f32 0.0, %v4279
    %4281 = vmatmul.f32.gmra.mxu0 %v4257
    %v4282 = vpop.f32.mrf.mxu0
    %v4283 = vadd.f32 0.0, %v4282
    %4284 = vdwg.mxu0
    %v4285 = vadd.f32 %v4130, %v4277
    %v4286 = vadd.f32 %v4133, %v4280
    %v4287 = vadd.f32 %v4136, %v4283
    %v4289 = vsel %vm928, %v3144, 0
    %v4292 = vsel %vm928, %v3147, 0
    %v4295 = vsel %vm928, %v3150, 0
    %v4298 = vsel %vm928, %v3189, 0
    %v4301 = vsel %vm928, %v3192, 0
    %v4304 = vsel %vm928, %v3195, 0
    %4306 = vmatpush.xpose.msra.mxu0 0.0
    %4307 = vmatpush.xpose.msra.mxu0 0.0
    %4308 = vmatpush.xpose.msra.mxu0 0.0
    %4309 = vmatpush.xpose.msra.mxu0 0.0
    %4310 = vmatpush.xpose.msra.mxu0 0.0
    %4311 = vmatpush.xpose.msra.mxu0 0.0
    %4312 = vmatpush.xpose.msra.mxu0 0.0
    %4313 = vmatpush.xpose.msra.mxu0 0.0
    %4314 = vmatpush.xpose.msra.mxu0 0.0
    %4315 = vmatpush.xpose.msra.mxu0 0.0
    %4316 = vmatpush.xpose.msra.mxu0 0.0
    %4317 = vmatpush.xpose.msra.mxu0 0.0
    %4318 = vmatpush.xpose.msra.mxu0 0.0
    %4319 = vmatpush.xpose.msra.mxu0 %v4304
    %4320 = vmatpush.xpose.msra.mxu0 %v4301
    %4321 = vmatpush.xpose.msra.mxu0 %v4298
    %4322 = vmatmul.f32.gmra.mxu0 %v4289
    %v4323 = vpop.f32.mrf.mxu0
    %v4324 = vadd.f32 %v251, %v4323
    %4325 = vmatmul.f32.gmra.mxu0 %v4292
    %v4326 = vpop.f32.mrf.mxu0
    %v4327 = vadd.f32 %v251, %v4326
    %4328 = vmatmul.f32.gmra.mxu0 %v4295
    %v4329 = vpop.f32.mrf.mxu0
    %v4330 = vadd.f32 %v251, %v4329
    %4331 = vdwg.mxu0
    %v4332 = vsel %vm973, %v4324, -inf
    %4333 = vmax.xlane.f32.xlu0 %v4332
    %v4334 = vpop.xlane.xlu0 %4333
    %v4335 = vsel %vm973, %v4327, -inf
    %4336 = vmax.xlane.f32.xlu0 %v4335
    %v4337 = vpop.xlane.xlu0 %4336
    %v4338 = vsel %vm973, %v4330, -inf
    %4339 = vmax.xlane.f32.xlu0 %v4338
    %v4340 = vpop.xlane.xlu0 %4339
    %v4341 = vsub.f32 %v4324, %v4334
    %v4342 = vsub.f32 %v4327, %v4337
    %v4343 = vsub.f32 %v4330, %v4340
    %v4344 = vmul.f32 %v4341, 1.442695
    %v4345 = vpow.pop %v4344
    %v4346 = vmul.f32 %v4342, 1.442695
    %v4347 = vpow.pop %v4346
    %v4348 = vmul.f32 %v4343, 1.442695
    %v4349 = vpow.pop %v4348
    %v4350 = vsel %vm973, %v4345, 0.0
    %4351 = vadd.xlane.f32.xlu0 %v4350
    %v4352 = vpop.xlane.xlu0 %4351
    %v4353 = vsel %vm973, %v4347, 0.0
    %4354 = vadd.xlane.f32.xlu0 %v4353
    %v4355 = vpop.xlane.xlu0 %4354
    %v4356 = vsel %vm973, %v4349, 0.0
    %4357 = vadd.xlane.f32.xlu0 %v4356
    %v4358 = vpop.xlane.xlu0 %4357
    %v4359 = vrcp.pop %v4352
    %v4360 = vrcp.pop %v4355
    %v4361 = vrcp.pop %v4358
    %v4362 = vmul.f32 %v4345, %v4359
    %v4363 = vmul.f32 %v4347, %v4360
    %v4364 = vmul.f32 %v4349, %v4361
    %v4366 = vsel %vm973, %v4362, 0
    %v4369 = vsel %vm973, %v4363, 0
    %v4372 = vsel %vm973, %v4364, 0
    %4374 = vmatpush.msra.mxu0 0.0
    %4375 = vmatpush.msra.mxu0 0.0
    %4376 = vmatpush.msra.mxu0 0.0
    %4377 = vmatpush.msra.mxu0 0.0
    %4378 = vmatpush.msra.mxu0 0.0
    %4379 = vmatpush.msra.mxu0 0.0
    %4380 = vmatpush.msra.mxu0 0.0
    %4381 = vmatpush.msra.mxu0 0.0
    %4382 = vmatpush.msra.mxu0 0.0
    %4383 = vmatpush.msra.mxu0 0.0
    %4384 = vmatpush.msra.mxu0 0.0
    %4385 = vmatpush.msra.mxu0 0.0
    %4386 = vmatpush.msra.mxu0 0.0
    %4387 = vmatpush.msra.mxu0 %v3240
    %4388 = vmatpush.msra.mxu0 %v3237
    %4389 = vmatpush.msra.mxu0 %v3234
    %4390 = vmatmul.f32.gmra.mxu0 %v4366
    %v4391 = vpop.f32.mrf.mxu0
    %v4392 = vadd.f32 0.0, %v4391
    %4393 = vmatmul.f32.gmra.mxu0 %v4369
    %v4394 = vpop.f32.mrf.mxu0
    %v4395 = vadd.f32 0.0, %v4394
    %4396 = vmatmul.f32.gmra.mxu0 %v4372
    %v4397 = vpop.f32.mrf.mxu0
    %v4398 = vadd.f32 0.0, %v4397
    %4399 = vdwg.mxu0
    %v4401 = vsel %vm928, %v4392, 0
    %v4404 = vsel %vm928, %v4395, 0
    %v4407 = vsel %vm928, %v4398, 0
    %4409 = vmatpush.msra.mxu0 0.0
    %4410 = vmatpush.msra.mxu0 0.0
    %4411 = vmatpush.msra.mxu0 0.0
    %4412 = vmatpush.msra.mxu0 0.0
    %4413 = vmatpush.msra.mxu0 0.0
    %4414 = vmatpush.msra.mxu0 0.0
    %4415 = vmatpush.msra.mxu0 0.0
    %4416 = vmatpush.msra.mxu0 0.0
    %4417 = vmatpush.msra.mxu0 0.0
    %4418 = vmatpush.msra.mxu0 0.0
    %4419 = vmatpush.msra.mxu0 0.0
    %4420 = vmatpush.msra.mxu0 0.0
    %4421 = vmatpush.msra.mxu0 0.0
    %4422 = vmatpush.msra.mxu0 0.0
    %4423 = vmatpush.msra.mxu0 0.0
    %4424 = vmatpush.msra.mxu0 %v3805
    %4425 = vmatmul.f32.gmra.mxu0 %v4401
    %v4426 = vpop.f32.mrf.mxu0
    %v4427 = vadd.f32 0.0, %v4426
    %4428 = vmatmul.f32.gmra.mxu0 %v4404
    %v4429 = vpop.f32.mrf.mxu0
    %v4430 = vadd.f32 0.0, %v4429
    %4431 = vmatmul.f32.gmra.mxu0 %v4407
    %v4432 = vpop.f32.mrf.mxu0
    %v4433 = vadd.f32 0.0, %v4432
    %4434 = vdwg.mxu0
    %v4435 = vadd.f32 %v4285, %v4427
    %v4436 = vadd.f32 %v4286, %v4430
    %v4437 = vadd.f32 %v4287, %v4433
    %v4438 = vadd.f32 %v2530, %v3841
    %v4439 = vadd.f32 %v2531, %v3842
    %v4440 = vadd.f32 %v2532, %v3843
    %v4441 = vadd.f32 %v2533, %v4435
    %v4442 = vadd.f32 %v2534, %v4436
    %v4443 = vadd.f32 %v2535, %v4437
    %s4444 = scalar_lea.vmem %s9, 1
    %v4445 = vld [vmem:[%s4444] sm:$0x1]
    %v4447 = vperm.slane %v4445, 0
    %v4449 = vadd.f32 %v4438, %v4447
    %v4450 = vadd.f32 %v4439, %v4447
    %v4451 = vadd.f32 %v4440, %v4447
    %v4452 = vadd.f32 %v4441, %v4447
    %v4453 = vadd.f32 %v4442, %v4447
    %v4454 = vadd.f32 %v4443, %v4447
    %s4455 = scalar_lea.vmem %s10, 2
    %v4456 = vld [vmem:[%s4455] sm:$0x3]
    %v4457 = vsel %vm118, %v4449, 0.0
    %4458 = vadd.xlane.f32.xlu0 %v4457
    %v4459 = vpop.xlane.xlu0 %4458
    %v4460 = vsel %vm118, %v4450, 0.0
    %4461 = vadd.xlane.f32.xlu0 %v4460
    %v4462 = vpop.xlane.xlu0 %4461
    %v4463 = vsel %vm118, %v4451, 0.0
    %4464 = vadd.xlane.f32.xlu0 %v4463
    %v4465 = vpop.xlane.xlu0 %4464
    %v4466 = vsel %vm118, %v4452, 0.0
    %4467 = vadd.xlane.f32.xlu0 %v4466
    %v4468 = vpop.xlane.xlu0 %4467
    %v4469 = vsel %vm118, %v4453, 0.0
    %4470 = vadd.xlane.f32.xlu0 %v4469
    %v4471 = vpop.xlane.xlu0 %4470
    %v4472 = vsel %vm118, %v4454, 0.0
    %4473 = vadd.xlane.f32.xlu0 %v4472
    %v4474 = vpop.xlane.xlu0 %4473
    %v4475 = vmul.f32 %v4459, %v140
    %v4476 = vmul.f32 %v4462, %v140
    %v4477 = vmul.f32 %v4465, %v140
    %v4478 = vmul.f32 %v4468, %v140
    %v4479 = vmul.f32 %v4471, %v140
    %v4480 = vmul.f32 %v4474, %v140
    %v4481 = vsub.f32 %v4449, %v4475
    %v4482 = vsub.f32 %v4450, %v4476
    %v4483 = vsub.f32 %v4451, %v4477
    %v4484 = vsub.f32 %v4452, %v4478
    %v4485 = vsub.f32 %v4453, %v4479
    %v4486 = vsub.f32 %v4454, %v4480
    %v4487 = vmul.f32 %v4481, %v4481
    %v4488 = vmul.f32 %v4482, %v4482
    %v4489 = vmul.f32 %v4483, %v4483
    %v4490 = vmul.f32 %v4484, %v4484
    %v4491 = vmul.f32 %v4485, %v4485
    %v4492 = vmul.f32 %v4486, %v4486
    %v4493 = vsel %vm118, %v4487, 0.0
    %4494 = vadd.xlane.f32.xlu0 %v4493
    %v4495 = vpop.xlane.xlu0 %4494
    %v4496 = vsel %vm118, %v4488, 0.0
    %4497 = vadd.xlane.f32.xlu0 %v4496
    %v4498 = vpop.xlane.xlu0 %4497
    %v4499 = vsel %vm118, %v4489, 0.0
    %4500 = vadd.xlane.f32.xlu0 %v4499
    %v4501 = vpop.xlane.xlu0 %4500
    %v4502 = vsel %vm118, %v4490, 0.0
    %4503 = vadd.xlane.f32.xlu0 %v4502
    %v4504 = vpop.xlane.xlu0 %4503
    %v4505 = vsel %vm118, %v4491, 0.0
    %4506 = vadd.xlane.f32.xlu0 %v4505
    %v4507 = vpop.xlane.xlu0 %4506
    %v4508 = vsel %vm118, %v4492, 0.0
    %4509 = vadd.xlane.f32.xlu0 %v4508
    %v4510 = vpop.xlane.xlu0 %4509
    %v4511 = vmul.f32 %v4495, %v140
    %v4512 = vmul.f32 %v4498, %v140
    %v4513 = vmul.f32 %v4501, %v140
    %v4514 = vmul.f32 %v4504, %v140
    %v4515 = vmul.f32 %v4507, %v140
    %v4516 = vmul.f32 %v4510, %v140
    %v4517 = vadd.f32 %v4511, 1e-05
    %v4518 = vadd.f32 %v4512, 1e-05
    %v4519 = vadd.f32 %v4513, 1e-05
    %v4520 = vadd.f32 %v4514, 1e-05
    %v4521 = vadd.f32 %v4515, 1e-05
    %v4522 = vadd.f32 %v4516, 1e-05
    %v4523 = vrsqrt.pop %v4517
    %v4524 = vmul.f32 %v4523, %v4517
    %v4525 = vmul.f32 %v4524, %v4523
    %v4526 = vmul.f32 0.5, %v4525
    %v4527 = vsub.f32 1.5, %v4526
    %v4528 = vmul.f32 %v4523, %v4527
    %vm4529 = vweird.f32 %v4517
    %vm4530 = vweird.f32 %v4523
    %vm4531 = vmor %vm4529, %vm4530
    %v4532 = vsel %vm4531, %v4523, %v4528
    %v4533 = vrsqrt.pop %v4518
    %v4534 = vmul.f32 %v4533, %v4518
    %v4535 = vmul.f32 %v4534, %v4533
    %v4536 = vmul.f32 0.5, %v4535
    %v4537 = vsub.f32 1.5, %v4536
    %v4538 = vmul.f32 %v4533, %v4537
    %vm4539 = vweird.f32 %v4518
    %vm4540 = vweird.f32 %v4533
    %vm4541 = vmor %vm4539, %vm4540
    %v4542 = vsel %vm4541, %v4533, %v4538
    %v4543 = vrsqrt.pop %v4519
    %v4544 = vmul.f32 %v4543, %v4519
    %v4545 = vmul.f32 %v4544, %v4543
    %v4546 = vmul.f32 0.5, %v4545
    %v4547 = vsub.f32 1.5, %v4546
    %v4548 = vmul.f32 %v4543, %v4547
    %vm4549 = vweird.f32 %v4519
    %vm4550 = vweird.f32 %v4543
    %vm4551 = vmor %vm4549, %vm4550
    %v4552 = vsel %vm4551, %v4543, %v4548
    %v4553 = vrsqrt.pop %v4520
    %v4554 = vmul.f32 %v4553, %v4520
    %v4555 = vmul.f32 %v4554, %v4553
    %v4556 = vmul.f32 0.5, %v4555
    %v4557 = vsub.f32 1.5, %v4556
    %v4558 = vmul.f32 %v4553, %v4557
    %vm4559 = vweird.f32 %v4520
    %vm4560 = vweird.f32 %v4553
    %vm4561 = vmor %vm4559, %vm4560
    %v4562 = vsel %vm4561, %v4553, %v4558
    %v4563 = vrsqrt.pop %v4521
    %v4564 = vmul.f32 %v4563, %v4521
    %v4565 = vmul.f32 %v4564, %v4563
    %v4566 = vmul.f32 0.5, %v4565
    %v4567 = vsub.f32 1.5, %v4566
    %v4568 = vmul.f32 %v4563, %v4567
    %vm4569 = vweird.f32 %v4521
    %vm4570 = vweird.f32 %v4563
    %vm4571 = vmor %vm4569, %vm4570
    %v4572 = vsel %vm4571, %v4563, %v4568
    %v4573 = vrsqrt.pop %v4522
    %v4574 = vmul.f32 %v4573, %v4522
    %v4575 = vmul.f32 %v4574, %v4573
    %v4576 = vmul.f32 0.5, %v4575
    %v4577 = vsub.f32 1.5, %v4576
    %v4578 = vmul.f32 %v4573, %v4577
    %vm4579 = vweird.f32 %v4522
    %vm4580 = vweird.f32 %v4573
    %vm4581 = vmor %vm4579, %vm4580
    %v4582 = vsel %vm4581, %v4573, %v4578
    %v4583 = vmul.f32 %v4481, %v4532
    %v4584 = vmul.f32 %v4482, %v4542
    %v4585 = vmul.f32 %v4483, %v4552
    %v4586 = vmul.f32 %v4484, %v4562
    %v4587 = vmul.f32 %v4485, %v4572
    %v4588 = vmul.f32 %v4486, %v4582
    %v4589 = vperm.slane %v4456, 0
    %v4590 = vmul.f32 %v4583, %v4589
    %v4591 = vmul.f32 %v4584, %v4589
    %v4592 = vmul.f32 %v4585, %v4589
    %v4593 = vmul.f32 %v4586, %v4589
    %v4594 = vmul.f32 %v4587, %v4589
    %v4595 = vmul.f32 %v4588, %v4589
    %v4596 = vperm.slane %v4456, 1
    %v4597 = vadd.f32 %v4590, %v4596
    %v4598 = vadd.f32 %v4591, %v4596
    %v4599 = vadd.f32 %v4592, %v4596
    %v4600 = vadd.f32 %v4593, %v4596
    %v4601 = vadd.f32 %v4594, %v4596
    %v4602 = vadd.f32 %v4595, %v4596
    %s4603 = scalar_lea.vmem %s11, 32
    %v4604 = vld [vmem:[%s4603] sm:$0xff]
    %v4605 = vld [vmem:[%s4603 + $0x8] sm:$0xff]
    %v4606 = vld [vmem:[%s4603 + $0x10] sm:$0xff]
    %v4607 = vld [vmem:[%s4603 + $0x18] sm:$0xff]
    %s4608 = scalar_lea.vmem %s12, 1
    %v4609 = vld [vmem:[%s4608] sm:$0x1]
    %v4611 = vperm.slane %v4609, 0
    %v4614 = vsel %vm118, %v4597, 0
    %v4617 = vsel %vm118, %v4598, 0
    %v4620 = vsel %vm118, %v4599, 0
    %v4623 = vsel %vm118, %v4600, 0
    %v4626 = vsel %vm118, %v4601, 0
    %v4629 = vsel %vm118, %v4602, 0
    %4631 = vmatpush.msra.mxu0 0.0
    %4632 = vmatpush.msra.mxu0 0.0
    %4633 = vmatpush.msra.mxu0 0.0
    %4634 = vmatpush.msra.mxu0 0.0
    %4635 = vmatpush.msra.mxu0 0.0
    %4636 = vmatpush.msra.mxu0 0.0
    %4637 = vmatpush.msra.mxu0 0.0
    %4638 = vmatpush.msra.mxu0 0.0
    %4639 = vmatpush.msra.mxu0 0.0
    %4640 = vmatpush.msra.mxu0 0.0
    %4641 = vmatpush.msra.mxu0 0.0
    %4642 = vmatpush.msra.mxu0 0.0
    %4643 = vmatpush.msra.mxu0 %v4607
    %4644 = vmatpush.msra.mxu0 %v4606
    %4645 = vmatpush.msra.mxu0 %v4605
    %4646 = vmatpush.msra.mxu0 %v4604
    %4647 = vmatmul.f32.gmra.mxu0 %v4614
    %v4648 = vpop.f32.mrf.mxu0
    %v4649 = vadd.f32 %v4611, %v4648
    %4650 = vmatmul.f32.gmra.mxu0 %v4617
    %v4651 = vpop.f32.mrf.mxu0
    %v4652 = vadd.f32 %v4611, %v4651
    %4653 = vmatmul.f32.gmra.mxu0 %v4620
    %v4654 = vpop.f32.mrf.mxu0
    %v4655 = vadd.f32 %v4611, %v4654
    %4656 = vmatmul.f32.gmra.mxu0 %v4623
    %v4657 = vpop.f32.mrf.mxu0
    %v4658 = vadd.f32 %v4611, %v4657
    %4659 = vmatmul.f32.gmra.mxu0 %v4626
    %v4660 = vpop.f32.mrf.mxu0
    %v4661 = vadd.f32 %v4611, %v4660
    %4662 = vmatmul.f32.gmra.mxu0 %v4629
    %v4663 = vpop.f32.mrf.mxu0
    %v4664 = vadd.f32 %v4611, %v4663
    %4665 = vdwg.mxu0
    %v4666 = vmul.f32 %v4649, 1.702
    %v4667 = vmul.f32 %v4652, 1.702
    %v4668 = vmul.f32 %v4655, 1.702
    %v4669 = vmul.f32 %v4658, 1.702
    %v4670 = vmul.f32 %v4661, 1.702
    %v4671 = vmul.f32 %v4664, 1.702
    %v4672 = vxor.u32 %v4666, 2147483648
    %v4673 = vxor.u32 %v4667, 2147483648
    %v4674 = vxor.u32 %v4668, 2147483648
    %v4675 = vxor.u32 %v4669, 2147483648
    %v4676 = vxor.u32 %v4670, 2147483648
    %v4677 = vxor.u32 %v4671, 2147483648
    %v4678 = vmul.f32 %v4672, 1.442695
    %v4679 = vpow.pop %v4678
    %v4680 = vmul.f32 %v4673, 1.442695
    %v4681 = vpow.pop %v4680
    %v4682 = vmul.f32 %v4674, 1.442695
    %v4683 = vpow.pop %v4682
    %v4684 = vmul.f32 %v4675, 1.442695
    %v4685 = vpow.pop %v4684
    %v4686 = vmul.f32 %v4676, 1.442695
    %v4687 = vpow.pop %v4686
    %v4688 = vmul.f32 %v4677, 1.442695
    %v4689 = vpow.pop %v4688
    %v4690 = vadd.f32 %v4679, 1.0
    %v4691 = vadd.f32 %v4681, 1.0
    %v4692 = vadd.f32 %v4683, 1.0
    %v4693 = vadd.f32 %v4685, 1.0
    %v4694 = vadd.f32 %v4687, 1.0
    %v4695 = vadd.f32 %v4689, 1.0
    %v4696 = vrcp.pop %v4690
    %v4697 = vmul.f32 %v4690, %v4696
    %v4698 = vsub.f32 1.0, %v4697
    %v4699 = vmul.f32 %v4696, %v4698
    %v4700 = vadd.f32 %v4696, %v4699
    %vm4701 = vweird.f32 %v4690
    %vm4702 = vweird.f32 %v4696
    %vm4703 = vmor %vm4701, %vm4702
    %v4704 = vsel %vm4703, %v4696, %v4700
    %v4705 = vand.u32 2147483647, %v4690
    %vm4706 = vcmp.eq.f32.partialorder %v4705, 8.507059e+37
    %v4707 = vand.u32 %v4690, 2147483648
    %v4708 = vor.u32 1.1754944e-38, %v4707
    %v4709 = vsel %vm4706, %v4708, %v4704
    %v4710 = vmul.f32 1.0, %v4709
    %v4711 = vrcp.pop %v4691
    %v4712 = vmul.f32 %v4691, %v4711
    %v4713 = vsub.f32 1.0, %v4712
    %v4714 = vmul.f32 %v4711, %v4713
    %v4715 = vadd.f32 %v4711, %v4714
    %vm4716 = vweird.f32 %v4691
    %vm4717 = vweird.f32 %v4711
    %vm4718 = vmor %vm4716, %vm4717
    %v4719 = vsel %vm4718, %v4711, %v4715
    %v4720 = vand.u32 2147483647, %v4691
    %vm4721 = vcmp.eq.f32.partialorder %v4720, 8.507059e+37
    %v4722 = vand.u32 %v4691, 2147483648
    %v4723 = vor.u32 1.1754944e-38, %v4722
    %v4724 = vsel %vm4721, %v4723, %v4719
    %v4725 = vmul.f32 1.0, %v4724
    %v4726 = vrcp.pop %v4692
    %v4727 = vmul.f32 %v4692, %v4726
    %v4728 = vsub.f32 1.0, %v4727
    %v4729 = vmul.f32 %v4726, %v4728
    %v4730 = vadd.f32 %v4726, %v4729
    %vm4731 = vweird.f32 %v4692
    %vm4732 = vweird.f32 %v4726
    %vm4733 = vmor %vm4731, %vm4732
    %v4734 = vsel %vm4733, %v4726, %v4730
    %v4735 = vand.u32 2147483647, %v4692
    %vm4736 = vcmp.eq.f32.partialorder %v4735, 8.507059e+37
    %v4737 = vand.u32 %v4692, 2147483648
    %v4738 = vor.u32 1.1754944e-38, %v4737
    %v4739 = vsel %vm4736, %v4738, %v4734
    %v4740 = vmul.f32 1.0, %v4739
    %v4741 = vrcp.pop %v4693
    %v4742 = vmul.f32 %v4693, %v4741
    %v4743 = vsub.f32 1.0, %v4742
    %v4744 = vmul.f32 %v4741, %v4743
    %v4745 = vadd.f32 %v4741, %v4744
    %vm4746 = vweird.f32 %v4693
    %vm4747 = vweird.f32 %v4741
    %vm4748 = vmor %vm4746, %vm4747
    %v4749 = vsel %vm4748, %v4741, %v4745
    %v4750 = vand.u32 2147483647, %v4693
    %vm4751 = vcmp.eq.f32.partialorder %v4750, 8.507059e+37
    %v4752 = vand.u32 %v4693, 2147483648
    %v4753 = vor.u32 1.1754944e-38, %v4752
    %v4754 = vsel %vm4751, %v4753, %v4749
    %v4755 = vmul.f32 1.0, %v4754
    %v4756 = vrcp.pop %v4694
    %v4757 = vmul.f32 %v4694, %v4756
    %v4758 = vsub.f32 1.0, %v4757
    %v4759 = vmul.f32 %v4756, %v4758
    %v4760 = vadd.f32 %v4756, %v4759
    %vm4761 = vweird.f32 %v4694
    %vm4762 = vweird.f32 %v4756
    %vm4763 = vmor %vm4761, %vm4762
    %v4764 = vsel %vm4763, %v4756, %v4760
    %v4765 = vand.u32 2147483647, %v4694
    %vm4766 = vcmp.eq.f32.partialorder %v4765, 8.507059e+37
    %v4767 = vand.u32 %v4694, 2147483648
    %v4768 = vor.u32 1.1754944e-38, %v4767
    %v4769 = vsel %vm4766, %v4768, %v4764
    %v4770 = vmul.f32 1.0, %v4769
    %v4771 = vrcp.pop %v4695
    %v4772 = vmul.f32 %v4695, %v4771
    %v4773 = vsub.f32 1.0, %v4772
    %v4774 = vmul.f32 %v4771, %v4773
    %v4775 = vadd.f32 %v4771, %v4774
    %vm4776 = vweird.f32 %v4695
    %vm4777 = vweird.f32 %v4771
    %vm4778 = vmor %vm4776, %vm4777
    %v4779 = vsel %vm4778, %v4771, %v4775
    %v4780 = vand.u32 2147483647, %v4695
    %vm4781 = vcmp.eq.f32.partialorder %v4780, 8.507059e+37
    %v4782 = vand.u32 %v4695, 2147483648
    %v4783 = vor.u32 1.1754944e-38, %v4782
    %v4784 = vsel %vm4781, %v4783, %v4779
    %v4785 = vmul.f32 1.0, %v4784
    %v4786 = vmul.f32 %v4649, %v4710
    %v4787 = vmul.f32 %v4652, %v4725
    %v4788 = vmul.f32 %v4655, %v4740
    %v4789 = vmul.f32 %v4658, %v4755
    %v4790 = vmul.f32 %v4661, %v4770
    %v4791 = vmul.f32 %v4664, %v4785
    %s4792 = scalar_lea.vmem %s13, 128
    %v4793 = vld [vmem:[%s4792] sm:$0xff]
    %v4794 = vld [vmem:[%s4792 + $0x8] sm:$0xff]
    %v4795 = vld [vmem:[%s4792 + $0x10] sm:$0xff]
    %v4796 = vld [vmem:[%s4792 + $0x18] sm:$0xff]
    %v4797 = vld [vmem:[%s4792 + $0x20] sm:$0xff]
    %v4798 = vld [vmem:[%s4792 + $0x28] sm:$0xff]
    %v4799 = vld [vmem:[%s4792 + $0x30] sm:$0xff]
    %v4800 = vld [vmem:[%s4792 + $0x38] sm:$0xff]
    %v4801 = vld [vmem:[%s4792 + $0x40] sm:$0xff]
    %v4802 = vld [vmem:[%s4792 + $0x48] sm:$0xff]
    %v4803 = vld [vmem:[%s4792 + $0x50] sm:$0xff]
    %v4804 = vld [vmem:[%s4792 + $0x58] sm:$0xff]
    %v4805 = vld [vmem:[%s4792 + $0x60] sm:$0xff]
    %v4806 = vld [vmem:[%s4792 + $0x68] sm:$0xff]
    %v4807 = vld [vmem:[%s4792 + $0x70] sm:$0xff]
    %v4808 = vld [vmem:[%s4792 + $0x78] sm:$0xff]
    %s4809 = scalar_lea.vmem %s14, 1
    %v4810 = vld [vmem:[%s4809] sm:$0x1]
    %v4812 = vperm.slane %v4810, 0
    %4814 = vmatpush.msra.mxu0 %v4808
    %4815 = vmatpush.msra.mxu0 %v4807
    %4816 = vmatpush.msra.mxu0 %v4806
    %4817 = vmatpush.msra.mxu0 %v4805
    %4818 = vmatpush.msra.mxu0 %v4804
    %4819 = vmatpush.msra.mxu0 %v4803
    %4820 = vmatpush.msra.mxu0 %v4802
    %4821 = vmatpush.msra.mxu0 %v4801
    %4822 = vmatpush.msra.mxu0 %v4800
    %4823 = vmatpush.msra.mxu0 %v4799
    %4824 = vmatpush.msra.mxu0 %v4798
    %4825 = vmatpush.msra.mxu0 %v4797
    %4826 = vmatpush.msra.mxu0 %v4796
    %4827 = vmatpush.msra.mxu0 %v4795
    %4828 = vmatpush.msra.mxu0 %v4794
    %4829 = vmatpush.msra.mxu0 %v4793
    %4830 = vmatmul.f32.gmra.mxu0 %v4786
    %v4831 = vpop.f32.mrf.mxu0
    %4832 = vmatmul.f32.gmra.mxu0 %v4787
    %v4833 = vpop.f32.mrf.mxu0
    %4834 = vmatmul.f32.gmra.mxu0 %v4788
    %v4835 = vpop.f32.mrf.mxu0
    %v4836 = vadd.f32 %v4812, %v4835
    %4837 = vmatmul.f32.gmra.mxu0 %v4789
    %v4838 = vpop.f32.mrf.mxu0
    %4839 = vmatmul.f32.gmra.mxu0 %v4790
    %v4840 = vpop.f32.mrf.mxu0
    %4841 = vmatmul.f32.gmra.mxu0 %v4791
    %v4842 = vpop.f32.mrf.mxu0
    %v4843 = vadd.f32 %v4812, %v4842
    %4844 = vdwg.mxu0
    %v4845 = vadd.f32 %v4451, %v4836
    %v4846 = vadd.f32 %v4454, %v4843
    %v4848 = vrot.slane %v4846, 7
    %vm4850 = vcmask 1040384
    %v4851 = vsel %vm4850, %v4845, %v4848
    %v4852 = vld [vmem:[%s15] sm:$0x1]
    %v4853 = vld [vmem:[%s15 + $0x1] sm:$0x1]
    %vm4854 = vcmask 254976
    %v4855 = vsel %vm4854, %v4851, 0.0
    %4856 = vadd.xlane.f32.xlu0 %v4855
    %v4857 = vpop.xlane.xlu0 %4856
    %v4858 = vmul.f32 %v4857, %v140
    %v4859 = vsub.f32 %v4851, %v4858
    %v4860 = vmul.f32 %v4859, %v4859
    %v4861 = vsel %vm4854, %v4860, 0.0
    %4862 = vadd.xlane.f32.xlu0 %v4861
    %v4863 = vpop.xlane.xlu0 %4862
    %v4864 = vmul.f32 %v4863, %v140
    %v4865 = vadd.f32 %v4864, 1e-05
    %v4866 = vrsqrt.pop %v4865
    %v4867 = vmul.f32 %v4866, %v4865
    %v4868 = vmul.f32 %v4867, %v4866
    %v4869 = vmul.f32 0.5, %v4868
    %v4870 = vsub.f32 1.5, %v4869
    %v4871 = vmul.f32 %v4866, %v4870
    %vm4872 = vweird.f32 %v4865
    %vm4873 = vweird.f32 %v4866
    %vm4874 = vmor %vm4872, %vm4873
    %v4875 = vsel %vm4874, %v4866, %v4871
    %v4876 = vmul.f32 %v4859, %v4875
    %v4877 = vperm.slane %v4852, 0
    %v4878 = vmul.f32 %v4876, %v4877
    %v4879 = vperm.slane %v4853, 0
    %v4880 = vadd.f32 %v4878, %v4879
    %v4881 = vld [vmem:[%s16] sm:$0xff]
    %v4882 = vld [vmem:[%s16 + $0x8] sm:$0xff]
    %v4883 = vld [vmem:[%s16 + $0x10] sm:$0xff]
    %v4884 = vld [vmem:[%s16 + $0x18] sm:$0xff]
    %v4886 = vsel %vm118, %v4880, 0
    %4888 = vmatpush.msra.mxu0 0.0
    %4889 = vmatpush.msra.mxu0 0.0
    %4890 = vmatpush.msra.mxu0 0.0
    %4891 = vmatpush.msra.mxu0 0.0
    %4892 = vmatpush.msra.mxu0 0.0
    %4893 = vmatpush.msra.mxu0 0.0
    %4894 = vmatpush.msra.mxu0 0.0
    %4895 = vmatpush.msra.mxu0 0.0
    %4896 = vmatpush.msra.mxu0 0.0
    %4897 = vmatpush.msra.mxu0 0.0
    %4898 = vmatpush.msra.mxu0 0.0
    %4899 = vmatpush.msra.mxu0 0.0
    %4900 = vmatpush.msra.mxu0 %v4884
    %4901 = vmatpush.msra.mxu0 %v4883
    %4902 = vmatpush.msra.mxu0 %v4882
    %4903 = vmatpush.msra.mxu0 %v4881
    %4904 = vmatmul.f32.gmra.mxu0 %v4886
    %v4905 = vpop.f32.mrf.mxu0
    %v4906 = vadd.f32 0.0, %v4905
    %4907 = vdwg.mxu0
    %vm4908 = vcmask 123904
    %4909 = vst.msk [vmem:[#allocation2] sm:$0x3] %vm4908, %v4906
    // Predicated region
    $region70: #{clip_encode_img.1} parent=1 // pred_check
      _
    $region71: #{clip_encode_img.1} parent=1 // pred_check_branch
      %4911 = sbr.rel (0) target = $region73
    $region72: #{clip_encode_img.1} parent=1 // pred_region
      %4913 = vsyncadd [#allocation3], 0
      %s4915 = sshll.u32 [#allocation2], 4
      %s4916 = int_to_ptr.vmem [resolvable:$true] %s4915
      %s4917 = sshll.u32 %s17, 4
      %s4918 = int_to_ptr.hbm [resolvable:$true] %s4917
      %4920 = dma.vmem_to_hbm [thread:$0]  %s4916, 32, %s4918, [#allocation3]
    $region73: #{clip_encode_img.1} parent=1 // pred_fallthru
      _
    // Predicated region
    $region74: #{clip_encode_img.1} parent=1 // pred_check
      _
    $region75: #{clip_encode_img.1} parent=1 // pred_check_branch
      %4922 = sbr.rel (0) target = $region77
    $region76: #{clip_encode_img.1} parent=1 // pred_region
      %4924 = dma.done [#allocation3], 32
    $region77: #{clip_encode_img.1} parent=1 // pred_fallthru
      _
    %4925 = vsyncpa [#allocation3], 1

</llo_original>
